<compile_context>
chip_gen: v7x
topology: tpu7x:2x2x1
jax: 0.10.0
libtpu: 0.0.40
codegen_flags: <defaults>
</compile_context>

<pallas_src>
import functools
import numpy as np

import jax
import jax.numpy as jnp
from jax.experimental import pallas as pl
from jax.experimental.pallas import tpu as pltpu


# ---------------------------------------------------------------------------
# Pallas kernels
# ---------------------------------------------------------------------------

def _attn_sublayer_kernel(xq_ref, xkv_ref, kp_ref,
                          wq_ref, bq_ref, wkv_ref, bkv_ref,
                          wo_ref, bo_ref, g_ref, bln_ref,
                          o_ref, *, n_heads, causal, scale):
    """Fused attention sublayer for one batch element.

    xq: (Sq, D) f32, xkv: (Sk, D) f32, kp: (1, Sk) f32 key-padding (1=attend).
    Computes LayerNorm(xq + WO @ MHA(xq, xkv)) with all heads in one body.
    """
    xq = xq_ref[...]                       # (Sq, D) f32
    xkv = xkv_ref[...]                     # (Sk, D) f32
    Sq, D = xq.shape
    Sk = xkv.shape[0]
    Dh = D // n_heads

    # --- fused projections (bf16 MXU inputs, f32 accumulation) -------------
    q = jnp.dot(xq.astype(jnp.bfloat16), wq_ref[...],
                preferred_element_type=jnp.float32) + bq_ref[...]       # (Sq, D)
    kv = jnp.dot(xkv.astype(jnp.bfloat16), wkv_ref[...],
                 preferred_element_type=jnp.float32) + bkv_ref[...]     # (Sk, 2D)
    k = kv[:, :D]
    v = kv[:, D:]

    # --- mask built in-kernel (no (B,Sq,Sk) HBM mask stream) ----------------
    neg = jnp.where(kp_ref[...] > 0.0, 0.0, -1e9)                        # (1, Sk)
    neg = jnp.broadcast_to(neg, (Sq, Sk))
    if causal:
        row = jax.lax.broadcasted_iota(jnp.int32, (Sq, Sk), 0)
        col = jax.lax.broadcasted_iota(jnp.int32, (Sq, Sk), 1)
        neg = jnp.where(row >= col, neg, -1e9)

    # --- all heads inside one kernel invocation (unrolled) ------------------
    # Output projection is folded per-head:  attn @ Wo == sum_h oh @ Wo[hDh:(h+1)Dh]
    contract = (((1,), (1,)), ((), ()))     # q·k^T without explicit transpose
    o_acc = jnp.zeros((Sq, D), jnp.float32)
    for h in range(n_heads):
        sl = slice(h * Dh, (h + 1) * Dh)
        qh = q[:, sl].astype(jnp.bfloat16)           # (Sq, Dh)
        kh = k[:, sl].astype(jnp.bfloat16)           # (Sk, Dh)
        vh = v[:, sl].astype(jnp.bfloat16)           # (Sk, Dh)
        s = jax.lax.dot_general(qh, kh, contract,
                                preferred_element_type=jnp.float32) * scale + neg
        m = jnp.max(s, axis=-1, keepdims=True)
        p = jnp.exp(s - m)
        denom = jnp.sum(p, axis=-1, keepdims=True)
        oh = jnp.dot(p.astype(jnp.bfloat16), vh,
                     preferred_element_type=jnp.float32)
        oh = oh * pl.reciprocal(denom, approx=True)  # EUP, not VALU division
        o_acc = o_acc + jnp.dot(oh.astype(jnp.bfloat16), wo_ref[sl, :],
                                preferred_element_type=jnp.float32)

    # --- residual + LayerNorm epilogue (f32) ---------------------------------
    y = xq + o_acc + bo_ref[...]
    mean = jnp.mean(y, axis=-1, keepdims=True)
    var = jnp.mean((y - mean) ** 2, axis=-1, keepdims=True)
    o_ref[...] = (y - mean) * jax.lax.rsqrt(var + 1e-5) * g_ref[...] + bln_ref[...]


def attention_sublayer(x_q, x_kv, key_pad, p, n_heads, causal):
    """x_q: (B, Sq, D), x_kv: (B, Sk, D), key_pad: (B, 1, Sk) -> (B, Sq, D)."""
    B, Sq, D = x_q.shape
    Sk = x_kv.shape[1]
    scale = 1.0 / float(np.sqrt(D // n_heads))
    kern = functools.partial(_attn_sublayer_kernel, n_heads=n_heads,
                             causal=causal, scale=scale)
    const = lambda b: (0, 0)
    return pl.pallas_call(
        kern,
        out_shape=jax.ShapeDtypeStruct((B, Sq, D), jnp.float32),
        grid=(B,),
        in_specs=[
            pl.BlockSpec((None, Sq, D), lambda b: (b, 0, 0)),
            pl.BlockSpec((None, Sk, D), lambda b: (b, 0, 0)),
            pl.BlockSpec((None, 1, Sk), lambda b: (b, 0, 0)),
            pl.BlockSpec((D, D), const),         # wq  (bf16)
            pl.BlockSpec((1, D), const),         # bq
            pl.BlockSpec((D, 2 * D), const),     # wkv (bf16)
            pl.BlockSpec((1, 2 * D), const),     # bkv
            pl.BlockSpec((D, D), const),         # wo  (bf16)
            pl.BlockSpec((1, D), const),         # bo
            pl.BlockSpec((1, D), const),         # ln gamma
            pl.BlockSpec((1, D), const),         # ln beta
        ],
        out_specs=pl.BlockSpec((None, Sq, D), lambda b: (b, 0, 0)),
        compiler_params=pltpu.CompilerParams(dimension_semantics=("parallel",)),
    )(x_q, x_kv, key_pad, p["wq"], p["bq"], p["wkv"], p["bkv"],
      p["wo"], p["bo"], p["ln_g"], p["ln_b"])


def _ffn_sublayer_kernel(x_ref, w1_ref, b1_ref, w2_ref, b2_ref, g_ref, bln_ref, o_ref):
    # fused: LayerNorm(x + (relu(x @ w1 + b1) @ w2 + b2))
    x = x_ref[...]                                                       # (M, D) f32
    h = jnp.dot(x.astype(jnp.bfloat16), w1_ref[...],
                preferred_element_type=jnp.float32) + b1_ref[...]
    h = jnp.maximum(h, 0.0)
    f = jnp.dot(h.astype(jnp.bfloat16), w2_ref[...],
                preferred_element_type=jnp.float32) + b2_ref[...]
    y = x + f
    mean = jnp.mean(y, axis=-1, keepdims=True)
    var = jnp.mean((y - mean) ** 2, axis=-1, keepdims=True)
    o_ref[...] = (y - mean) * jax.lax.rsqrt(var + 1e-5) * g_ref[...] + bln_ref[...]


def ffn_sublayer(x, p):
    """x: (B, S, D) -> (B, S, D) with fused FFN + residual + LayerNorm."""
    B, S, D = x.shape
    H = p["w1"].shape[1]
    M = B * S
    out = pl.pallas_call(
        _ffn_sublayer_kernel,
        out_shape=jax.ShapeDtypeStruct((M, D), jnp.float32),
        grid=(1,),
        in_specs=[
            pl.BlockSpec((M, D), lambda i: (0, 0)),
            pl.BlockSpec((D, H), lambda i: (0, 0)),
            pl.BlockSpec((1, H), lambda i: (0, 0)),
            pl.BlockSpec((H, D), lambda i: (0, 0)),
            pl.BlockSpec((1, D), lambda i: (0, 0)),
            pl.BlockSpec((1, D), lambda i: (0, 0)),
            pl.BlockSpec((1, D), lambda i: (0, 0)),
        ],
        out_specs=pl.BlockSpec((M, D), lambda i: (0, 0)),
    )(x.reshape(M, D), p["w1"], p["b1"], p["w2"], p["b2"], p["ln_g"], p["ln_b"])
    return out.reshape(B, S, D)


def _proj_kernel(x_ref, w_ref, b_ref, o_ref):
    o_ref[...] = jnp.dot(x_ref[...].astype(jnp.bfloat16), w_ref[...],
                         preferred_element_type=jnp.float32) + b_ref[...]


def output_projection(x, w_pad, b_pad, vocab):
    """x: (B, S, D) -> (B, S, vocab); kernel writes a lane-dense 128-multiple,
    the slice back to `vocab` happens in plain JAX."""
    B, S, D = x.shape
    M = B * S
    Np = w_pad.shape[1]
    out = pl.pallas_call(
        _proj_kernel,
        out_shape=jax.ShapeDtypeStruct((M, Np), jnp.float32),
        grid=(1,),
        in_specs=[
            pl.BlockSpec((M, D), lambda i: (0, 0)),
            pl.BlockSpec((D, Np), lambda i: (0, 0)),
            pl.BlockSpec((1, Np), lambda i: (0, 0)),
        ],
        out_specs=pl.BlockSpec((M, Np), lambda i: (0, 0)),
    )(x.reshape(M, D), w_pad, b_pad)
    return out[:, :vocab].reshape(B, S, vocab)


# ---------------------------------------------------------------------------
# Model glue (plain JAX around the Pallas kernels)
# ---------------------------------------------------------------------------

def positional_encoding(S, D):
    pos = jnp.arange(S, dtype=jnp.float32)[:, None]
    i = jnp.arange(D, dtype=jnp.float32)[None, :]
    enc = pos / (10000.0 ** (2.0 * i / D))  # matches the reference (uses i, not i//2)
    enc = enc.at[:, 0::2].set(jnp.sin(enc[:, 0::2]))
    enc = enc.at[:, 1::2].set(jnp.cos(enc[:, 1::2]))
    return enc[None]  # (1, S, D)


def key_padding(seq_k, padding_idx=0):
    """-> (B, 1, Sk) float32 key-padding vector (1 = attend, 0 = blocked)."""
    return (seq_k != padding_idx)[:, None, :].astype(jnp.float32)


def encoder_forward(x_tok, params, n_heads, key_pad):
    emb = params["embedding"][x_tok]  # (B, S, D)
    B, S, D = emb.shape
    h = emb + positional_encoding(S, D)
    for lp in params["layers"]:
        h = attention_sublayer(h, h, key_pad, lp["self_attn"], n_heads, causal=False)
        h = ffn_sublayer(h, lp["ffn"])
    return h


def decoder_forward(y_tok, states, params, n_heads, self_key_pad, enc_key_pad):
    emb = params["embedding"][y_tok]  # (B, S, D)
    B, S, D = emb.shape
    h = emb + positional_encoding(S, D)
    for lp in params["layers"]:
        h = attention_sublayer(h, h, self_key_pad, lp["self_attn"], n_heads, causal=True)
        h = attention_sublayer(h, states, enc_key_pad, lp["enc_attn"], n_heads, causal=False)
        h = ffn_sublayer(h, lp["ffn"])
    return h


def transformer_forward(params, x_tok, y_tok, *, n_heads, tgt_vocab):
    enc_kp = key_padding(x_tok)   # (B, 1, Sx)
    dec_kp = key_padding(y_tok)   # (B, 1, Sy); causal part built in-kernel
    states = encoder_forward(x_tok, params["encoder"], n_heads, enc_kp)
    dec = decoder_forward(y_tok, states, params["decoder"], n_heads, dec_kp, enc_kp)
    return output_projection(dec, params["proj_w"], params["proj_b"], tgt_vocab)


# ---------------------------------------------------------------------------
# Deterministic parameter initialization
# ---------------------------------------------------------------------------

def _init(key, shape, scale=0.02):
    return scale * jax.random.normal(key, shape, dtype=jnp.float32)


def init_attn_params(key, size):
    ks = jax.random.split(key, 4)
    wk = _init(ks[1], (size, size))
    wv = _init(ks[2], (size, size))
    return {
        "wq": _init(ks[0], (size, size)).astype(jnp.bfloat16),
        "bq": jnp.zeros((1, size), jnp.float32),
        "wkv": jnp.concatenate([wk, wv], axis=1).astype(jnp.bfloat16),  # fused K/V
        "bkv": jnp.zeros((1, 2 * size), jnp.float32),
        "wo": _init(ks[3], (size, size)).astype(jnp.bfloat16),
        "bo": jnp.zeros((1, size), jnp.float32),
        "ln_g": jnp.ones((1, size), jnp.float32),
        "ln_b": jnp.zeros((1, size), jnp.float32),
    }


def init_ffn_params(key, size, hidden):
    k1, k2 = jax.random.split(key)
    return {
        "w1": _init(k1, (size, hidden)).astype(jnp.bfloat16),
        "b1": jnp.zeros((1, hidden), jnp.float32),
        "w2": _init(k2, (hidden, size)).astype(jnp.bfloat16),
        "b2": jnp.zeros((1, size), jnp.float32),
        "ln_g": jnp.ones((1, size), jnp.float32),
        "ln_b": jnp.zeros((1, size), jnp.float32),
    }


def init_transformer_params(key, src_vocab, tgt_vocab, size, n_layers):
    hidden = 4 * size
    keys = jax.random.split(key, 8)
    enc_layers, dec_layers = [], []
    for l in range(n_layers):
        enc_layers.append({
            "self_attn": init_attn_params(jax.random.fold_in(keys[2], l), size),
            "ffn": init_ffn_params(jax.random.fold_in(keys[3], l), size, hidden),
        })
        dec_layers.append({
            "self_attn": init_attn_params(jax.random.fold_in(keys[4], l), size),
            "enc_attn": init_attn_params(jax.random.fold_in(keys[5], l), size),
            "ffn": init_ffn_params(jax.random.fold_in(keys[6], l), size, hidden),
        })
    # final projection, padded to a lane-dense multiple of 128
    vpad = ((tgt_vocab + 127) // 128) * 128
    proj_w = _init(keys[7], (size, tgt_vocab))
    proj_w_pad = jnp.zeros((size, vpad), jnp.float32).at[:, :tgt_vocab].set(proj_w)
    return {
        "encoder": {"embedding": _init(keys[0], (src_vocab, size), 1.0), "layers": enc_layers},
        "decoder": {"embedding": _init(keys[1], (tgt_vocab, size), 1.0), "layers": dec_layers},
        "proj_w": proj_w_pad.astype(jnp.bfloat16),
        "proj_b": jnp.zeros((1, vpad), jnp.float32),
    }


# ---------------------------------------------------------------------------
# Main
# ---------------------------------------------------------------------------

if __name__ == "__main__":
    SRC_VOCAB = 37
    TGT_VOCAB = 41
    SIZE = 32          # d_model
    N_LAYERS = 2
    N_HEADS = 4
    BATCH = 2
    SEQ_X = 8
    SEQ_Y = 8
    # share_embedding=False; dropout treated as identity.

    root = jax.random.PRNGKey(0)
    k_params, k_x, k_y = jax.random.split(root, 3)
    params = init_transformer_params(k_params, SRC_VOCAB, TGT_VOCAB, SIZE, N_LAYERS)

    # token ids with index 0 acting as padding (some trailing zeros)
    x_tok = jax.random.randint(k_x, (BATCH, SEQ_X), 1, SRC_VOCAB, dtype=jnp.int32)
    x_tok = x_tok.at[:, -2:].set(0)
    y_tok = jax.random.randint(k_y, (BATCH, SEQ_Y), 1, TGT_VOCAB, dtype=jnp.int32)
    y_tok = y_tok.at[:, -1:].set(0)

    fwd = jax.jit(functools.partial(transformer_forward,
                                    n_heads=N_HEADS, tgt_vocab=TGT_VOCAB))
    logits = fwd(params, x_tok, y_tok)
    jax.block_until_ready(logits)

    assert logits.shape == (BATCH, SEQ_Y, TGT_VOCAB), logits.shape
    assert bool(jnp.all(jnp.isfinite(logits)))
    print("KERNEL_OK")
</pallas_src>

<mosaic_0001>
module attributes {stable_mosaic.version = 11 : i64} {
  func.func @_ffn_sublayer_kernel(%arg0: i32, %arg1: memref<16x32xf32, #tpu.memory_space<vmem>>, %arg2: memref<32x128xbf16, #tpu.memory_space<vmem>>, %arg3: memref<1x128xf32, #tpu.memory_space<vmem>>, %arg4: memref<128x32xbf16, #tpu.memory_space<vmem>>, %arg5: memref<1x32xf32, #tpu.memory_space<vmem>>, %arg6: memref<1x32xf32, #tpu.memory_space<vmem>>, %arg7: memref<1x32xf32, #tpu.memory_space<vmem>>, %arg8: memref<16x32xf32, #tpu.memory_space<vmem>>) attributes {dimension_semantics = [#tpu.dimension_semantics<arbitrary>], iteration_bounds = array<i64: 1>, scalar_prefetch = 0 : i64, scratch_operands = 0 : i64, tpu.core_type = #tpu.core_type<tc>, window_params = [{pipeline_mode = #tpu.pipeline_mode<synchronous>, transform_indices = @transform_0, window_bounds = array<i64: 16, 32>}, {pipeline_mode = #tpu.pipeline_mode<synchronous>, transform_indices = @transform_1, window_bounds = array<i64: 32, 128>}, {pipeline_mode = #tpu.pipeline_mode<synchronous>, transform_indices = @transform_2, window_bounds = array<i64: 1, 128>}, {pipeline_mode = #tpu.pipeline_mode<synchronous>, transform_indices = @transform_3, window_bounds = array<i64: 128, 32>}, {pipeline_mode = #tpu.pipeline_mode<synchronous>, transform_indices = @transform_4, window_bounds = array<i64: 1, 32>}, {pipeline_mode = #tpu.pipeline_mode<synchronous>, transform_indices = @transform_5, window_bounds = array<i64: 1, 32>}, {pipeline_mode = #tpu.pipeline_mode<synchronous>, transform_indices = @transform_6, window_bounds = array<i64: 1, 32>}, {pipeline_mode = #tpu.pipeline_mode<synchronous>, transform_indices = @transform_7, window_bounds = array<i64: 16, 32>}]} {
    %c0 = arith.constant 0 : index
    %c0_0 = arith.constant 0 : index
    %0 = vector.load %arg1[%c0, %c0_0] : memref<16x32xf32, #tpu.memory_space<vmem>>, vector<16x32xf32>
    %1 = arith.truncf %0 : vector<16x32xf32> to vector<16x32xbf16>
    %c0_1 = arith.constant 0 : index
    %c0_2 = arith.constant 0 : index
    %2 = vector.load %arg2[%c0_1, %c0_2] : memref<32x128xbf16, #tpu.memory_space<vmem>>, vector<32x128xbf16>
    %cst = arith.constant dense<0.000000e+00> : vector<16x128xf32>
    %3 = tpu.matmul %1, %2, %cst {dimension_numbers = #tpu.dot_dimension_numbers<[1], [0], [0], [1], [0, 0, 1, 1], [], []>} : vector<16x32xbf16>, vector<32x128xbf16>, vector<16x128xf32> -> vector<16x128xf32>
    %c0_3 = arith.constant 0 : index
    %c0_4 = arith.constant 0 : index
    %4 = vector.load %arg3[%c0_3, %c0_4] : memref<1x128xf32, #tpu.memory_space<vmem>>, vector<1x128xf32>
    %5 = vector.broadcast %4 : vector<1x128xf32> to vector<16x128xf32>
    %6 = arith.addf %3, %5 : vector<16x128xf32>
    %cst_5 = arith.constant 0.000000e+00 : f32
    %7 = vector.broadcast %cst_5 : f32 to vector<16x128xf32>
    %8 = arith.maximumf %6, %7 : vector<16x128xf32>
    %9 = arith.truncf %8 : vector<16x128xf32> to vector<16x128xbf16>
    %c0_6 = arith.constant 0 : index
    %c0_7 = arith.constant 0 : index
    %10 = vector.load %arg4[%c0_6, %c0_7] : memref<128x32xbf16, #tpu.memory_space<vmem>>, vector<128x32xbf16>
    %cst_8 = arith.constant dense<0.000000e+00> : vector<16x32xf32>
    %11 = tpu.matmul %9, %10, %cst_8 {dimension_numbers = #tpu.dot_dimension_numbers<[1], [0], [0], [1], [0, 0, 1, 1], [], []>} : vector<16x128xbf16>, vector<128x32xbf16>, vector<16x32xf32> -> vector<16x32xf32>
    %c0_9 = arith.constant 0 : index
    %c0_10 = arith.constant 0 : index
    %12 = vector.load %arg5[%c0_9, %c0_10] : memref<1x32xf32, #tpu.memory_space<vmem>>, vector<1x32xf32>
    %13 = vector.broadcast %12 : vector<1x32xf32> to vector<16x32xf32>
    %14 = arith.addf %11, %13 : vector<16x32xf32>
    %15 = arith.addf %0, %14 : vector<16x32xf32>
    %cst_11 = arith.constant dense<0.000000e+00> : vector<16xf32>
    %16 = vector.multi_reduction <add>, %15, %cst_11 [1] : vector<16x32xf32> to vector<16xf32>
    %17 = vector.shape_cast %16 : vector<16xf32> to vector<16x1xf32>
    %cst_12 = arith.constant 3.200000e+01 : f32
    %18 = vector.broadcast %cst_12 : f32 to vector<16x1xf32>
    %19 = arith.divf %17, %18 : vector<16x1xf32>
    %20 = vector.broadcast %19 : vector<16x1xf32> to vector<16x32xf32>
    %21 = arith.subf %15, %20 : vector<16x32xf32>
    %22 = arith.mulf %21, %21 : vector<16x32xf32>
    %cst_13 = arith.constant dense<0.000000e+00> : vector<16xf32>
    %23 = vector.multi_reduction <add>, %22, %cst_13 [1] : vector<16x32xf32> to vector<16xf32>
    %24 = vector.shape_cast %23 : vector<16xf32> to vector<16x1xf32>
    %cst_14 = arith.constant 3.200000e+01 : f32
    %25 = vector.broadcast %cst_14 : f32 to vector<16x1xf32>
    %26 = arith.divf %24, %25 : vector<16x1xf32>
    %27 = vector.broadcast %19 : vector<16x1xf32> to vector<16x32xf32>
    %28 = arith.subf %15, %27 : vector<16x32xf32>
    %cst_15 = arith.constant 9.99999974E-6 : f32
    %29 = vector.broadcast %cst_15 : f32 to vector<16x1xf32>
    %30 = arith.addf %26, %29 : vector<16x1xf32>
    %31 = math.rsqrt %30 : vector<16x1xf32>
    %32 = vector.broadcast %31 : vector<16x1xf32> to vector<16x32xf32>
    %33 = arith.mulf %28, %32 : vector<16x32xf32>
    %c0_16 = arith.constant 0 : index
    %c0_17 = arith.constant 0 : index
    %34 = vector.load %arg6[%c0_16, %c0_17] : memref<1x32xf32, #tpu.memory_space<vmem>>, vector<1x32xf32>
    %35 = vector.broadcast %34 : vector<1x32xf32> to vector<16x32xf32>
    %36 = arith.mulf %33, %35 : vector<16x32xf32>
    %c0_18 = arith.constant 0 : index
    %c0_19 = arith.constant 0 : index
    %37 = vector.load %arg7[%c0_18, %c0_19] : memref<1x32xf32, #tpu.memory_space<vmem>>, vector<1x32xf32>
    %38 = vector.broadcast %37 : vector<1x32xf32> to vector<16x32xf32>
    %39 = arith.addf %36, %38 : vector<16x32xf32>
    %c0_20 = arith.constant 0 : index
    %c0_21 = arith.constant 0 : index
    %40 = vector.load %arg8[%c0_20, %c0_21] : memref<16x32xf32, #tpu.memory_space<vmem>>, vector<16x32xf32>
    tpu.vector_store %arg8[%c0_20, %c0_21], %39 {strides = array<i32>} : memref<16x32xf32, #tpu.memory_space<vmem>>, vector<16x32xf32>,
    return
  }
  func.func @transform_0(%arg0: i32) -> (i32, i32) {
    %c0_i32 = arith.constant 0 : i32
    %c0_i32_0 = arith.constant 0 : i32
    %c0_i32_1 = arith.constant 0 : i32
    return %c0_i32, %c0_i32_0 : i32, i32
  }
  func.func @transform_1(%arg0: i32) -> (i32, i32) {
    %c0_i32 = arith.constant 0 : i32
    %c0_i32_0 = arith.constant 0 : i32
    %c0_i32_1 = arith.constant 0 : i32
    return %c0_i32, %c0_i32_0 : i32, i32
  }
  func.func @transform_2(%arg0: i32) -> (i32, i32) {
    %c0_i32 = arith.constant 0 : i32
    %c0_i32_0 = arith.constant 0 : i32
    %c0_i32_1 = arith.constant 0 : i32
    return %c0_i32, %c0_i32_0 : i32, i32
  }
  func.func @transform_3(%arg0: i32) -> (i32, i32) {
    %c0_i32 = arith.constant 0 : i32
    %c0_i32_0 = arith.constant 0 : i32
    %c0_i32_1 = arith.constant 0 : i32
    return %c0_i32, %c0_i32_0 : i32, i32
  }
  func.func @transform_4(%arg0: i32) -> (i32, i32) {
    %c0_i32 = arith.constant 0 : i32
    %c0_i32_0 = arith.constant 0 : i32
    %c0_i32_1 = arith.constant 0 : i32
    return %c0_i32, %c0_i32_0 : i32, i32
  }
  func.func @transform_5(%arg0: i32) -> (i32, i32) {
    %c0_i32 = arith.constant 0 : i32
    %c0_i32_0 = arith.constant 0 : i32
    %c0_i32_1 = arith.constant 0 : i32
    return %c0_i32, %c0_i32_0 : i32, i32
  }
  func.func @transform_6(%arg0: i32) -> (i32, i32) {
    %c0_i32 = arith.constant 0 : i32
    %c0_i32_0 = arith.constant 0 : i32
    %c0_i32_1 = arith.constant 0 : i32
    return %c0_i32, %c0_i32_0 : i32, i32
  }
  func.func @transform_7(%arg0: i32) -> (i32, i32) {
    %c0_i32 = arith.constant 0 : i32
    %c0_i32_0 = arith.constant 0 : i32
    %c0_i32_1 = arith.constant 0 : i32
    return %c0_i32, %c0_i32_0 : i32, i32
  }
}

module attributes {stable_mosaic.version = 11 : i64} {
  func.func @_attn_sublayer_kernel(%arg0: i32, %arg1: memref<1x8x32xf32, #tpu.memory_space<vmem>>, %arg2: memref<1x8x32xf32, #tpu.memory_space<vmem>>, %arg3: memref<1x1x8xf32, #tpu.memory_space<vmem>>, %arg4: memref<32x32xbf16, #tpu.memory_space<vmem>>, %arg5: memref<1x32xf32, #tpu.memory_space<vmem>>, %arg6: memref<32x64xbf16, #tpu.memory_space<vmem>>, %arg7: memref<1x64xf32, #tpu.memory_space<vmem>>, %arg8: memref<32x32xbf16, #tpu.memory_space<vmem>>, %arg9: memref<1x32xf32, #tpu.memory_space<vmem>>, %arg10: memref<1x32xf32, #tpu.memory_space<vmem>>, %arg11: memref<1x32xf32, #tpu.memory_space<vmem>>, %arg12: memref<1x8x32xf32, #tpu.memory_space<vmem>>) attributes {dimension_semantics = [#tpu.dimension_semantics<parallel>], iteration_bounds = array<i64: 2>, scalar_prefetch = 0 : i64, scratch_operands = 0 : i64, tpu.core_type = #tpu.core_type<tc>, window_params = [{transform_indices = @transform_0, window_bounds = array<i64: 1, 8, 32>}, {transform_indices = @transform_1, window_bounds = array<i64: 1, 8, 32>}, {transform_indices = @transform_2, window_bounds = array<i64: 1, 1, 8>}, {pipeline_mode = #tpu.pipeline_mode<synchronous>, transform_indices = @transform_3, window_bounds = array<i64: 32, 32>}, {pipeline_mode = #tpu.pipeline_mode<synchronous>, transform_indices = @transform_4, window_bounds = array<i64: 1, 32>}, {pipeline_mode = #tpu.pipeline_mode<synchronous>, transform_indices = @transform_5, window_bounds = array<i64: 32, 64>}, {pipeline_mode = #tpu.pipeline_mode<synchronous>, transform_indices = @transform_6, window_bounds = array<i64: 1, 64>}, {pipeline_mode = #tpu.pipeline_mode<synchronous>, transform_indices = @transform_7, window_bounds = array<i64: 32, 32>}, {pipeline_mode = #tpu.pipeline_mode<synchronous>, transform_indices = @transform_8, window_bounds = array<i64: 1, 32>}, {pipeline_mode = #tpu.pipeline_mode<synchronous>, transform_indices = @transform_9, window_bounds = array<i64: 1, 32>}, {pipeline_mode = #tpu.pipeline_mode<synchronous>, transform_indices = @transform_10, window_bounds = array<i64: 1, 32>}, {transform_indices = @transform_11, window_bounds = array<i64: 1, 8, 32>}]} {
    %c0 = arith.constant 0 : index
    %c0_0 = arith.constant 0 : index
    %c0_1 = arith.constant 0 : index
    %0 = vector.load %arg1[%c0, %c0_0, %c0_1] : memref<1x8x32xf32, #tpu.memory_space<vmem>>, vector<1x8x32xf32>
    %1 = vector.shape_cast %0 : vector<1x8x32xf32> to vector<8x32xf32>
    %c0_2 = arith.constant 0 : index
    %c0_3 = arith.constant 0 : index
    %c0_4 = arith.constant 0 : index
    %2 = vector.load %arg2[%c0_2, %c0_3, %c0_4] : memref<1x8x32xf32, #tpu.memory_space<vmem>>, vector<1x8x32xf32>
    %3 = vector.shape_cast %2 : vector<1x8x32xf32> to vector<8x32xf32>
    %4 = arith.truncf %1 : vector<8x32xf32> to vector<8x32xbf16>
    %c0_5 = arith.constant 0 : index
    %c0_6 = arith.constant 0 : index
    %5 = vector.load %arg4[%c0_5, %c0_6] : memref<32x32xbf16, #tpu.memory_space<vmem>>, vector<32x32xbf16>
    %cst = arith.constant dense<0.000000e+00> : vector<8x32xf32>
    %6 = tpu.matmul %4, %5, %cst {dimension_numbers = #tpu.dot_dimension_numbers<[1], [0], [0], [1], [0, 0, 1, 1], [], []>} : vector<8x32xbf16>, vector<32x32xbf16>, vector<8x32xf32> -> vector<8x32xf32>
    %c0_7 = arith.constant 0 : index
    %c0_8 = arith.constant 0 : index
    %7 = vector.load %arg5[%c0_7, %c0_8] : memref<1x32xf32, #tpu.memory_space<vmem>>, vector<1x32xf32>
    %8 = vector.broadcast %7 : vector<1x32xf32> to vector<8x32xf32>
    %9 = arith.addf %6, %8 : vector<8x32xf32>
    %10 = arith.truncf %3 : vector<8x32xf32> to vector<8x32xbf16>
    %c0_9 = arith.constant 0 : index
    %c0_10 = arith.constant 0 : index
    %11 = vector.load %arg6[%c0_9, %c0_10] : memref<32x64xbf16, #tpu.memory_space<vmem>>, vector<32x64xbf16>
    %cst_11 = arith.constant dense<0.000000e+00> : vector<8x64xf32>
    %12 = tpu.matmul %10, %11, %cst_11 {dimension_numbers = #tpu.dot_dimension_numbers<[1], [0], [0], [1], [0, 0, 1, 1], [], []>} : vector<8x32xbf16>, vector<32x64xbf16>, vector<8x64xf32> -> vector<8x64xf32>
    %c0_12 = arith.constant 0 : index
    %c0_13 = arith.constant 0 : index
    %13 = vector.load %arg7[%c0_12, %c0_13] : memref<1x64xf32, #tpu.memory_space<vmem>>, vector<1x64xf32>
    %14 = vector.broadcast %13 : vector<1x64xf32> to vector<8x64xf32>
    %15 = arith.addf %12, %14 : vector<8x64xf32>
    %16 = vector.extract_strided_slice %15 {offsets = [0, 0], sizes = [8, 32], strides = [1, 1]} : vector<8x64xf32> to vector<8x32xf32>
    %17 = vector.extract_strided_slice %15 {offsets = [0, 32], sizes = [8, 32], strides = [1, 1]} : vector<8x64xf32> to vector<8x32xf32>
    %c0_14 = arith.constant 0 : index
    %c0_15 = arith.constant 0 : index
    %c0_16 = arith.constant 0 : index
    %18 = vector.load %arg3[%c0_14, %c0_15, %c0_16] : memref<1x1x8xf32, #tpu.memory_space<vmem>>, vector<1x1x8xf32>
    %19 = vector.shape_cast %18 : vector<1x1x8xf32> to vector<1x8xf32>
    %cst_17 = arith.constant 0.000000e+00 : f32
    %20 = vector.broadcast %cst_17 : f32 to vector<1x8xf32>
    %21 = arith.cmpf ogt, %19, %20 : vector<1x8xf32>
    %cst_18 = arith.constant 0.000000e+00 : f32
    %cst_19 = arith.constant -1.000000e+09 : f32
    %22 = vector.broadcast %cst_18 : f32 to vector<1x8xf32>
    %23 = vector.broadcast %cst_19 : f32 to vector<1x8xf32>
    %24 = arith.select %21, %22, %23 : vector<1x8xi1>, vector<1x8xf32>
    %25 = vector.shape_cast %24 : vector<1x8xf32> to vector<1x8xf32>
    %26 = vector.broadcast %25 : vector<1x8xf32> to vector<8x8xf32>
    %cst_20 = arith.constant 0.000000e+00 : f32
    %27 = vector.broadcast %cst_20 : f32 to vector<8x32xf32>
    %28 = vector.extract_strided_slice %9 {offsets = [0, 0], sizes = [8, 8], strides = [1, 1]} : vector<8x32xf32> to vector<8x8xf32>
    %29 = arith.truncf %28 : vector<8x8xf32> to vector<8x8xbf16>
    %30 = vector.extract_strided_slice %16 {offsets = [0, 0], sizes = [8, 8], strides = [1, 1]} : vector<8x32xf32> to vector<8x8xf32>
    %31 = arith.truncf %30 : vector<8x8xf32> to vector<8x8xbf16>
    %32 = vector.extract_strided_slice %17 {offsets = [0, 0], sizes = [8, 8], strides = [1, 1]} : vector<8x32xf32> to vector<8x8xf32>
    %33 = arith.truncf %32 : vector<8x8xf32> to vector<8x8xbf16>
    %cst_21 = arith.constant dense<0.000000e+00> : vector<8x8xf32>
    %34 = tpu.matmul %29, %31, %cst_21 {dimension_numbers = #tpu.dot_dimension_numbers<[1], [1], [0], [0], [0, 0, 1, 0], [], []>} : vector<8x8xbf16>, vector<8x8xbf16>, vector<8x8xf32> -> vector<8x8xf32>
    %cst_22 = arith.constant 0.353553385 : f32
    %35 = vector.broadcast %cst_22 : f32 to vector<8x8xf32>
    %36 = arith.mulf %34, %35 : vector<8x8xf32>
    %37 = arith.addf %36, %26 : vector<8x8xf32>
    %cst_23 = arith.constant dense<0xFF800000> : vector<8xf32>
    %38 = vector.multi_reduction <maximumf>, %37, %cst_23 [1] : vector<8x8xf32> to vector<8xf32>
    %39 = vector.shape_cast %38 : vector<8xf32> to vector<8x1xf32>
    %40 = vector.broadcast %39 : vector<8x1xf32> to vector<8x8xf32>
    %41 = arith.subf %37, %40 : vector<8x8xf32>
    %42 = math.exp %41 : vector<8x8xf32>
    %cst_24 = arith.constant dense<0.000000e+00> : vector<8xf32>
    %43 = vector.multi_reduction <add>, %42, %cst_24 [1] : vector<8x8xf32> to vector<8xf32>
    %44 = vector.shape_cast %43 : vector<8xf32> to vector<8x1xf32>
    %45 = arith.truncf %42 : vector<8x8xf32> to vector<8x8xbf16>
    %cst_25 = arith.constant dense<0.000000e+00> : vector<8x8xf32>
    %46 = tpu.matmul %45, %33, %cst_25 {dimension_numbers = #tpu.dot_dimension_numbers<[1], [0], [0], [1], [0, 0, 1, 1], [], []>} : vector<8x8xbf16>, vector<8x8xbf16>, vector<8x8xf32> -> vector<8x8xf32>
    %47 = tpu.reciprocal %44 {approx = true} : vector<8x1xf32> -> vector<8x1xf32>
    %48 = vector.broadcast %47 : vector<8x1xf32> to vector<8x8xf32>
    %49 = arith.mulf %46, %48 : vector<8x8xf32>
    %50 = arith.truncf %49 : vector<8x8xf32> to vector<8x8xbf16>
    %c0_26 = arith.constant 0 : index
    %c0_27 = arith.constant 0 : index
    %51 = vector.load %arg8[%c0_26, %c0_27] : memref<32x32xbf16, #tpu.memory_space<vmem>>, vector<8x32xbf16>
    %cst_28 = arith.constant dense<0.000000e+00> : vector<8x32xf32>
    %52 = tpu.matmul %50, %51, %cst_28 {dimension_numbers = #tpu.dot_dimension_numbers<[1], [0], [0], [1], [0, 0, 1, 1], [], []>} : vector<8x8xbf16>, vector<8x32xbf16>, vector<8x32xf32> -> vector<8x32xf32>
    %53 = arith.addf %27, %52 : vector<8x32xf32>
    %54 = vector.extract_strided_slice %9 {offsets = [0, 8], sizes = [8, 8], strides = [1, 1]} : vector<8x32xf32> to vector<8x8xf32>
    %55 = arith.truncf %54 : vector<8x8xf32> to vector<8x8xbf16>
    %56 = vector.extract_strided_slice %16 {offsets = [0, 8], sizes = [8, 8], strides = [1, 1]} : vector<8x32xf32> to vector<8x8xf32>
    %57 = arith.truncf %56 : vector<8x8xf32> to vector<8x8xbf16>
    %58 = vector.extract_strided_slice %17 {offsets = [0, 8], sizes = [8, 8], strides = [1, 1]} : vector<8x32xf32> to vector<8x8xf32>
    %59 = arith.truncf %58 : vector<8x8xf32> to vector<8x8xbf16>
    %cst_29 = arith.constant dense<0.000000e+00> : vector<8x8xf32>
    %60 = tpu.matmul %55, %57, %cst_29 {dimension_numbers = #tpu.dot_dimension_numbers<[1], [1], [0], [0], [0, 0, 1, 0], [], []>} : vector<8x8xbf16>, vector<8x8xbf16>, vector<8x8xf32> -> vector<8x8xf32>
    %cst_30 = arith.constant 0.353553385 : f32
    %61 = vector.broadcast %cst_30 : f32 to vector<8x8xf32>
    %62 = arith.mulf %60, %61 : vector<8x8xf32>
    %63 = arith.addf %62, %26 : vector<8x8xf32>
    %cst_31 = arith.constant dense<0xFF800000> : vector<8xf32>
    %64 = vector.multi_reduction <maximumf>, %63, %cst_31 [1] : vector<8x8xf32> to vector<8xf32>
    %65 = vector.shape_cast %64 : vector<8xf32> to vector<8x1xf32>
    %66 = vector.broadcast %65 : vector<8x1xf32> to vector<8x8xf32>
    %67 = arith.subf %63, %66 : vector<8x8xf32>
    %68 = math.exp %67 : vector<8x8xf32>
    %cst_32 = arith.constant dense<0.000000e+00> : vector<8xf32>
    %69 = vector.multi_reduction <add>, %68, %cst_32 [1] : vector<8x8xf32> to vector<8xf32>
    %70 = vector.shape_cast %69 : vector<8xf32> to vector<8x1xf32>
    %71 = arith.truncf %68 : vector<8x8xf32> to vector<8x8xbf16>
    %cst_33 = arith.constant dense<0.000000e+00> : vector<8x8xf32>
    %72 = tpu.matmul %71, %59, %cst_33 {dimension_numbers = #tpu.dot_dimension_numbers<[1], [0], [0], [1], [0, 0, 1, 1], [], []>} : vector<8x8xbf16>, vector<8x8xbf16>, vector<8x8xf32> -> vector<8x8xf32>
    %73 = tpu.reciprocal %70 {approx = true} : vector<8x1xf32> -> vector<8x1xf32>
    %74 = vector.broadcast %73 : vector<8x1xf32> to vector<8x8xf32>
    %75 = arith.mulf %72, %74 : vector<8x8xf32>
    %76 = arith.truncf %75 : vector<8x8xf32> to vector<8x8xbf16>
    %c8 = arith.constant 8 : index
    %c0_34 = arith.constant 0 : index
    %77 = vector.load %arg8[%c8, %c0_34] : memref<32x32xbf16, #tpu.memory_space<vmem>>, vector<8x32xbf16>
    %cst_35 = arith.constant dense<0.000000e+00> : vector<8x32xf32>
    %78 = tpu.matmul %76, %77, %cst_35 {dimension_numbers = #tpu.dot_dimension_numbers<[1], [0], [0], [1], [0, 0, 1, 1], [], []>} : vector<8x8xbf16>, vector<8x32xbf16>, vector<8x32xf32> -> vector<8x32xf32>
    %79 = arith.addf %53, %78 : vector<8x32xf32>
    %80 = vector.extract_strided_slice %9 {offsets = [0, 16], sizes = [8, 8], strides = [1, 1]} : vector<8x32xf32> to vector<8x8xf32>
    %81 = arith.truncf %80 : vector<8x8xf32> to vector<8x8xbf16>
    %82 = vector.extract_strided_slice %16 {offsets = [0, 16], sizes = [8, 8], strides = [1, 1]} : vector<8x32xf32> to vector<8x8xf32>
    %83 = arith.truncf %82 : vector<8x8xf32> to vector<8x8xbf16>
    %84 = vector.extract_strided_slice %17 {offsets = [0, 16], sizes = [8, 8], strides = [1, 1]} : vector<8x32xf32> to vector<8x8xf32>
    %85 = arith.truncf %84 : vector<8x8xf32> to vector<8x8xbf16>
    %cst_36 = arith.constant dense<0.000000e+00> : vector<8x8xf32>
    %86 = tpu.matmul %81, %83, %cst_36 {dimension_numbers = #tpu.dot_dimension_numbers<[1], [1], [0], [0], [0, 0, 1, 0], [], []>} : vector<8x8xbf16>, vector<8x8xbf16>, vector<8x8xf32> -> vector<8x8xf32>
    %cst_37 = arith.constant 0.353553385 : f32
    %87 = vector.broadcast %cst_37 : f32 to vector<8x8xf32>
    %88 = arith.mulf %86, %87 : vector<8x8xf32>
    %89 = arith.addf %88, %26 : vector<8x8xf32>
    %cst_38 = arith.constant dense<0xFF800000> : vector<8xf32>
    %90 = vector.multi_reduction <maximumf>, %89, %cst_38 [1] : vector<8x8xf32> to vector<8xf32>
    %91 = vector.shape_cast %90 : vector<8xf32> to vector<8x1xf32>
    %92 = vector.broadcast %91 : vector<8x1xf32> to vector<8x8xf32>
    %93 = arith.subf %89, %92 : vector<8x8xf32>
    %94 = math.exp %93 : vector<8x8xf32>
    %cst_39 = arith.constant dense<0.000000e+00> : vector<8xf32>
    %95 = vector.multi_reduction <add>, %94, %cst_39 [1] : vector<8x8xf32> to vector<8xf32>
    %96 = vector.shape_cast %95 : vector<8xf32> to vector<8x1xf32>
    %97 = arith.truncf %94 : vector<8x8xf32> to vector<8x8xbf16>
    %cst_40 = arith.constant dense<0.000000e+00> : vector<8x8xf32>
    %98 = tpu.matmul %97, %85, %cst_40 {dimension_numbers = #tpu.dot_dimension_numbers<[1], [0], [0], [1], [0, 0, 1, 1], [], []>} : vector<8x8xbf16>, vector<8x8xbf16>, vector<8x8xf32> -> vector<8x8xf32>
    %99 = tpu.reciprocal %96 {approx = true} : vector<8x1xf32> -> vector<8x1xf32>
    %100 = vector.broadcast %99 : vector<8x1xf32> to vector<8x8xf32>
    %101 = arith.mulf %98, %100 : vector<8x8xf32>
    %102 = arith.truncf %101 : vector<8x8xf32> to vector<8x8xbf16>
    %c16 = arith.constant 16 : index
    %c0_41 = arith.constant 0 : index
    %103 = vector.load %arg8[%c16, %c0_41] : memref<32x32xbf16, #tpu.memory_space<vmem>>, vector<8x32xbf16>
    %cst_42 = arith.constant dense<0.000000e+00> : vector<8x32xf32>
    %104 = tpu.matmul %102, %103, %cst_42 {dimension_numbers = #tpu.dot_dimension_numbers<[1], [0], [0], [1], [0, 0, 1, 1], [], []>} : vector<8x8xbf16>, vector<8x32xbf16>, vector<8x32xf32> -> vector<8x32xf32>
    %105 = arith.addf %79, %104 : vector<8x32xf32>
    %106 = vector.extract_strided_slice %9 {offsets = [0, 24], sizes = [8, 8], strides = [1, 1]} : vector<8x32xf32> to vector<8x8xf32>
    %107 = arith.truncf %106 : vector<8x8xf32> to vector<8x8xbf16>
    %108 = vector.extract_strided_slice %16 {offsets = [0, 24], sizes = [8, 8], strides = [1, 1]} : vector<8x32xf32> to vector<8x8xf32>
    %109 = arith.truncf %108 : vector<8x8xf32> to vector<8x8xbf16>
    %110 = vector.extract_strided_slice %17 {offsets = [0, 24], sizes = [8, 8], strides = [1, 1]} : vector<8x32xf32> to vector<8x8xf32>
    %111 = arith.truncf %110 : vector<8x8xf32> to vector<8x8xbf16>
    %cst_43 = arith.constant dense<0.000000e+00> : vector<8x8xf32>
    %112 = tpu.matmul %107, %109, %cst_43 {dimension_numbers = #tpu.dot_dimension_numbers<[1], [1], [0], [0], [0, 0, 1, 0], [], []>} : vector<8x8xbf16>, vector<8x8xbf16>, vector<8x8xf32> -> vector<8x8xf32>
    %cst_44 = arith.constant 0.353553385 : f32
    %113 = vector.broadcast %cst_44 : f32 to vector<8x8xf32>
    %114 = arith.mulf %112, %113 : vector<8x8xf32>
    %115 = arith.addf %114, %26 : vector<8x8xf32>
    %cst_45 = arith.constant dense<0xFF800000> : vector<8xf32>
    %116 = vector.multi_reduction <maximumf>, %115, %cst_45 [1] : vector<8x8xf32> to vector<8xf32>
    %117 = vector.shape_cast %116 : vector<8xf32> to vector<8x1xf32>
    %118 = vector.broadcast %117 : vector<8x1xf32> to vector<8x8xf32>
    %119 = arith.subf %115, %118 : vector<8x8xf32>
    %120 = math.exp %119 : vector<8x8xf32>
    %cst_46 = arith.constant dense<0.000000e+00> : vector<8xf32>
    %121 = vector.multi_reduction <add>, %120, %cst_46 [1] : vector<8x8xf32> to vector<8xf32>
    %122 = vector.shape_cast %121 : vector<8xf32> to vector<8x1xf32>
    %123 = arith.truncf %120 : vector<8x8xf32> to vector<8x8xbf16>
    %cst_47 = arith.constant dense<0.000000e+00> : vector<8x8xf32>
    %124 = tpu.matmul %123, %111, %cst_47 {dimension_numbers = #tpu.dot_dimension_numbers<[1], [0], [0], [1], [0, 0, 1, 1], [], []>} : vector<8x8xbf16>, vector<8x8xbf16>, vector<8x8xf32> -> vector<8x8xf32>
    %125 = tpu.reciprocal %122 {approx = true} : vector<8x1xf32> -> vector<8x1xf32>
    %126 = vector.broadcast %125 : vector<8x1xf32> to vector<8x8xf32>
    %127 = arith.mulf %124, %126 : vector<8x8xf32>
    %128 = arith.truncf %127 : vector<8x8xf32> to vector<8x8xbf16>
    %c24 = arith.constant 24 : index
    %c0_48 = arith.constant 0 : index
    %129 = vector.load %arg8[%c24, %c0_48] : memref<32x32xbf16, #tpu.memory_space<vmem>>, vector<8x32xbf16>
    %cst_49 = arith.constant dense<0.000000e+00> : vector<8x32xf32>
    %130 = tpu.matmul %128, %129, %cst_49 {dimension_numbers = #tpu.dot_dimension_numbers<[1], [0], [0], [1], [0, 0, 1, 1], [], []>} : vector<8x8xbf16>, vector<8x32xbf16>, vector<8x32xf32> -> vector<8x32xf32>
    %131 = arith.addf %105, %130 : vector<8x32xf32>
    %132 = arith.addf %1, %131 : vector<8x32xf32>
    %c0_50 = arith.constant 0 : index
    %c0_51 = arith.constant 0 : index
    %133 = vector.load %arg9[%c0_50, %c0_51] : memref<1x32xf32, #tpu.memory_space<vmem>>, vector<1x32xf32>
    %134 = vector.broadcast %133 : vector<1x32xf32> to vector<8x32xf32>
    %135 = arith.addf %132, %134 : vector<8x32xf32>
    %cst_52 = arith.constant dense<0.000000e+00> : vector<8xf32>
    %136 = vector.multi_reduction <add>, %135, %cst_52 [1] : vector<8x32xf32> to vector<8xf32>
    %137 = vector.shape_cast %136 : vector<8xf32> to vector<8x1xf32>
    %cst_53 = arith.constant 3.200000e+01 : f32
    %138 = vector.broadcast %cst_53 : f32 to vector<8x1xf32>
    %139 = arith.divf %137, %138 : vector<8x1xf32>
    %140 = vector.broadcast %139 : vector<8x1xf32> to vector<8x32xf32>
    %141 = arith.subf %135, %140 : vector<8x32xf32>
    %142 = arith.mulf %141, %141 : vector<8x32xf32>
    %cst_54 = arith.constant dense<0.000000e+00> : vector<8xf32>
    %143 = vector.multi_reduction <add>, %142, %cst_54 [1] : vector<8x32xf32> to vector<8xf32>
    %144 = vector.shape_cast %143 : vector<8xf32> to vector<8x1xf32>
    %cst_55 = arith.constant 3.200000e+01 : f32
    %145 = vector.broadcast %cst_55 : f32 to vector<8x1xf32>
    %146 = arith.divf %144, %145 : vector<8x1xf32>
    %147 = vector.broadcast %139 : vector<8x1xf32> to vector<8x32xf32>
    %148 = arith.subf %135, %147 : vector<8x32xf32>
    %cst_56 = arith.constant 9.99999974E-6 : f32
    %149 = vector.broadcast %cst_56 : f32 to vector<8x1xf32>
    %150 = arith.addf %146, %149 : vector<8x1xf32>
    %151 = math.rsqrt %150 : vector<8x1xf32>
    %152 = vector.broadcast %151 : vector<8x1xf32> to vector<8x32xf32>
    %153 = arith.mulf %148, %152 : vector<8x32xf32>
    %c0_57 = arith.constant 0 : index
    %c0_58 = arith.constant 0 : index
    %154 = vector.load %arg10[%c0_57, %c0_58] : memref<1x32xf32, #tpu.memory_space<vmem>>, vector<1x32xf32>
    %155 = vector.broadcast %154 : vector<1x32xf32> to vector<8x32xf32>
    %156 = arith.mulf %153, %155 : vector<8x32xf32>
    %c0_59 = arith.constant 0 : index
    %c0_60 = arith.constant 0 : index
    %157 = vector.load %arg11[%c0_59, %c0_60] : memref<1x32xf32, #tpu.memory_space<vmem>>, vector<1x32xf32>
    %158 = vector.broadcast %157 : vector<1x32xf32> to vector<8x32xf32>
    %159 = arith.addf %156, %158 : vector<8x32xf32>
    %c0_61 = arith.constant 0 : index
    %c0_62 = arith.constant 0 : index
    %c0_63 = arith.constant 0 : index
    %160 = vector.load %arg12[%c0_61, %c0_62, %c0_63] : memref<1x8x32xf32, #tpu.memory_space<vmem>>, vector<1x8x32xf32>
    %161 = vector.shape_cast %160 : vector<1x8x32xf32> to vector<8x32xf32>
    %162 = vector.shape_cast %159 : vector<8x32xf32> to vector<1x8x32xf32>
    tpu.vector_store %arg12[%c0_61, %c0_62, %c0_63], %162 {strides = array<i32>} : memref<1x8x32xf32, #tpu.memory_space<vmem>>, vector<1x8x32xf32>,
    return
  }
  func.func @transform_0(%arg0: i32) -> (i32, i32, i32) {
    %c0_i32 = arith.constant 0 : i32
    %c0_i32_0 = arith.constant 0 : i32
    %c0_i32_1 = arith.constant 0 : i32
    return %arg0, %c0_i32, %c0_i32_0 : i32, i32, i32
  }
  func.func @transform_1(%arg0: i32) -> (i32, i32, i32) {
    %c0_i32 = arith.constant 0 : i32
    %c0_i32_0 = arith.constant 0 : i32
    %c0_i32_1 = arith.constant 0 : i32
    return %arg0, %c0_i32, %c0_i32_0 : i32, i32, i32
  }
  func.func @transform_2(%arg0: i32) -> (i32, i32, i32) {
    %c0_i32 = arith.constant 0 : i32
    %c0_i32_0 = arith.constant 0 : i32
    %c0_i32_1 = arith.constant 0 : i32
    return %arg0, %c0_i32, %c0_i32_0 : i32, i32, i32
  }
  func.func @transform_3(%arg0: i32) -> (i32, i32) {
    %c0_i32 = arith.constant 0 : i32
    %c0_i32_0 = arith.constant 0 : i32
    %c0_i32_1 = arith.constant 0 : i32
    return %c0_i32, %c0_i32_0 : i32, i32
  }
  func.func @transform_4(%arg0: i32) -> (i32, i32) {
    %c0_i32 = arith.constant 0 : i32
    %c0_i32_0 = arith.constant 0 : i32
    %c0_i32_1 = arith.constant 0 : i32
    return %c0_i32, %c0_i32_0 : i32, i32
  }
  func.func @transform_5(%arg0: i32) -> (i32, i32) {
    %c0_i32 = arith.constant 0 : i32
    %c0_i32_0 = arith.constant 0 : i32
    %c0_i32_1 = arith.constant 0 : i32
    return %c0_i32, %c0_i32_0 : i32, i32
  }
  func.func @transform_6(%arg0: i32) -> (i32, i32) {
    %c0_i32 = arith.constant 0 : i32
    %c0_i32_0 = arith.constant 0 : i32
    %c0_i32_1 = arith.constant 0 : i32
    return %c0_i32, %c0_i32_0 : i32, i32
  }
  func.func @transform_7(%arg0: i32) -> (i32, i32) {
    %c0_i32 = arith.constant 0 : i32
    %c0_i32_0 = arith.constant 0 : i32
    %c0_i32_1 = arith.constant 0 : i32
    return %c0_i32, %c0_i32_0 : i32, i32
  }
  func.func @transform_8(%arg0: i32) -> (i32, i32) {
    %c0_i32 = arith.constant 0 : i32
    %c0_i32_0 = arith.constant 0 : i32
    %c0_i32_1 = arith.constant 0 : i32
    return %c0_i32, %c0_i32_0 : i32, i32
  }
  func.func @transform_9(%arg0: i32) -> (i32, i32) {
    %c0_i32 = arith.constant 0 : i32
    %c0_i32_0 = arith.constant 0 : i32
    %c0_i32_1 = arith.constant 0 : i32
    return %c0_i32, %c0_i32_0 : i32, i32
  }
  func.func @transform_10(%arg0: i32) -> (i32, i32) {
    %c0_i32 = arith.constant 0 : i32
    %c0_i32_0 = arith.constant 0 : i32
    %c0_i32_1 = arith.constant 0 : i32
    return %c0_i32, %c0_i32_0 : i32, i32
  }
  func.func @transform_11(%arg0: i32) -> (i32, i32, i32) {
    %c0_i32 = arith.constant 0 : i32
    %c0_i32_0 = arith.constant 0 : i32
    %c0_i32_1 = arith.constant 0 : i32
    return %arg0, %c0_i32, %c0_i32_0 : i32, i32, i32
  }
}

module attributes {stable_mosaic.version = 11 : i64} {
  func.func @_proj_kernel(%arg0: i32, %arg1: memref<16x32xf32, #tpu.memory_space<vmem>>, %arg2: memref<32x128xbf16, #tpu.memory_space<vmem>>, %arg3: memref<1x128xf32, #tpu.memory_space<vmem>>, %arg4: memref<16x128xf32, #tpu.memory_space<vmem>>) attributes {dimension_semantics = [#tpu.dimension_semantics<arbitrary>], iteration_bounds = array<i64: 1>, scalar_prefetch = 0 : i64, scratch_operands = 0 : i64, tpu.core_type = #tpu.core_type<tc>, window_params = [{pipeline_mode = #tpu.pipeline_mode<synchronous>, transform_indices = @transform_0, window_bounds = array<i64: 16, 32>}, {pipeline_mode = #tpu.pipeline_mode<synchronous>, transform_indices = @transform_1, window_bounds = array<i64: 32, 128>}, {pipeline_mode = #tpu.pipeline_mode<synchronous>, transform_indices = @transform_2, window_bounds = array<i64: 1, 128>}, {pipeline_mode = #tpu.pipeline_mode<synchronous>, transform_indices = @transform_3, window_bounds = array<i64: 16, 128>}]} {
    %c0 = arith.constant 0 : index
    %c0_0 = arith.constant 0 : index
    %0 = vector.load %arg1[%c0, %c0_0] : memref<16x32xf32, #tpu.memory_space<vmem>>, vector<16x32xf32>
    %1 = arith.truncf %0 : vector<16x32xf32> to vector<16x32xbf16>
    %c0_1 = arith.constant 0 : index
    %c0_2 = arith.constant 0 : index
    %2 = vector.load %arg2[%c0_1, %c0_2] : memref<32x128xbf16, #tpu.memory_space<vmem>>, vector<32x128xbf16>
    %cst = arith.constant dense<0.000000e+00> : vector<16x128xf32>
    %3 = tpu.matmul %1, %2, %cst {dimension_numbers = #tpu.dot_dimension_numbers<[1], [0], [0], [1], [0, 0, 1, 1], [], []>} : vector<16x32xbf16>, vector<32x128xbf16>, vector<16x128xf32> -> vector<16x128xf32>
    %c0_3 = arith.constant 0 : index
    %c0_4 = arith.constant 0 : index
    %4 = vector.load %arg3[%c0_3, %c0_4] : memref<1x128xf32, #tpu.memory_space<vmem>>, vector<1x128xf32>
    %5 = vector.broadcast %4 : vector<1x128xf32> to vector<16x128xf32>
    %6 = arith.addf %3, %5 : vector<16x128xf32>
    %c0_5 = arith.constant 0 : index
    %c0_6 = arith.constant 0 : index
    %7 = vector.load %arg4[%c0_5, %c0_6] : memref<16x128xf32, #tpu.memory_space<vmem>>, vector<16x128xf32>
    tpu.vector_store %arg4[%c0_5, %c0_6], %6 {strides = array<i32>} : memref<16x128xf32, #tpu.memory_space<vmem>>, vector<16x128xf32>,
    return
  }
  func.func @transform_0(%arg0: i32) -> (i32, i32) {
    %c0_i32 = arith.constant 0 : i32
    %c0_i32_0 = arith.constant 0 : i32
    %c0_i32_1 = arith.constant 0 : i32
    return %c0_i32, %c0_i32_0 : i32, i32
  }
  func.func @transform_1(%arg0: i32) -> (i32, i32) {
    %c0_i32 = arith.constant 0 : i32
    %c0_i32_0 = arith.constant 0 : i32
    %c0_i32_1 = arith.constant 0 : i32
    return %c0_i32, %c0_i32_0 : i32, i32
  }
  func.func @transform_2(%arg0: i32) -> (i32, i32) {
    %c0_i32 = arith.constant 0 : i32
    %c0_i32_0 = arith.constant 0 : i32
    %c0_i32_1 = arith.constant 0 : i32
    return %c0_i32, %c0_i32_0 : i32, i32
  }
  func.func @transform_3(%arg0: i32) -> (i32, i32) {
    %c0_i32 = arith.constant 0 : i32
    %c0_i32_0 = arith.constant 0 : i32
    %c0_i32_1 = arith.constant 0 : i32
    return %c0_i32, %c0_i32_0 : i32, i32
  }
}

module attributes {stable_mosaic.version = 11 : i64} {
  func.func @_attn_sublayer_kernel(%arg0: i32, %arg1: memref<1x8x32xf32, #tpu.memory_space<vmem>>, %arg2: memref<1x8x32xf32, #tpu.memory_space<vmem>>, %arg3: memref<1x1x8xf32, #tpu.memory_space<vmem>>, %arg4: memref<32x32xbf16, #tpu.memory_space<vmem>>, %arg5: memref<1x32xf32, #tpu.memory_space<vmem>>, %arg6: memref<32x64xbf16, #tpu.memory_space<vmem>>, %arg7: memref<1x64xf32, #tpu.memory_space<vmem>>, %arg8: memref<32x32xbf16, #tpu.memory_space<vmem>>, %arg9: memref<1x32xf32, #tpu.memory_space<vmem>>, %arg10: memref<1x32xf32, #tpu.memory_space<vmem>>, %arg11: memref<1x32xf32, #tpu.memory_space<vmem>>, %arg12: memref<1x8x32xf32, #tpu.memory_space<vmem>>) attributes {dimension_semantics = [#tpu.dimension_semantics<parallel>], iteration_bounds = array<i64: 2>, scalar_prefetch = 0 : i64, scratch_operands = 0 : i64, tpu.core_type = #tpu.core_type<tc>, window_params = [{transform_indices = @transform_0, window_bounds = array<i64: 1, 8, 32>}, {transform_indices = @transform_1, window_bounds = array<i64: 1, 8, 32>}, {transform_indices = @transform_2, window_bounds = array<i64: 1, 1, 8>}, {pipeline_mode = #tpu.pipeline_mode<synchronous>, transform_indices = @transform_3, window_bounds = array<i64: 32, 32>}, {pipeline_mode = #tpu.pipeline_mode<synchronous>, transform_indices = @transform_4, window_bounds = array<i64: 1, 32>}, {pipeline_mode = #tpu.pipeline_mode<synchronous>, transform_indices = @transform_5, window_bounds = array<i64: 32, 64>}, {pipeline_mode = #tpu.pipeline_mode<synchronous>, transform_indices = @transform_6, window_bounds = array<i64: 1, 64>}, {pipeline_mode = #tpu.pipeline_mode<synchronous>, transform_indices = @transform_7, window_bounds = array<i64: 32, 32>}, {pipeline_mode = #tpu.pipeline_mode<synchronous>, transform_indices = @transform_8, window_bounds = array<i64: 1, 32>}, {pipeline_mode = #tpu.pipeline_mode<synchronous>, transform_indices = @transform_9, window_bounds = array<i64: 1, 32>}, {pipeline_mode = #tpu.pipeline_mode<synchronous>, transform_indices = @transform_10, window_bounds = array<i64: 1, 32>}, {transform_indices = @transform_11, window_bounds = array<i64: 1, 8, 32>}]} {
    %c0 = arith.constant 0 : index
    %c0_0 = arith.constant 0 : index
    %c0_1 = arith.constant 0 : index
    %0 = vector.load %arg1[%c0, %c0_0, %c0_1] : memref<1x8x32xf32, #tpu.memory_space<vmem>>, vector<1x8x32xf32>
    %1 = vector.shape_cast %0 : vector<1x8x32xf32> to vector<8x32xf32>
    %c0_2 = arith.constant 0 : index
    %c0_3 = arith.constant 0 : index
    %c0_4 = arith.constant 0 : index
    %2 = vector.load %arg2[%c0_2, %c0_3, %c0_4] : memref<1x8x32xf32, #tpu.memory_space<vmem>>, vector<1x8x32xf32>
    %3 = vector.shape_cast %2 : vector<1x8x32xf32> to vector<8x32xf32>
    %4 = arith.truncf %1 : vector<8x32xf32> to vector<8x32xbf16>
    %c0_5 = arith.constant 0 : index
    %c0_6 = arith.constant 0 : index
    %5 = vector.load %arg4[%c0_5, %c0_6] : memref<32x32xbf16, #tpu.memory_space<vmem>>, vector<32x32xbf16>
    %cst = arith.constant dense<0.000000e+00> : vector<8x32xf32>
    %6 = tpu.matmul %4, %5, %cst {dimension_numbers = #tpu.dot_dimension_numbers<[1], [0], [0], [1], [0, 0, 1, 1], [], []>} : vector<8x32xbf16>, vector<32x32xbf16>, vector<8x32xf32> -> vector<8x32xf32>
    %c0_7 = arith.constant 0 : index
    %c0_8 = arith.constant 0 : index
    %7 = vector.load %arg5[%c0_7, %c0_8] : memref<1x32xf32, #tpu.memory_space<vmem>>, vector<1x32xf32>
    %8 = vector.broadcast %7 : vector<1x32xf32> to vector<8x32xf32>
    %9 = arith.addf %6, %8 : vector<8x32xf32>
    %10 = arith.truncf %3 : vector<8x32xf32> to vector<8x32xbf16>
    %c0_9 = arith.constant 0 : index
    %c0_10 = arith.constant 0 : index
    %11 = vector.load %arg6[%c0_9, %c0_10] : memref<32x64xbf16, #tpu.memory_space<vmem>>, vector<32x64xbf16>
    %cst_11 = arith.constant dense<0.000000e+00> : vector<8x64xf32>
    %12 = tpu.matmul %10, %11, %cst_11 {dimension_numbers = #tpu.dot_dimension_numbers<[1], [0], [0], [1], [0, 0, 1, 1], [], []>} : vector<8x32xbf16>, vector<32x64xbf16>, vector<8x64xf32> -> vector<8x64xf32>
    %c0_12 = arith.constant 0 : index
    %c0_13 = arith.constant 0 : index
    %13 = vector.load %arg7[%c0_12, %c0_13] : memref<1x64xf32, #tpu.memory_space<vmem>>, vector<1x64xf32>
    %14 = vector.broadcast %13 : vector<1x64xf32> to vector<8x64xf32>
    %15 = arith.addf %12, %14 : vector<8x64xf32>
    %16 = vector.extract_strided_slice %15 {offsets = [0, 0], sizes = [8, 32], strides = [1, 1]} : vector<8x64xf32> to vector<8x32xf32>
    %17 = vector.extract_strided_slice %15 {offsets = [0, 32], sizes = [8, 32], strides = [1, 1]} : vector<8x64xf32> to vector<8x32xf32>
    %c0_14 = arith.constant 0 : index
    %c0_15 = arith.constant 0 : index
    %c0_16 = arith.constant 0 : index
    %18 = vector.load %arg3[%c0_14, %c0_15, %c0_16] : memref<1x1x8xf32, #tpu.memory_space<vmem>>, vector<1x1x8xf32>
    %19 = vector.shape_cast %18 : vector<1x1x8xf32> to vector<1x8xf32>
    %cst_17 = arith.constant 0.000000e+00 : f32
    %20 = vector.broadcast %cst_17 : f32 to vector<1x8xf32>
    %21 = arith.cmpf ogt, %19, %20 : vector<1x8xf32>
    %cst_18 = arith.constant 0.000000e+00 : f32
    %cst_19 = arith.constant -1.000000e+09 : f32
    %22 = vector.broadcast %cst_18 : f32 to vector<1x8xf32>
    %23 = vector.broadcast %cst_19 : f32 to vector<1x8xf32>
    %24 = arith.select %21, %22, %23 : vector<1x8xi1>, vector<1x8xf32>
    %25 = vector.shape_cast %24 : vector<1x8xf32> to vector<1x8xf32>
    %26 = vector.broadcast %25 : vector<1x8xf32> to vector<8x8xf32>
    %27 = tpu.iota {dimensions = array<i32: 0>} : vector<8x8xi32>
    %28 = tpu.iota {dimensions = array<i32: 1>} : vector<8x8xi32>
    %29 = arith.cmpi sge, %27, %28 : vector<8x8xi32>
    %cst_20 = arith.constant -1.000000e+09 : f32
    %30 = vector.broadcast %cst_20 : f32 to vector<8x8xf32>
    %31 = arith.select %29, %26, %30 : vector<8x8xi1>, vector<8x8xf32>
    %cst_21 = arith.constant 0.000000e+00 : f32
    %32 = vector.broadcast %cst_21 : f32 to vector<8x32xf32>
    %33 = vector.extract_strided_slice %9 {offsets = [0, 0], sizes = [8, 8], strides = [1, 1]} : vector<8x32xf32> to vector<8x8xf32>
    %34 = arith.truncf %33 : vector<8x8xf32> to vector<8x8xbf16>
    %35 = vector.extract_strided_slice %16 {offsets = [0, 0], sizes = [8, 8], strides = [1, 1]} : vector<8x32xf32> to vector<8x8xf32>
    %36 = arith.truncf %35 : vector<8x8xf32> to vector<8x8xbf16>
    %37 = vector.extract_strided_slice %17 {offsets = [0, 0], sizes = [8, 8], strides = [1, 1]} : vector<8x32xf32> to vector<8x8xf32>
    %38 = arith.truncf %37 : vector<8x8xf32> to vector<8x8xbf16>
    %cst_22 = arith.constant dense<0.000000e+00> : vector<8x8xf32>
    %39 = tpu.matmul %34, %36, %cst_22 {dimension_numbers = #tpu.dot_dimension_numbers<[1], [1], [0], [0], [0, 0, 1, 0], [], []>} : vector<8x8xbf16>, vector<8x8xbf16>, vector<8x8xf32> -> vector<8x8xf32>
    %cst_23 = arith.constant 0.353553385 : f32
    %40 = vector.broadcast %cst_23 : f32 to vector<8x8xf32>
    %41 = arith.mulf %39, %40 : vector<8x8xf32>
    %42 = arith.addf %41, %31 : vector<8x8xf32>
    %cst_24 = arith.constant dense<0xFF800000> : vector<8xf32>
    %43 = vector.multi_reduction <maximumf>, %42, %cst_24 [1] : vector<8x8xf32> to vector<8xf32>
    %44 = vector.shape_cast %43 : vector<8xf32> to vector<8x1xf32>
    %45 = vector.broadcast %44 : vector<8x1xf32> to vector<8x8xf32>
    %46 = arith.subf %42, %45 : vector<8x8xf32>
    %47 = math.exp %46 : vector<8x8xf32>
    %cst_25 = arith.constant dense<0.000000e+00> : vector<8xf32>
    %48 = vector.multi_reduction <add>, %47, %cst_25 [1] : vector<8x8xf32> to vector<8xf32>
    %49 = vector.shape_cast %48 : vector<8xf32> to vector<8x1xf32>
    %50 = arith.truncf %47 : vector<8x8xf32> to vector<8x8xbf16>
    %cst_26 = arith.constant dense<0.000000e+00> : vector<8x8xf32>
    %51 = tpu.matmul %50, %38, %cst_26 {dimension_numbers = #tpu.dot_dimension_numbers<[1], [0], [0], [1], [0, 0, 1, 1], [], []>} : vector<8x8xbf16>, vector<8x8xbf16>, vector<8x8xf32> -> vector<8x8xf32>
    %52 = tpu.reciprocal %49 {approx = true} : vector<8x1xf32> -> vector<8x1xf32>
    %53 = vector.broadcast %52 : vector<8x1xf32> to vector<8x8xf32>
    %54 = arith.mulf %51, %53 : vector<8x8xf32>
    %55 = arith.truncf %54 : vector<8x8xf32> to vector<8x8xbf16>
    %c0_27 = arith.constant 0 : index
    %c0_28 = arith.constant 0 : index
    %56 = vector.load %arg8[%c0_27, %c0_28] : memref<32x32xbf16, #tpu.memory_space<vmem>>, vector<8x32xbf16>
    %cst_29 = arith.constant dense<0.000000e+00> : vector<8x32xf32>
    %57 = tpu.matmul %55, %56, %cst_29 {dimension_numbers = #tpu.dot_dimension_numbers<[1], [0], [0], [1], [0, 0, 1, 1], [], []>} : vector<8x8xbf16>, vector<8x32xbf16>, vector<8x32xf32> -> vector<8x32xf32>
    %58 = arith.addf %32, %57 : vector<8x32xf32>
    %59 = vector.extract_strided_slice %9 {offsets = [0, 8], sizes = [8, 8], strides = [1, 1]} : vector<8x32xf32> to vector<8x8xf32>
    %60 = arith.truncf %59 : vector<8x8xf32> to vector<8x8xbf16>
    %61 = vector.extract_strided_slice %16 {offsets = [0, 8], sizes = [8, 8], strides = [1, 1]} : vector<8x32xf32> to vector<8x8xf32>
    %62 = arith.truncf %61 : vector<8x8xf32> to vector<8x8xbf16>
    %63 = vector.extract_strided_slice %17 {offsets = [0, 8], sizes = [8, 8], strides = [1, 1]} : vector<8x32xf32> to vector<8x8xf32>
    %64 = arith.truncf %63 : vector<8x8xf32> to vector<8x8xbf16>
    %cst_30 = arith.constant dense<0.000000e+00> : vector<8x8xf32>
    %65 = tpu.matmul %60, %62, %cst_30 {dimension_numbers = #tpu.dot_dimension_numbers<[1], [1], [0], [0], [0, 0, 1, 0], [], []>} : vector<8x8xbf16>, vector<8x8xbf16>, vector<8x8xf32> -> vector<8x8xf32>
    %cst_31 = arith.constant 0.353553385 : f32
    %66 = vector.broadcast %cst_31 : f32 to vector<8x8xf32>
    %67 = arith.mulf %65, %66 : vector<8x8xf32>
    %68 = arith.addf %67, %31 : vector<8x8xf32>
    %cst_32 = arith.constant dense<0xFF800000> : vector<8xf32>
    %69 = vector.multi_reduction <maximumf>, %68, %cst_32 [1] : vector<8x8xf32> to vector<8xf32>
    %70 = vector.shape_cast %69 : vector<8xf32> to vector<8x1xf32>
    %71 = vector.broadcast %70 : vector<8x1xf32> to vector<8x8xf32>
    %72 = arith.subf %68, %71 : vector<8x8xf32>
    %73 = math.exp %72 : vector<8x8xf32>
    %cst_33 = arith.constant dense<0.000000e+00> : vector<8xf32>
    %74 = vector.multi_reduction <add>, %73, %cst_33 [1] : vector<8x8xf32> to vector<8xf32>
    %75 = vector.shape_cast %74 : vector<8xf32> to vector<8x1xf32>
    %76 = arith.truncf %73 : vector<8x8xf32> to vector<8x8xbf16>
    %cst_34 = arith.constant dense<0.000000e+00> : vector<8x8xf32>
    %77 = tpu.matmul %76, %64, %cst_34 {dimension_numbers = #tpu.dot_dimension_numbers<[1], [0], [0], [1], [0, 0, 1, 1], [], []>} : vector<8x8xbf16>, vector<8x8xbf16>, vector<8x8xf32> -> vector<8x8xf32>
    %78 = tpu.reciprocal %75 {approx = true} : vector<8x1xf32> -> vector<8x1xf32>
    %79 = vector.broadcast %78 : vector<8x1xf32> to vector<8x8xf32>
    %80 = arith.mulf %77, %79 : vector<8x8xf32>
    %81 = arith.truncf %80 : vector<8x8xf32> to vector<8x8xbf16>
    %c8 = arith.constant 8 : index
    %c0_35 = arith.constant 0 : index
    %82 = vector.load %arg8[%c8, %c0_35] : memref<32x32xbf16, #tpu.memory_space<vmem>>, vector<8x32xbf16>
    %cst_36 = arith.constant dense<0.000000e+00> : vector<8x32xf32>
    %83 = tpu.matmul %81, %82, %cst_36 {dimension_numbers = #tpu.dot_dimension_numbers<[1], [0], [0], [1], [0, 0, 1, 1], [], []>} : vector<8x8xbf16>, vector<8x32xbf16>, vector<8x32xf32> -> vector<8x32xf32>
    %84 = arith.addf %58, %83 : vector<8x32xf32>
    %85 = vector.extract_strided_slice %9 {offsets = [0, 16], sizes = [8, 8], strides = [1, 1]} : vector<8x32xf32> to vector<8x8xf32>
    %86 = arith.truncf %85 : vector<8x8xf32> to vector<8x8xbf16>
    %87 = vector.extract_strided_slice %16 {offsets = [0, 16], sizes = [8, 8], strides = [1, 1]} : vector<8x32xf32> to vector<8x8xf32>
    %88 = arith.truncf %87 : vector<8x8xf32> to vector<8x8xbf16>
    %89 = vector.extract_strided_slice %17 {offsets = [0, 16], sizes = [8, 8], strides = [1, 1]} : vector<8x32xf32> to vector<8x8xf32>
    %90 = arith.truncf %89 : vector<8x8xf32> to vector<8x8xbf16>
    %cst_37 = arith.constant dense<0.000000e+00> : vector<8x8xf32>
    %91 = tpu.matmul %86, %88, %cst_37 {dimension_numbers = #tpu.dot_dimension_numbers<[1], [1], [0], [0], [0, 0, 1, 0], [], []>} : vector<8x8xbf16>, vector<8x8xbf16>, vector<8x8xf32> -> vector<8x8xf32>
    %cst_38 = arith.constant 0.353553385 : f32
    %92 = vector.broadcast %cst_38 : f32 to vector<8x8xf32>
    %93 = arith.mulf %91, %92 : vector<8x8xf32>
    %94 = arith.addf %93, %31 : vector<8x8xf32>
    %cst_39 = arith.constant dense<0xFF800000> : vector<8xf32>
    %95 = vector.multi_reduction <maximumf>, %94, %cst_39 [1] : vector<8x8xf32> to vector<8xf32>
    %96 = vector.shape_cast %95 : vector<8xf32> to vector<8x1xf32>
    %97 = vector.broadcast %96 : vector<8x1xf32> to vector<8x8xf32>
    %98 = arith.subf %94, %97 : vector<8x8xf32>
    %99 = math.exp %98 : vector<8x8xf32>
    %cst_40 = arith.constant dense<0.000000e+00> : vector<8xf32>
    %100 = vector.multi_reduction <add>, %99, %cst_40 [1] : vector<8x8xf32> to vector<8xf32>
    %101 = vector.shape_cast %100 : vector<8xf32> to vector<8x1xf32>
    %102 = arith.truncf %99 : vector<8x8xf32> to vector<8x8xbf16>
    %cst_41 = arith.constant dense<0.000000e+00> : vector<8x8xf32>
    %103 = tpu.matmul %102, %90, %cst_41 {dimension_numbers = #tpu.dot_dimension_numbers<[1], [0], [0], [1], [0, 0, 1, 1], [], []>} : vector<8x8xbf16>, vector<8x8xbf16>, vector<8x8xf32> -> vector<8x8xf32>
    %104 = tpu.reciprocal %101 {approx = true} : vector<8x1xf32> -> vector<8x1xf32>
    %105 = vector.broadcast %104 : vector<8x1xf32> to vector<8x8xf32>
    %106 = arith.mulf %103, %105 : vector<8x8xf32>
    %107 = arith.truncf %106 : vector<8x8xf32> to vector<8x8xbf16>
    %c16 = arith.constant 16 : index
    %c0_42 = arith.constant 0 : index
    %108 = vector.load %arg8[%c16, %c0_42] : memref<32x32xbf16, #tpu.memory_space<vmem>>, vector<8x32xbf16>
    %cst_43 = arith.constant dense<0.000000e+00> : vector<8x32xf32>
    %109 = tpu.matmul %107, %108, %cst_43 {dimension_numbers = #tpu.dot_dimension_numbers<[1], [0], [0], [1], [0, 0, 1, 1], [], []>} : vector<8x8xbf16>, vector<8x32xbf16>, vector<8x32xf32> -> vector<8x32xf32>
    %110 = arith.addf %84, %109 : vector<8x32xf32>
    %111 = vector.extract_strided_slice %9 {offsets = [0, 24], sizes = [8, 8], strides = [1, 1]} : vector<8x32xf32> to vector<8x8xf32>
    %112 = arith.truncf %111 : vector<8x8xf32> to vector<8x8xbf16>
    %113 = vector.extract_strided_slice %16 {offsets = [0, 24], sizes = [8, 8], strides = [1, 1]} : vector<8x32xf32> to vector<8x8xf32>
    %114 = arith.truncf %113 : vector<8x8xf32> to vector<8x8xbf16>
    %115 = vector.extract_strided_slice %17 {offsets = [0, 24], sizes = [8, 8], strides = [1, 1]} : vector<8x32xf32> to vector<8x8xf32>
    %116 = arith.truncf %115 : vector<8x8xf32> to vector<8x8xbf16>
    %cst_44 = arith.constant dense<0.000000e+00> : vector<8x8xf32>
    %117 = tpu.matmul %112, %114, %cst_44 {dimension_numbers = #tpu.dot_dimension_numbers<[1], [1], [0], [0], [0, 0, 1, 0], [], []>} : vector<8x8xbf16>, vector<8x8xbf16>, vector<8x8xf32> -> vector<8x8xf32>
    %cst_45 = arith.constant 0.353553385 : f32
    %118 = vector.broadcast %cst_45 : f32 to vector<8x8xf32>
    %119 = arith.mulf %117, %118 : vector<8x8xf32>
    %120 = arith.addf %119, %31 : vector<8x8xf32>
    %cst_46 = arith.constant dense<0xFF800000> : vector<8xf32>
    %121 = vector.multi_reduction <maximumf>, %120, %cst_46 [1] : vector<8x8xf32> to vector<8xf32>
    %122 = vector.shape_cast %121 : vector<8xf32> to vector<8x1xf32>
    %123 = vector.broadcast %122 : vector<8x1xf32> to vector<8x8xf32>
    %124 = arith.subf %120, %123 : vector<8x8xf32>
    %125 = math.exp %124 : vector<8x8xf32>
    %cst_47 = arith.constant dense<0.000000e+00> : vector<8xf32>
    %126 = vector.multi_reduction <add>, %125, %cst_47 [1] : vector<8x8xf32> to vector<8xf32>
    %127 = vector.shape_cast %126 : vector<8xf32> to vector<8x1xf32>
    %128 = arith.truncf %125 : vector<8x8xf32> to vector<8x8xbf16>
    %cst_48 = arith.constant dense<0.000000e+00> : vector<8x8xf32>
    %129 = tpu.matmul %128, %116, %cst_48 {dimension_numbers = #tpu.dot_dimension_numbers<[1], [0], [0], [1], [0, 0, 1, 1], [], []>} : vector<8x8xbf16>, vector<8x8xbf16>, vector<8x8xf32> -> vector<8x8xf32>
    %130 = tpu.reciprocal %127 {approx = true} : vector<8x1xf32> -> vector<8x1xf32>
    %131 = vector.broadcast %130 : vector<8x1xf32> to vector<8x8xf32>
    %132 = arith.mulf %129, %131 : vector<8x8xf32>
    %133 = arith.truncf %132 : vector<8x8xf32> to vector<8x8xbf16>
    %c24 = arith.constant 24 : index
    %c0_49 = arith.constant 0 : index
    %134 = vector.load %arg8[%c24, %c0_49] : memref<32x32xbf16, #tpu.memory_space<vmem>>, vector<8x32xbf16>
    %cst_50 = arith.constant dense<0.000000e+00> : vector<8x32xf32>
    %135 = tpu.matmul %133, %134, %cst_50 {dimension_numbers = #tpu.dot_dimension_numbers<[1], [0], [0], [1], [0, 0, 1, 1], [], []>} : vector<8x8xbf16>, vector<8x32xbf16>, vector<8x32xf32> -> vector<8x32xf32>
    %136 = arith.addf %110, %135 : vector<8x32xf32>
    %137 = arith.addf %1, %136 : vector<8x32xf32>
    %c0_51 = arith.constant 0 : index
    %c0_52 = arith.constant 0 : index
    %138 = vector.load %arg9[%c0_51, %c0_52] : memref<1x32xf32, #tpu.memory_space<vmem>>, vector<1x32xf32>
    %139 = vector.broadcast %138 : vector<1x32xf32> to vector<8x32xf32>
    %140 = arith.addf %137, %139 : vector<8x32xf32>
    %cst_53 = arith.constant dense<0.000000e+00> : vector<8xf32>
    %141 = vector.multi_reduction <add>, %140, %cst_53 [1] : vector<8x32xf32> to vector<8xf32>
    %142 = vector.shape_cast %141 : vector<8xf32> to vector<8x1xf32>
    %cst_54 = arith.constant 3.200000e+01 : f32
    %143 = vector.broadcast %cst_54 : f32 to vector<8x1xf32>
    %144 = arith.divf %142, %143 : vector<8x1xf32>
    %145 = vector.broadcast %144 : vector<8x1xf32> to vector<8x32xf32>
    %146 = arith.subf %140, %145 : vector<8x32xf32>
    %147 = arith.mulf %146, %146 : vector<8x32xf32>
    %cst_55 = arith.constant dense<0.000000e+00> : vector<8xf32>
    %148 = vector.multi_reduction <add>, %147, %cst_55 [1] : vector<8x32xf32> to vector<8xf32>
    %149 = vector.shape_cast %148 : vector<8xf32> to vector<8x1xf32>
    %cst_56 = arith.constant 3.200000e+01 : f32
    %150 = vector.broadcast %cst_56 : f32 to vector<8x1xf32>
    %151 = arith.divf %149, %150 : vector<8x1xf32>
    %152 = vector.broadcast %144 : vector<8x1xf32> to vector<8x32xf32>
    %153 = arith.subf %140, %152 : vector<8x32xf32>
    %cst_57 = arith.constant 9.99999974E-6 : f32
    %154 = vector.broadcast %cst_57 : f32 to vector<8x1xf32>
    %155 = arith.addf %151, %154 : vector<8x1xf32>
    %156 = math.rsqrt %155 : vector<8x1xf32>
    %157 = vector.broadcast %156 : vector<8x1xf32> to vector<8x32xf32>
    %158 = arith.mulf %153, %157 : vector<8x32xf32>
    %c0_58 = arith.constant 0 : index
    %c0_59 = arith.constant 0 : index
    %159 = vector.load %arg10[%c0_58, %c0_59] : memref<1x32xf32, #tpu.memory_space<vmem>>, vector<1x32xf32>
    %160 = vector.broadcast %159 : vector<1x32xf32> to vector<8x32xf32>
    %161 = arith.mulf %158, %160 : vector<8x32xf32>
    %c0_60 = arith.constant 0 : index
    %c0_61 = arith.constant 0 : index
    %162 = vector.load %arg11[%c0_60, %c0_61] : memref<1x32xf32, #tpu.memory_space<vmem>>, vector<1x32xf32>
    %163 = vector.broadcast %162 : vector<1x32xf32> to vector<8x32xf32>
    %164 = arith.addf %161, %163 : vector<8x32xf32>
    %c0_62 = arith.constant 0 : index
    %c0_63 = arith.constant 0 : index
    %c0_64 = arith.constant 0 : index
    %165 = vector.load %arg12[%c0_62, %c0_63, %c0_64] : memref<1x8x32xf32, #tpu.memory_space<vmem>>, vector<1x8x32xf32>
    %166 = vector.shape_cast %165 : vector<1x8x32xf32> to vector<8x32xf32>
    %167 = vector.shape_cast %164 : vector<8x32xf32> to vector<1x8x32xf32>
    tpu.vector_store %arg12[%c0_62, %c0_63, %c0_64], %167 {strides = array<i32>} : memref<1x8x32xf32, #tpu.memory_space<vmem>>, vector<1x8x32xf32>,
    return
  }
  func.func @transform_0(%arg0: i32) -> (i32, i32, i32) {
    %c0_i32 = arith.constant 0 : i32
    %c0_i32_0 = arith.constant 0 : i32
    %c0_i32_1 = arith.constant 0 : i32
    return %arg0, %c0_i32, %c0_i32_0 : i32, i32, i32
  }
  func.func @transform_1(%arg0: i32) -> (i32, i32, i32) {
    %c0_i32 = arith.constant 0 : i32
    %c0_i32_0 = arith.constant 0 : i32
    %c0_i32_1 = arith.constant 0 : i32
    return %arg0, %c0_i32, %c0_i32_0 : i32, i32, i32
  }
  func.func @transform_2(%arg0: i32) -> (i32, i32, i32) {
    %c0_i32 = arith.constant 0 : i32
    %c0_i32_0 = arith.constant 0 : i32
    %c0_i32_1 = arith.constant 0 : i32
    return %arg0, %c0_i32, %c0_i32_0 : i32, i32, i32
  }
  func.func @transform_3(%arg0: i32) -> (i32, i32) {
    %c0_i32 = arith.constant 0 : i32
    %c0_i32_0 = arith.constant 0 : i32
    %c0_i32_1 = arith.constant 0 : i32
    return %c0_i32, %c0_i32_0 : i32, i32
  }
  func.func @transform_4(%arg0: i32) -> (i32, i32) {
    %c0_i32 = arith.constant 0 : i32
    %c0_i32_0 = arith.constant 0 : i32
    %c0_i32_1 = arith.constant 0 : i32
    return %c0_i32, %c0_i32_0 : i32, i32
  }
  func.func @transform_5(%arg0: i32) -> (i32, i32) {
    %c0_i32 = arith.constant 0 : i32
    %c0_i32_0 = arith.constant 0 : i32
    %c0_i32_1 = arith.constant 0 : i32
    return %c0_i32, %c0_i32_0 : i32, i32
  }
  func.func @transform_6(%arg0: i32) -> (i32, i32) {
    %c0_i32 = arith.constant 0 : i32
    %c0_i32_0 = arith.constant 0 : i32
    %c0_i32_1 = arith.constant 0 : i32
    return %c0_i32, %c0_i32_0 : i32, i32
  }
  func.func @transform_7(%arg0: i32) -> (i32, i32) {
    %c0_i32 = arith.constant 0 : i32
    %c0_i32_0 = arith.constant 0 : i32
    %c0_i32_1 = arith.constant 0 : i32
    return %c0_i32, %c0_i32_0 : i32, i32
  }
  func.func @transform_8(%arg0: i32) -> (i32, i32) {
    %c0_i32 = arith.constant 0 : i32
    %c0_i32_0 = arith.constant 0 : i32
    %c0_i32_1 = arith.constant 0 : i32
    return %c0_i32, %c0_i32_0 : i32, i32
  }
  func.func @transform_9(%arg0: i32) -> (i32, i32) {
    %c0_i32 = arith.constant 0 : i32
    %c0_i32_0 = arith.constant 0 : i32
    %c0_i32_1 = arith.constant 0 : i32
    return %c0_i32, %c0_i32_0 : i32, i32
  }
  func.func @transform_10(%arg0: i32) -> (i32, i32) {
    %c0_i32 = arith.constant 0 : i32
    %c0_i32_0 = arith.constant 0 : i32
    %c0_i32_1 = arith.constant 0 : i32
    return %c0_i32, %c0_i32_0 : i32, i32
  }
  func.func @transform_11(%arg0: i32) -> (i32, i32, i32) {
    %c0_i32 = arith.constant 0 : i32
    %c0_i32_0 = arith.constant 0 : i32
    %c0_i32_1 = arith.constant 0 : i32
    return %arg0, %c0_i32, %c0_i32_0 : i32, i32, i32
  }
}

</mosaic_0001>

<llo_original>
// kernel: transformer_forward.21
$region0: #{transformer_forward.21}
  #allocation0 [shape = 'u32[]', space=smem, size = 0x4, offset = 0x4, fixed_abs, tag = 'smem constant byte address 0x4 - core index']
  #allocation1 [shape = 'u32[144,128]{1,0:T(1,128)}', space=vmem, size = 0x12000, scoped, tag = 'internal scratch']
  %s0 = inlined_call_operand.vmem [shape: f32[16,32], index: 0, kind: input, shape index: {}]
  %s1 = inlined_call_operand.vmem [shape: bf16[32,128], index: 1, kind: input, shape index: {}]
  %s2 = inlined_call_operand.vmem [shape: f32[1,128], index: 2, kind: input, shape index: {}]
  %s3 = inlined_call_operand.vmem [shape: f32[16,128], index: 3, kind: output, shape index: {}]
  %s4 = sld [smem:[#allocation0]]
  $region22: #{transformer_forward.21} parent=0
    _
  %s6 = ssub.s32 1, %s4
  %s7 = scalar_select 0, %s6, %s4
  // Predicated region
  $region2: #{transformer_forward.21} parent=0 // pred_check
    _
  $region3: #{transformer_forward.21} parent=0 // pred_check_branch
    %9 = sbr.rel (0) target = $region5
  $region4: #{transformer_forward.21} parent=0 // pred_region
    _
  $region5: #{transformer_forward.21} parent=0 // pred_fallthru
    _
  // Predicated region
  $region6: #{transformer_forward.21} parent=0 // pred_check
    _
  $region7: #{transformer_forward.21} parent=0 // pred_check_branch
    %11 = sbr.rel (0) target = $region9
  $region8: #{transformer_forward.21} parent=0 // pred_region
    _
  $region9: #{transformer_forward.21} parent=0 // pred_fallthru
    _
  // Predicated region
  $region10: #{transformer_forward.21} parent=0 // pred_check
    _
  $region11: #{transformer_forward.21} parent=0 // pred_check_branch
    %13 = sbr.rel (0) target = $region13
  $region12: #{transformer_forward.21} parent=0 // pred_region
    _
  $region13: #{transformer_forward.21} parent=0 // pred_fallthru
    _
  %v15 = vld [vmem:[%s0] sm:$0xff]
  %v16 = vld [vmem:[%s0 + $0x8] sm:$0xff]
  %v17 = vpack.c.bf16 %v16, %v15
  %v18 = vld [vmem:[%s1] sm:$0xf]
  %v19 = vld [vmem:[%s1 + $0x4] sm:$0xf]
  %v20 = vld [vmem:[%s1 + $0x8] sm:$0xf]
  %v21 = vld [vmem:[%s1 + $0xc] sm:$0xf]
  %v22 = vld [vmem:[%s2] sm:$0x1]
  %v24 = vlaneseq
  %v25 = vshrl.u32 %v24, 7
  %v26 = vsub.s32 0, %v25
  %v27 = vrot.slane %v22, %v26
  %v33 = vunpack.c.l.b16 %v18
  %v34 = vunpack.c.l.b16 %v19
  %v35 = vunpack.c.l.b16 %v20
  %v36 = vunpack.c.l.b16 %v21
  %v37 = vpack.c.b16 %v34, %v33
  %v38 = vpack.c.b16 %v36, %v35
  %vm41 = vcmask 261120
  %v43 = vsel %vm41, %v17, 0
  %45 = vmatprep.subr.bf16.mxu0 0
  %46 = vmatpush1.bf16.msra.mxu0 %v37
  %47 = vmatprep.subr.bf16.mxu0 0
  %48 = vmatpush1.bf16.msra.mxu0 %v38
  %49 = vmatprep.subr.bf16.mxu0 0
  %50 = vmatpush1.bf16.msra.mxu0 0
  %51 = vmatprep.subr.bf16.mxu0 0
  %52 = vmatpush1.bf16.msra.mxu0 0
  %53 = vmatprep.subr.bf16.mxu0 0
  %54 = vmatpush1.bf16.msra.mxu0 0
  %55 = vmatprep.subr.bf16.mxu0 0
  %56 = vmatpush1.bf16.msra.mxu0 0
  %57 = vmatprep.subr.bf16.mxu0 0
  %58 = vmatpush1.bf16.msra.mxu0 0
  %59 = vmatprep.subr.bf16.mxu0 0
  %60 = vmatpush1.bf16.msra.mxu0 0
  %61 = vmatprep.subr.bf16.mxu0 0
  %62 = vmatpush1.bf16.msra.mxu0 0
  %63 = vmatprep.subr.bf16.mxu0 0
  %64 = vmatpush1.bf16.msra.mxu0 0
  %65 = vmatprep.subr.bf16.mxu0 0
  %66 = vmatpush1.bf16.msra.mxu0 0
  %67 = vmatprep.subr.bf16.mxu0 0
  %68 = vmatpush1.bf16.msra.mxu0 0
  %69 = vmatprep.subr.bf16.mxu0 0
  %70 = vmatpush1.bf16.msra.mxu0 0
  %71 = vmatprep.subr.bf16.mxu0 0
  %72 = vmatpush1.bf16.msra.mxu0 0
  %73 = vmatprep.subr.bf16.mxu0 0
  %74 = vmatpush1.bf16.msra.mxu0 0
  %75 = vmatprep.subr.bf16.mxu0 0
  %76 = vmatpush1.bf16.msra.mxu0 0
  %77 = vmatprep.mubr.bf16.mxu0 0
  %78 = vmatmul.mubr.bf16.gmra.mrb[0].mxu0 %v43
  %v79 = vpop.f32.mrb[0].mxu0
  %v80 = vadd.f32 %v27, %v79
  %v81 = vpop.f32.mrb[0].mxu0
  %v82 = vpop.f32.mrb[0].mxu0
  %v83 = vadd.f32 %v27, %v82
  %v84 = vpop.f32.mrb[0].mxu0
  %85 = vdwg.mxu0
  %86 = vst [vmem:[%s3] sm:$0xff] %v80
  %87 = vst [vmem:[%s3 + $0x8] sm:$0xff] %v83
  // Predicated region
  $region14: #{transformer_forward.21} parent=0 // pred_check
    _
  $region15: #{transformer_forward.21} parent=0 // pred_check_branch
    %89 = sbr.rel (0) target = $region17
  $region16: #{transformer_forward.21} parent=0 // pred_region
    _
  $region17: #{transformer_forward.21} parent=0 // pred_fallthru
    _
  // Predicated region
  $region18: #{transformer_forward.21} parent=0 // pred_check
    _
  $region19: #{transformer_forward.21} parent=0 // pred_check_branch
    %91 = sbr.rel (0) target = $region21
  $region20: #{transformer_forward.21} parent=0 // pred_region
    _
  $region21: #{transformer_forward.21} parent=0 // pred_fallthru
    _

// kernel: transformer_forward.12
$region0: #{transformer_forward.12}
  #allocation0 [shape = 'u32[]', space=smem, size = 0x4, offset = 0x4, fixed_abs, tag = 'smem constant byte address 0x4 - core index']
  #allocation1 [shape = 'u32[144,128]{1,0:T(1,128)}', space=vmem, size = 0x12000, scoped, tag = 'internal scratch']
  %s0 = inlined_call_operand.vmem [shape: f32[16,32], index: 0, kind: input, shape index: {}]
  %s1 = inlined_call_operand.vmem [shape: bf16[32,128], index: 1, kind: input, shape index: {}]
  %s2 = inlined_call_operand.vmem [shape: f32[1,128], index: 2, kind: input, shape index: {}]
  %s3 = inlined_call_operand.vmem [shape: bf16[128,32], index: 3, kind: input, shape index: {}]
  %s4 = inlined_call_operand.vmem [shape: f32[1,32], index: 4, kind: input, shape index: {}]
  %s5 = inlined_call_operand.vmem [shape: f32[1,32], index: 5, kind: input, shape index: {}]
  %s6 = inlined_call_operand.vmem [shape: f32[1,32], index: 6, kind: input, shape index: {}]
  %s7 = inlined_call_operand.vmem [shape: f32[16,32], index: 7, kind: output, shape index: {}]
  %s8 = sld [smem:[#allocation0]]
  $region38: #{transformer_forward.12} parent=0
    _
  %s10 = ssub.s32 1, %s8
  %s11 = scalar_select 0, %s10, %s8
  // Predicated region
  $region2: #{transformer_forward.12} parent=0 // pred_check
    _
  $region3: #{transformer_forward.12} parent=0 // pred_check_branch
    %13 = sbr.rel (0) target = $region5
  $region4: #{transformer_forward.12} parent=0 // pred_region
    _
  $region5: #{transformer_forward.12} parent=0 // pred_fallthru
    _
  // Predicated region
  $region6: #{transformer_forward.12} parent=0 // pred_check
    _
  $region7: #{transformer_forward.12} parent=0 // pred_check_branch
    %15 = sbr.rel (0) target = $region9
  $region8: #{transformer_forward.12} parent=0 // pred_region
    _
  $region9: #{transformer_forward.12} parent=0 // pred_fallthru
    _
  // Predicated region
  $region10: #{transformer_forward.12} parent=0 // pred_check
    _
  $region11: #{transformer_forward.12} parent=0 // pred_check_branch
    %17 = sbr.rel (0) target = $region13
  $region12: #{transformer_forward.12} parent=0 // pred_region
    _
  $region13: #{transformer_forward.12} parent=0 // pred_fallthru
    _
  // Predicated region
  $region14: #{transformer_forward.12} parent=0 // pred_check
    _
  $region15: #{transformer_forward.12} parent=0 // pred_check_branch
    %19 = sbr.rel (0) target = $region17
  $region16: #{transformer_forward.12} parent=0 // pred_region
    _
  $region17: #{transformer_forward.12} parent=0 // pred_fallthru
    _
  // Predicated region
  $region18: #{transformer_forward.12} parent=0 // pred_check
    _
  $region19: #{transformer_forward.12} parent=0 // pred_check_branch
    %21 = sbr.rel (0) target = $region21
  $region20: #{transformer_forward.12} parent=0 // pred_region
    _
  $region21: #{transformer_forward.12} parent=0 // pred_fallthru
    _
  // Predicated region
  $region22: #{transformer_forward.12} parent=0 // pred_check
    _
  $region23: #{transformer_forward.12} parent=0 // pred_check_branch
    %23 = sbr.rel (0) target = $region25
  $region24: #{transformer_forward.12} parent=0 // pred_region
    _
  $region25: #{transformer_forward.12} parent=0 // pred_fallthru
    _
  // Predicated region
  $region26: #{transformer_forward.12} parent=0 // pred_check
    _
  $region27: #{transformer_forward.12} parent=0 // pred_check_branch
    %25 = sbr.rel (0) target = $region29
  $region28: #{transformer_forward.12} parent=0 // pred_region
    _
  $region29: #{transformer_forward.12} parent=0 // pred_fallthru
    _
  %v27 = vld [vmem:[%s0] sm:$0xff]
  %v28 = vld [vmem:[%s0 + $0x8] sm:$0xff]
  %v29 = vpack.c.bf16 %v28, %v27
  %v30 = vld [vmem:[%s1] sm:$0xf]
  %v31 = vld [vmem:[%s1 + $0x4] sm:$0xf]
  %v32 = vld [vmem:[%s1 + $0x8] sm:$0xf]
  %v33 = vld [vmem:[%s1 + $0xc] sm:$0xf]
  %v34 = vld [vmem:[%s2] sm:$0x1]
  %v36 = vlaneseq
  %v37 = vshrl.u32 %v36, 7
  %v38 = vsub.s32 0, %v37
  %v39 = vrot.slane %v34, %v38
  %v45 = vunpack.c.l.b16 %v30
  %v46 = vunpack.c.l.b16 %v31
  %v47 = vunpack.c.l.b16 %v32
  %v48 = vunpack.c.l.b16 %v33
  %v49 = vpack.c.b16 %v46, %v45
  %v50 = vpack.c.b16 %v48, %v47
  %vm53 = vcmask 261120
  %v55 = vsel %vm53, %v29, 0
  %57 = vmatprep.subr.bf16.mxu0 0
  %58 = vmatpush1.bf16.msra.mxu0 %v49
  %59 = vmatprep.subr.bf16.mxu0 0
  %60 = vmatpush1.bf16.msra.mxu0 %v50
  %61 = vmatprep.subr.bf16.mxu0 0
  %62 = vmatpush1.bf16.msra.mxu0 0
  %63 = vmatprep.subr.bf16.mxu0 0
  %64 = vmatpush1.bf16.msra.mxu0 0
  %65 = vmatprep.subr.bf16.mxu0 0
  %66 = vmatpush1.bf16.msra.mxu0 0
  %67 = vmatprep.subr.bf16.mxu0 0
  %68 = vmatpush1.bf16.msra.mxu0 0
  %69 = vmatprep.subr.bf16.mxu0 0
  %70 = vmatpush1.bf16.msra.mxu0 0
  %71 = vmatprep.subr.bf16.mxu0 0
  %72 = vmatpush1.bf16.msra.mxu0 0
  %73 = vmatprep.subr.bf16.mxu0 0
  %74 = vmatpush1.bf16.msra.mxu0 0
  %75 = vmatprep.subr.bf16.mxu0 0
  %76 = vmatpush1.bf16.msra.mxu0 0
  %77 = vmatprep.subr.bf16.mxu0 0
  %78 = vmatpush1.bf16.msra.mxu0 0
  %79 = vmatprep.subr.bf16.mxu0 0
  %80 = vmatpush1.bf16.msra.mxu0 0
  %81 = vmatprep.subr.bf16.mxu0 0
  %82 = vmatpush1.bf16.msra.mxu0 0
  %83 = vmatprep.subr.bf16.mxu0 0
  %84 = vmatpush1.bf16.msra.mxu0 0
  %85 = vmatprep.subr.bf16.mxu0 0
  %86 = vmatpush1.bf16.msra.mxu0 0
  %87 = vmatprep.subr.bf16.mxu0 0
  %88 = vmatpush1.bf16.msra.mxu0 0
  %89 = vmatprep.mubr.bf16.mxu0 0
  %90 = vmatmul.mubr.bf16.gmra.mrb[0].mxu0 %v55
  %v91 = vpop.f32.mrb[0].mxu0
  %v92 = vadd.f32 %v39, %v91
  %v93 = vpop.f32.mrb[0].mxu0
  %v94 = vpop.f32.mrb[0].mxu0
  %v95 = vadd.f32 %v39, %v94
  %v96 = vpop.f32.mrb[0].mxu0
  %97 = vdwg.mxu0
  %v98 = vmax.f32 %v92, 0.0
  %v99 = vmax.f32 %v95, 0.0
  %v100 = vpack.c.bf16 %v99, %v98
  %v101 = vld [vmem:[%s3] sm:$0xf]
  %v102 = vld [vmem:[%s3 + $0x4] sm:$0xf]
  %v103 = vld [vmem:[%s3 + $0x8] sm:$0xf]
  %v104 = vld [vmem:[%s3 + $0xc] sm:$0xf]
  %v105 = vld [vmem:[%s3 + $0x10] sm:$0xf]
  %v106 = vld [vmem:[%s3 + $0x14] sm:$0xf]
  %v107 = vld [vmem:[%s3 + $0x18] sm:$0xf]
  %v108 = vld [vmem:[%s3 + $0x1c] sm:$0xf]
  %v109 = vld [vmem:[%s3 + $0x20] sm:$0xf]
  %v110 = vld [vmem:[%s3 + $0x24] sm:$0xf]
  %v111 = vld [vmem:[%s3 + $0x28] sm:$0xf]
  %v112 = vld [vmem:[%s3 + $0x2c] sm:$0xf]
  %v113 = vld [vmem:[%s3 + $0x30] sm:$0xf]
  %v114 = vld [vmem:[%s3 + $0x34] sm:$0xf]
  %v115 = vld [vmem:[%s3 + $0x38] sm:$0xf]
  %v116 = vld [vmem:[%s3 + $0x3c] sm:$0xf]
  %v117 = vld [vmem:[%s4] sm:$0x1]
  %v119 = vlaneseq
  %v120 = vshrl.u32 %v119, 7
  %v121 = vsub.s32 0, %v120
  %v122 = vrot.slane %v117, %v121
  %v140 = vunpack.c.l.b16 %v101
  %v141 = vunpack.c.l.b16 %v102
  %v142 = vunpack.c.l.b16 %v103
  %v143 = vunpack.c.l.b16 %v104
  %v144 = vunpack.c.l.b16 %v105
  %v145 = vunpack.c.l.b16 %v106
  %v146 = vunpack.c.l.b16 %v107
  %v147 = vunpack.c.l.b16 %v108
  %v148 = vunpack.c.l.b16 %v109
  %v149 = vunpack.c.l.b16 %v110
  %v150 = vunpack.c.l.b16 %v111
  %v151 = vunpack.c.l.b16 %v112
  %v152 = vunpack.c.l.b16 %v113
  %v153 = vunpack.c.l.b16 %v114
  %v154 = vunpack.c.l.b16 %v115
  %v155 = vunpack.c.l.b16 %v116
  %v156 = vpack.c.b16 %v141, %v140
  %v157 = vpack.c.b16 %v143, %v142
  %v158 = vpack.c.b16 %v145, %v144
  %v159 = vpack.c.b16 %v147, %v146
  %v160 = vpack.c.b16 %v149, %v148
  %v161 = vpack.c.b16 %v151, %v150
  %v162 = vpack.c.b16 %v153, %v152
  %v163 = vpack.c.b16 %v155, %v154
  %172 = vmatprep.subr.bf16.mxu0 0
  %173 = vmatpush1.bf16.msra.mxu0 %v156
  %174 = vmatprep.subr.bf16.mxu0 0
  %175 = vmatpush1.bf16.msra.mxu0 %v157
  %176 = vmatprep.subr.bf16.mxu0 0
  %177 = vmatpush1.bf16.msra.mxu0 %v158
  %178 = vmatprep.subr.bf16.mxu0 0
  %179 = vmatpush1.bf16.msra.mxu0 %v159
  %180 = vmatprep.subr.bf16.mxu0 0
  %181 = vmatpush1.bf16.msra.mxu0 %v160
  %182 = vmatprep.subr.bf16.mxu0 0
  %183 = vmatpush1.bf16.msra.mxu0 %v161
  %184 = vmatprep.subr.bf16.mxu0 0
  %185 = vmatpush1.bf16.msra.mxu0 %v162
  %186 = vmatprep.subr.bf16.mxu0 0
  %187 = vmatpush1.bf16.msra.mxu0 %v163
  %188 = vmatprep.subr.bf16.mxu0 0
  %189 = vmatpush1.bf16.msra.mxu0 0
  %190 = vmatprep.subr.bf16.mxu0 0
  %191 = vmatpush1.bf16.msra.mxu0 0
  %192 = vmatprep.subr.bf16.mxu0 0
  %193 = vmatpush1.bf16.msra.mxu0 0
  %194 = vmatprep.subr.bf16.mxu0 0
  %195 = vmatpush1.bf16.msra.mxu0 0
  %196 = vmatprep.subr.bf16.mxu0 0
  %197 = vmatpush1.bf16.msra.mxu0 0
  %198 = vmatprep.subr.bf16.mxu0 0
  %199 = vmatpush1.bf16.msra.mxu0 0
  %200 = vmatprep.subr.bf16.mxu0 0
  %201 = vmatpush1.bf16.msra.mxu0 0
  %202 = vmatprep.subr.bf16.mxu0 0
  %203 = vmatpush1.bf16.msra.mxu0 0
  %204 = vmatprep.mubr.bf16.mxu0 0
  %205 = vmatmul.mubr.bf16.gmra.mrb[0].mxu0 %v100
  %v206 = vpop.f32.mrb[0].mxu0
  %v207 = vadd.f32 %v122, %v206
  %v208 = vpop.f32.mrb[0].mxu0
  %v209 = vpop.f32.mrb[0].mxu0
  %v210 = vadd.f32 %v122, %v209
  %v211 = vpop.f32.mrb[0].mxu0
  %212 = vdwg.mxu0
  %v213 = vadd.f32 %v27, %v207
  %v214 = vadd.f32 %v28, %v210
  %v215 = vsel %vm53, %v213, 0.0
  %216 = vadd.xlane.f32.xlu0 %v215
  %v217 = vpop.xlane.xlu0 %216
  %v218 = vsel %vm53, %v214, 0.0
  %219 = vadd.xlane.f32.xlu0 %v218
  %v220 = vpop.xlane.xlu0 %219
  %v221 = vrcp.pop 32.0
  %v222 = vmul.f32 %v217, %v221
  %v223 = vmul.f32 %v220, %v221
  %v224 = vsub.f32 %v213, %v222
  %v225 = vsub.f32 %v214, %v223
  %v226 = vmul.f32 %v224, %v224
  %v227 = vmul.f32 %v225, %v225
  %v228 = vsel %vm53, %v226, 0.0
  %229 = vadd.xlane.f32.xlu0 %v228
  %v230 = vpop.xlane.xlu0 %229
  %v231 = vsel %vm53, %v227, 0.0
  %232 = vadd.xlane.f32.xlu0 %v231
  %v233 = vpop.xlane.xlu0 %232
  %v234 = vmul.f32 %v230, %v221
  %v235 = vmul.f32 %v233, %v221
  %v236 = vadd.f32 %v234, 1e-05
  %v237 = vadd.f32 %v235, 1e-05
  %v238 = vrsqrt.pop %v236
  %v239 = vrsqrt.pop %v237
  %v240 = vmul.f32 %v224, %v238
  %v241 = vmul.f32 %v225, %v239
  %v242 = vld [vmem:[%s5] sm:$0x1]
  %v244 = vlaneseq
  %v245 = vshrl.u32 %v244, 7
  %v246 = vsub.s32 0, %v245
  %v247 = vrot.slane %v242, %v246
  %v249 = vmul.f32 %v240, %v247
  %v250 = vmul.f32 %v241, %v247
  %v251 = vld [vmem:[%s6] sm:$0x1]
  %v253 = vlaneseq
  %v254 = vshrl.u32 %v253, 7
  %v255 = vsub.s32 0, %v254
  %v256 = vrot.slane %v251, %v255
  %v258 = vadd.f32 %v249, %v256
  %v259 = vadd.f32 %v250, %v256
  %260 = vst.msk [vmem:[%s7] sm:$0xff] %vm53, %v258
  %261 = vst.msk [vmem:[%s7 + $0x8] sm:$0xff] %vm53, %v259
  // Predicated region
  $region30: #{transformer_forward.12} parent=0 // pred_check
    _
  $region31: #{transformer_forward.12} parent=0 // pred_check_branch
    %263 = sbr.rel (0) target = $region33
  $region32: #{transformer_forward.12} parent=0 // pred_region
    _
  $region33: #{transformer_forward.12} parent=0 // pred_fallthru
    _
  // Predicated region
  $region34: #{transformer_forward.12} parent=0 // pred_check
    _
  $region35: #{transformer_forward.12} parent=0 // pred_check_branch
    %265 = sbr.rel (0) target = $region37
  $region36: #{transformer_forward.12} parent=0 // pred_region
    _
  $region37: #{transformer_forward.12} parent=0 // pred_fallthru
    _

// kernel: transformer_forward.11
$region0: #{transformer_forward.11}
  #allocation0 [shape = 'u32[]', space=smem, size = 0x4, offset = 0x4, fixed_abs, tag = 'smem constant byte address 0x4 - core index']
  #allocation1 [shape = 'u32[144,128]{1,0:T(1,128)}', space=vmem, size = 0x12000, scoped, tag = 'internal scratch']
  %s0 = inlined_call_operand.vmem [shape: f32[2,8,32], index: 0, kind: input, shape index: {}, may-alias: {0,1}]
  %s1 = inlined_call_operand.vmem [shape: f32[2,8,32], index: 1, kind: input, shape index: {}, may-alias: {0,1}]
  %s2 = inlined_call_operand.vmem [shape: f32[2,1,8], index: 2, kind: input, shape index: {}]
  %s3 = inlined_call_operand.vmem [shape: bf16[32,32], index: 3, kind: input, shape index: {}]
  %s4 = inlined_call_operand.vmem [shape: f32[1,32], index: 4, kind: input, shape index: {}]
  %s5 = inlined_call_operand.vmem [shape: bf16[32,64], index: 5, kind: input, shape index: {}]
  %s6 = inlined_call_operand.vmem [shape: f32[1,64], index: 6, kind: input, shape index: {}]
  %s7 = inlined_call_operand.vmem [shape: bf16[32,32], index: 7, kind: input, shape index: {}]
  %s8 = inlined_call_operand.vmem [shape: f32[1,32], index: 8, kind: input, shape index: {}]
  %s9 = inlined_call_operand.vmem [shape: f32[1,32], index: 9, kind: input, shape index: {}]
  %s10 = inlined_call_operand.vmem [shape: f32[1,32], index: 10, kind: input, shape index: {}]
  %s11 = inlined_call_operand.vmem [shape: f32[2,8,32], index: 11, kind: output, shape index: {}]
  %s12 = sld [smem:[#allocation0]]
  $region77: #{transformer_forward.11} parent=0
    _
  %s14 = ssub.s32 1, %s12
  %s15 = scalar_select 0, %s14, %s12
  loop: start=0, step=1, limit=4
  $region2: #{transformer_forward.11} parent=0 // loop_pre_header
    _
  $region3: #{transformer_forward.11} parent=0 // loop_header
    %s17 = sphi 0, %s21
    %p18 = scmp.ge.s32.totalorder %s17, 4
    %s27 = sphi 0, %s29
    %s30 = sphi 0, %s27
    %s31 = sphi 0, %s30
    %s47 = sphi 0, %s31
    %s53 = sphi 0, %s55
    %s56 = sphi 0, %s53
    %s57 = sphi 0, %s56
    %s73 = sphi 0, %s57
    %s79 = sphi 0, %s81
    %s82 = sphi 0, %s79
    %s83 = sphi 0, %s82
    %s99 = sphi 0, %s83
    %s103 = sphi 0, %s103
    %s105 = sphi 0, %s103
    %s106 = sphi 0, %s105
    %s120 = sphi 0, %s106
    %s124 = sphi 0, %s124
    %s126 = sphi 0, %s124
    %s127 = sphi 0, %s126
    %s141 = sphi 0, %s127
    %s145 = sphi 0, %s145
    %s147 = sphi 0, %s145
    %s148 = sphi 0, %s147
    %s162 = sphi 0, %s148
    %s166 = sphi 0, %s166
    %s168 = sphi 0, %s166
    %s169 = sphi 0, %s168
    %s183 = sphi 0, %s169
    %s187 = sphi 0, %s187
    %s189 = sphi 0, %s187
    %s190 = sphi 0, %s189
    %s204 = sphi 0, %s190
    %s208 = sphi 0, %s208
    %s210 = sphi 0, %s208
    %s211 = sphi 0, %s210
    %s225 = sphi 0, %s211
    %s229 = sphi 0, %s229
    %s231 = sphi 0, %s229
    %s232 = sphi 0, %s231
    %s246 = sphi 0, %s232
    %s250 = sphi 0, %s250
    %s252 = sphi 0, %s250
    %s253 = sphi 0, %s252
    %s267 = sphi 0, %s253
    %s273 = sphi 0, %s275
    %s276 = sphi 0, %s273
    %s277 = sphi 0, %s276
    %s293 = sphi 0, %s277
  $region4: #{transformer_forward.11} parent=0 // loop_header_branch
    %20 = sbr.rel (%p18) target = $region8
  $region5: #{transformer_forward.11} parent=0 // loop_body
    %s22 = ssub.s32 %s17, 1
    %s23 = ssub.s32 %s17, 2
    %s24 = sadd.s32 %s17, 1
    %s25 = ssub.s32 %s17, %s24
    %p26 = scmp.eq.s32.totalorder %s25, 0
    %s28 = sadd.s32 %s27, 1
    %s29 = scalar_select %p26, %s27, %s28
    %p32 = pneg %p26
    %p33 = scmp.eq.s32.totalorder %s17, 1
    %p34 = por %p32, %p33
    %p35 = scmp.ne.s32.totalorder %s27, %s30
    %p36 = scmp.eq.s32.totalorder %s17, 0
    %p37 = por %p35, %p36
    %p38 = scmp.ne.s32.totalorder %s27, %s30
    %p39 = scmp.eq.s32.totalorder %s22, 1
    %p40 = por %p38, %p39
    %p41 = scmp.ne.s32.totalorder %s30, %s31
    %p42 = scmp.eq.s32.totalorder %s22, 0
    %p43 = por %p41, %p42
    %p44 = scmp.ne.s32.totalorder %s30, %s31
    %p45 = scmp.eq.s32.totalorder %s23, 1
    %p46 = por %p44, %p45
    %p48 = scmp.ne.s32.totalorder %s31, %s47
    %p49 = scmp.eq.s32.totalorder %s23, 0
    %p50 = por %p48, %p49
    %s51 = ssub.s32 %s17, %s24
    %p52 = scmp.eq.s32.totalorder %s51, 0
    %s54 = sadd.s32 %s53, 1
    %s55 = scalar_select %p52, %s53, %s54
    %p58 = pneg %p52
    %p59 = scmp.eq.s32.totalorder %s17, 1
    %p60 = por %p58, %p59
    %p61 = scmp.ne.s32.totalorder %s53, %s56
    %p62 = scmp.eq.s32.totalorder %s17, 0
    %p63 = por %p61, %p62
    %p64 = scmp.ne.s32.totalorder %s53, %s56
    %p65 = scmp.eq.s32.totalorder %s22, 1
    %p66 = por %p64, %p65
    %p67 = scmp.ne.s32.totalorder %s56, %s57
    %p68 = scmp.eq.s32.totalorder %s22, 0
    %p69 = por %p67, %p68
    %p70 = scmp.ne.s32.totalorder %s56, %s57
    %p71 = scmp.eq.s32.totalorder %s23, 1
    %p72 = por %p70, %p71
    %p74 = scmp.ne.s32.totalorder %s57, %s73
    %p75 = scmp.eq.s32.totalorder %s23, 0
    %p76 = por %p74, %p75
    %s77 = ssub.s32 %s17, %s24
    %p78 = scmp.eq.s32.totalorder %s77, 0
    %s80 = sadd.s32 %s79, 1
    %s81 = scalar_select %p78, %s79, %s80
    %p84 = pneg %p78
    %p85 = scmp.eq.s32.totalorder %s17, 1
    %p86 = por %p84, %p85
    %p87 = scmp.ne.s32.totalorder %s79, %s82
    %p88 = scmp.eq.s32.totalorder %s17, 0
    %p89 = por %p87, %p88
    %p90 = scmp.ne.s32.totalorder %s79, %s82
    %p91 = scmp.eq.s32.totalorder %s22, 1
    %p92 = por %p90, %p91
    %p93 = scmp.ne.s32.totalorder %s82, %s83
    %p94 = scmp.eq.s32.totalorder %s22, 0
    %p95 = por %p93, %p94
    %p96 = scmp.ne.s32.totalorder %s82, %s83
    %p97 = scmp.eq.s32.totalorder %s23, 1
    %p98 = por %p96, %p97
    %p100 = scmp.ne.s32.totalorder %s83, %s99
    %p101 = scmp.eq.s32.totalorder %s23, 0
    %p102 = por %p100, %p101
    %s104 = sadd.s32 %s103, 1
    %p107 = scmp.eq.s32.totalorder %s17, 1
    %p108 = scmp.ne.s32.totalorder %s103, %s105
    %p109 = scmp.eq.s32.totalorder %s17, 0
    %p110 = por %p108, %p109
    %p111 = scmp.ne.s32.totalorder %s103, %s105
    %p112 = scmp.eq.s32.totalorder %s22, 1
    %p113 = por %p111, %p112
    %p114 = scmp.ne.s32.totalorder %s105, %s106
    %p115 = scmp.eq.s32.totalorder %s22, 0
    %p116 = por %p114, %p115
    %p117 = scmp.ne.s32.totalorder %s105, %s106
    %p118 = scmp.eq.s32.totalorder %s23, 1
    %p119 = por %p117, %p118
    %p121 = scmp.ne.s32.totalorder %s106, %s120
    %p122 = scmp.eq.s32.totalorder %s23, 0
    %p123 = por %p121, %p122
    %s125 = sadd.s32 %s124, 1
    %p128 = scmp.eq.s32.totalorder %s17, 1
    %p129 = scmp.ne.s32.totalorder %s124, %s126
    %p130 = scmp.eq.s32.totalorder %s17, 0
    %p131 = por %p129, %p130
    %p132 = scmp.ne.s32.totalorder %s124, %s126
    %p133 = scmp.eq.s32.totalorder %s22, 1
    %p134 = por %p132, %p133
    %p135 = scmp.ne.s32.totalorder %s126, %s127
    %p136 = scmp.eq.s32.totalorder %s22, 0
    %p137 = por %p135, %p136
    %p138 = scmp.ne.s32.totalorder %s126, %s127
    %p139 = scmp.eq.s32.totalorder %s23, 1
    %p140 = por %p138, %p139
    %p142 = scmp.ne.s32.totalorder %s127, %s141
    %p143 = scmp.eq.s32.totalorder %s23, 0
    %p144 = por %p142, %p143
    %s146 = sadd.s32 %s145, 1
    %p149 = scmp.eq.s32.totalorder %s17, 1
    %p150 = scmp.ne.s32.totalorder %s145, %s147
    %p151 = scmp.eq.s32.totalorder %s17, 0
    %p152 = por %p150, %p151
    %p153 = scmp.ne.s32.totalorder %s145, %s147
    %p154 = scmp.eq.s32.totalorder %s22, 1
    %p155 = por %p153, %p154
    %p156 = scmp.ne.s32.totalorder %s147, %s148
    %p157 = scmp.eq.s32.totalorder %s22, 0
    %p158 = por %p156, %p157
    %p159 = scmp.ne.s32.totalorder %s147, %s148
    %p160 = scmp.eq.s32.totalorder %s23, 1
    %p161 = por %p159, %p160
    %p163 = scmp.ne.s32.totalorder %s148, %s162
    %p164 = scmp.eq.s32.totalorder %s23, 0
    %p165 = por %p163, %p164
    %s167 = sadd.s32 %s166, 1
    %p170 = scmp.eq.s32.totalorder %s17, 1
    %p171 = scmp.ne.s32.totalorder %s166, %s168
    %p172 = scmp.eq.s32.totalorder %s17, 0
    %p173 = por %p171, %p172
    %p174 = scmp.ne.s32.totalorder %s166, %s168
    %p175 = scmp.eq.s32.totalorder %s22, 1
    %p176 = por %p174, %p175
    %p177 = scmp.ne.s32.totalorder %s168, %s169
    %p178 = scmp.eq.s32.totalorder %s22, 0
    %p179 = por %p177, %p178
    %p180 = scmp.ne.s32.totalorder %s168, %s169
    %p181 = scmp.eq.s32.totalorder %s23, 1
    %p182 = por %p180, %p181
    %p184 = scmp.ne.s32.totalorder %s169, %s183
    %p185 = scmp.eq.s32.totalorder %s23, 0
    %p186 = por %p184, %p185
    %s188 = sadd.s32 %s187, 1
    %p191 = scmp.eq.s32.totalorder %s17, 1
    %p192 = scmp.ne.s32.totalorder %s187, %s189
    %p193 = scmp.eq.s32.totalorder %s17, 0
    %p194 = por %p192, %p193
    %p195 = scmp.ne.s32.totalorder %s187, %s189
    %p196 = scmp.eq.s32.totalorder %s22, 1
    %p197 = por %p195, %p196
    %p198 = scmp.ne.s32.totalorder %s189, %s190
    %p199 = scmp.eq.s32.totalorder %s22, 0
    %p200 = por %p198, %p199
    %p201 = scmp.ne.s32.totalorder %s189, %s190
    %p202 = scmp.eq.s32.totalorder %s23, 1
    %p203 = por %p201, %p202
    %p205 = scmp.ne.s32.totalorder %s190, %s204
    %p206 = scmp.eq.s32.totalorder %s23, 0
    %p207 = por %p205, %p206
    %s209 = sadd.s32 %s208, 1
    %p212 = scmp.eq.s32.totalorder %s17, 1
    %p213 = scmp.ne.s32.totalorder %s208, %s210
    %p214 = scmp.eq.s32.totalorder %s17, 0
    %p215 = por %p213, %p214
    %p216 = scmp.ne.s32.totalorder %s208, %s210
    %p217 = scmp.eq.s32.totalorder %s22, 1
    %p218 = por %p216, %p217
    %p219 = scmp.ne.s32.totalorder %s210, %s211
    %p220 = scmp.eq.s32.totalorder %s22, 0
    %p221 = por %p219, %p220
    %p222 = scmp.ne.s32.totalorder %s210, %s211
    %p223 = scmp.eq.s32.totalorder %s23, 1
    %p224 = por %p222, %p223
    %p226 = scmp.ne.s32.totalorder %s211, %s225
    %p227 = scmp.eq.s32.totalorder %s23, 0
    %p228 = por %p226, %p227
    %s230 = sadd.s32 %s229, 1
    %p233 = scmp.eq.s32.totalorder %s17, 1
    %p234 = scmp.ne.s32.totalorder %s229, %s231
    %p235 = scmp.eq.s32.totalorder %s17, 0
    %p236 = por %p234, %p235
    %p237 = scmp.ne.s32.totalorder %s229, %s231
    %p238 = scmp.eq.s32.totalorder %s22, 1
    %p239 = por %p237, %p238
    %p240 = scmp.ne.s32.totalorder %s231, %s232
    %p241 = scmp.eq.s32.totalorder %s22, 0
    %p242 = por %p240, %p241
    %p243 = scmp.ne.s32.totalorder %s231, %s232
    %p244 = scmp.eq.s32.totalorder %s23, 1
    %p245 = por %p243, %p244
    %p247 = scmp.ne.s32.totalorder %s232, %s246
    %p248 = scmp.eq.s32.totalorder %s23, 0
    %p249 = por %p247, %p248
    %s251 = sadd.s32 %s250, 1
    %p254 = scmp.eq.s32.totalorder %s17, 1
    %p255 = scmp.ne.s32.totalorder %s250, %s252
    %p256 = scmp.eq.s32.totalorder %s17, 0
    %p257 = por %p255, %p256
    %p258 = scmp.ne.s32.totalorder %s250, %s252
    %p259 = scmp.eq.s32.totalorder %s22, 1
    %p260 = por %p258, %p259
    %p261 = scmp.ne.s32.totalorder %s252, %s253
    %p262 = scmp.eq.s32.totalorder %s22, 0
    %p263 = por %p261, %p262
    %p264 = scmp.ne.s32.totalorder %s252, %s253
    %p265 = scmp.eq.s32.totalorder %s23, 1
    %p266 = por %p264, %p265
    %p268 = scmp.ne.s32.totalorder %s253, %s267
    %p269 = scmp.eq.s32.totalorder %s23, 0
    %p270 = por %p268, %p269
    %s271 = ssub.s32 %s17, %s24
    %p272 = scmp.eq.s32.totalorder %s271, 0
    %s274 = sadd.s32 %s273, 1
    %s275 = scalar_select %p272, %s273, %s274
    %p278 = pneg %p272
    %p279 = scmp.eq.s32.totalorder %s17, 1
    %p280 = por %p278, %p279
    %p281 = scmp.ne.s32.totalorder %s273, %s276
    %p282 = scmp.eq.s32.totalorder %s17, 0
    %p283 = por %p281, %p282
    %p284 = scmp.ne.s32.totalorder %s273, %s276
    %p285 = scmp.eq.s32.totalorder %s22, 1
    %p286 = por %p284, %p285
    %p287 = scmp.ne.s32.totalorder %s276, %s277
    %p288 = scmp.eq.s32.totalorder %s22, 0
    %p289 = por %p287, %p288
    %p290 = scmp.ne.s32.totalorder %s276, %s277
    %p291 = scmp.eq.s32.totalorder %s23, 1
    %p292 = por %p290, %p291
    %p294 = scmp.ne.s32.totalorder %s277, %s293
    %p295 = scmp.eq.s32.totalorder %s23, 0
    %p296 = por %p294, %p295
    %p297 = scmp.le.s32.totalorder 1, %s17
    %p298 = scmp.lt.s32.totalorder %s17, 3
    %p299 = pnand %p297, %p298
    %p300 = pneg %p299
    // Predicated region
    $region9: #{transformer_forward.11} parent=5 // pred_check
      _
    $region10: #{transformer_forward.11} parent=5 // pred_check_branch
      %302 = sbr.rel (%p299) target = $region12
    $region11: #{transformer_forward.11} parent=5 // pred_region
      %s303 = ssub.s32 %s17, 1
      // Predicated region
      $region13: #{transformer_forward.11} parent=11 // pred_check
        %p304 = pneg %p116
      $region14: #{transformer_forward.11} parent=11 // pred_check_branch
        %306 = sbr.rel (%p304) target = $region16
      $region15: #{transformer_forward.11} parent=11 // pred_region
        _
      $region16: #{transformer_forward.11} parent=11 // pred_fallthru
        _
      // Predicated region
      $region17: #{transformer_forward.11} parent=11 // pred_check
        %p307 = pneg %p137
      $region18: #{transformer_forward.11} parent=11 // pred_check_branch
        %309 = sbr.rel (%p307) target = $region20
      $region19: #{transformer_forward.11} parent=11 // pred_region
        _
      $region20: #{transformer_forward.11} parent=11 // pred_fallthru
        _
      // Predicated region
      $region21: #{transformer_forward.11} parent=11 // pred_check
        %p310 = pneg %p158
      $region22: #{transformer_forward.11} parent=11 // pred_check_branch
        %312 = sbr.rel (%p310) target = $region24
      $region23: #{transformer_forward.11} parent=11 // pred_region
        _
      $region24: #{transformer_forward.11} parent=11 // pred_fallthru
        _
      // Predicated region
      $region25: #{transformer_forward.11} parent=11 // pred_check
        %p313 = pneg %p179
      $region26: #{transformer_forward.11} parent=11 // pred_check_branch
        %315 = sbr.rel (%p313) target = $region28
      $region27: #{transformer_forward.11} parent=11 // pred_region
        _
      $region28: #{transformer_forward.11} parent=11 // pred_fallthru
        _
      // Predicated region
      $region29: #{transformer_forward.11} parent=11 // pred_check
        %p316 = pneg %p200
      $region30: #{transformer_forward.11} parent=11 // pred_check_branch
        %318 = sbr.rel (%p316) target = $region32
      $region31: #{transformer_forward.11} parent=11 // pred_region
        _
      $region32: #{transformer_forward.11} parent=11 // pred_fallthru
        _
      // Predicated region
      $region33: #{transformer_forward.11} parent=11 // pred_check
        %p319 = pneg %p221
      $region34: #{transformer_forward.11} parent=11 // pred_check_branch
        %321 = sbr.rel (%p319) target = $region36
      $region35: #{transformer_forward.11} parent=11 // pred_region
        _
      $region36: #{transformer_forward.11} parent=11 // pred_fallthru
        _
      // Predicated region
      $region37: #{transformer_forward.11} parent=11 // pred_check
        %p322 = pneg %p242
      $region38: #{transformer_forward.11} parent=11 // pred_check_branch
        %324 = sbr.rel (%p322) target = $region40
      $region39: #{transformer_forward.11} parent=11 // pred_region
        _
      $region40: #{transformer_forward.11} parent=11 // pred_fallthru
        _
      // Predicated region
      $region41: #{transformer_forward.11} parent=11 // pred_check
        %p325 = pneg %p263
      $region42: #{transformer_forward.11} parent=11 // pred_check_branch
        %327 = sbr.rel (%p325) target = $region44
      $region43: #{transformer_forward.11} parent=11 // pred_region
        _
      $region44: #{transformer_forward.11} parent=11 // pred_fallthru
        _
    $region12: #{transformer_forward.11} parent=5 // pred_fallthru
      _
    %p328 = scmp.lt.s32.totalorder %s17, 2
    // Predicated region
    $region45: #{transformer_forward.11} parent=5 // pred_check
      %p329 = pneg %p328
    $region46: #{transformer_forward.11} parent=5 // pred_check_branch
      %331 = sbr.rel (%p329) target = $region48
    $region47: #{transformer_forward.11} parent=5 // pred_region
      // Predicated region
      $region49: #{transformer_forward.11} parent=47 // pred_check
        %p332 = pneg %p37
      $region50: #{transformer_forward.11} parent=47 // pred_check_branch
        %334 = sbr.rel (%p332) target = $region52
      $region51: #{transformer_forward.11} parent=47 // pred_region
        %p335 = scmp.lt.s32.totalorder %s17, 1
        %s336 = scalar_select %p335, %s17, 1
        %s337 = smul.addr %s336, 8
        %s338 = scalar_lea.vmem %s0, %s337
      $region52: #{transformer_forward.11} parent=47 // pred_fallthru
        _
      // Predicated region
      $region53: #{transformer_forward.11} parent=47 // pred_check
        %p339 = pneg %p63
      $region54: #{transformer_forward.11} parent=47 // pred_check_branch
        %341 = sbr.rel (%p339) target = $region56
      $region55: #{transformer_forward.11} parent=47 // pred_region
        %p342 = scmp.lt.s32.totalorder %s17, 1
        %s343 = scalar_select %p342, %s17, 1
        %s344 = smul.addr %s343, 8
        %s345 = scalar_lea.vmem %s1, %s344
      $region56: #{transformer_forward.11} parent=47 // pred_fallthru
        _
      // Predicated region
      $region57: #{transformer_forward.11} parent=47 // pred_check
        %p346 = pneg %p89
      $region58: #{transformer_forward.11} parent=47 // pred_check_branch
        %348 = sbr.rel (%p346) target = $region60
      $region59: #{transformer_forward.11} parent=47 // pred_region
        %p349 = scmp.lt.s32.totalorder %s17, 1
        %s350 = scalar_select %p349, %s17, 1
        %s351 = scalar_lea.vmem %s2, %s350
      $region60: #{transformer_forward.11} parent=47 // pred_fallthru
        _
    $region48: #{transformer_forward.11} parent=5 // pred_fallthru
      _
    %p352 = scmp.le.s32.totalorder 1, %s17
    %p353 = scmp.lt.s32.totalorder %s17, 3
    %p354 = pnand %p352, %p353
    %p355 = pneg %p354
    // Predicated region
    $region61: #{transformer_forward.11} parent=5 // pred_check
      _
    $region62: #{transformer_forward.11} parent=5 // pred_check_branch
      %357 = sbr.rel (%p354) target = $region64
    $region63: #{transformer_forward.11} parent=5 // pred_region
      %s358 = ssub.s32 %s17, 1
      %p359 = scmp.lt.s32.totalorder %s22, 1
      %s360 = scalar_select %p359, %s22, 1
      %s361 = smul.addr %s360, 8
      %s362 = scalar_lea.vmem %s0, %s361
      %p363 = pneg %p43
      %p364 = pneg %p40
      %p365 = scmp.lt.s32.totalorder %s22, 1
      %s366 = scalar_select %p365, %s22, 1
      %s367 = smul.addr %s366, 8
      %s368 = scalar_lea.vmem %s1, %s367
      %p369 = pneg %p69
      %p370 = pneg %p66
      %p371 = scmp.lt.s32.totalorder %s22, 1
      %s372 = scalar_select %p371, %s22, 1
      %s373 = scalar_lea.vmem %s2, %s372
      %p374 = pneg %p95
      %p375 = pneg %p92
      %p376 = pneg %p116
      %p377 = pneg %p113
      %p378 = pneg %p137
      %p379 = pneg %p134
      %p380 = pneg %p158
      %p381 = pneg %p155
      %p382 = pneg %p179
      %p383 = pneg %p176
      %p384 = pneg %p200
      %p385 = pneg %p197
      %p386 = pneg %p221
      %p387 = pneg %p218
      %p388 = pneg %p242
      %p389 = pneg %p239
      %p390 = pneg %p263
      %p391 = pneg %p260
      %p392 = pneg %p289
      %p393 = pneg %p286
      %p394 = scmp.lt.s32.totalorder %s22, 1
      %s395 = scalar_select %p394, %s22, 1
      %s396 = smul.addr %s395, 8
      %s397 = scalar_lea.vmem %s11, %s396
      %p398 = scmp.lt.s32.totalorder %s22, 1
      %s399 = scalar_select %p398, %s22, 1
      %s400 = smul.addr %s399, 8
      %s401 = scalar_lea.vmem %s0, %s400
      %p402 = scmp.lt.s32.totalorder %s22, 1
      %s403 = scalar_select %p402, %s22, 1
      %s404 = smul.addr %s403, 8
      %s405 = scalar_lea.vmem %s1, %s404
      %p406 = scmp.lt.s32.totalorder %s22, 1
      %s407 = scalar_select %p406, %s22, 1
      %s408 = scalar_lea.vmem %s2, %s407
      %p409 = scmp.lt.s32.totalorder %s22, 1
      %s410 = scalar_select %p409, %s22, 1
      %s411 = smul.addr %s410, 8
      %s412 = scalar_lea.vmem %s11, %s411
      %v414 = vld [vmem:[%s401] sm:$0xff]
      %v415 = vld [vmem:[%s405] sm:$0xff]
      %v416 = vpack.c.bf16 %v414, %v414
      %v417 = vld [vmem:[%s3] sm:$0xf]
      %v418 = vld [vmem:[%s3 + $0x4] sm:$0xf]
      %v419 = vld [vmem:[%s3 + $0x8] sm:$0xf]
      %v420 = vld [vmem:[%s3 + $0xc] sm:$0xf]
      %v421 = vld [vmem:[%s4] sm:$0x1]
      %v423 = vlaneseq
      %v424 = vshrl.u32 %v423, 7
      %v425 = vsub.s32 0, %v424
      %v426 = vrot.slane %v421, %v425
      %v432 = vunpack.c.l.b16 %v417
      %v433 = vunpack.c.l.b16 %v418
      %v434 = vunpack.c.l.b16 %v419
      %v435 = vunpack.c.l.b16 %v420
      %v436 = vpack.c.b16 %v433, %v432
      %v437 = vpack.c.b16 %v435, %v434
      %vm440 = vcmask 261120
      %v442 = vsel %vm440, %v416, 0
      %444 = vmatprep.subr.bf16.mxu0 0
      %445 = vmatpush1.bf16.msra.mxu0 %v436
      %446 = vmatprep.subr.bf16.mxu0 0
      %447 = vmatpush1.bf16.msra.mxu0 %v437
      %448 = vmatprep.subr.bf16.mxu0 0
      %449 = vmatpush1.bf16.msra.mxu0 0
      %450 = vmatprep.subr.bf16.mxu0 0
      %451 = vmatpush1.bf16.msra.mxu0 0
      %452 = vmatprep.subr.bf16.mxu0 0
      %453 = vmatpush1.bf16.msra.mxu0 0
      %454 = vmatprep.subr.bf16.mxu0 0
      %455 = vmatpush1.bf16.msra.mxu0 0
      %456 = vmatprep.subr.bf16.mxu0 0
      %457 = vmatpush1.bf16.msra.mxu0 0
      %458 = vmatprep.subr.bf16.mxu0 0
      %459 = vmatpush1.bf16.msra.mxu0 0
      %460 = vmatprep.subr.bf16.mxu0 0
      %461 = vmatpush1.bf16.msra.mxu0 0
      %462 = vmatprep.subr.bf16.mxu0 0
      %463 = vmatpush1.bf16.msra.mxu0 0
      %464 = vmatprep.subr.bf16.mxu0 0
      %465 = vmatpush1.bf16.msra.mxu0 0
      %466 = vmatprep.subr.bf16.mxu0 0
      %467 = vmatpush1.bf16.msra.mxu0 0
      %468 = vmatprep.subr.bf16.mxu0 0
      %469 = vmatpush1.bf16.msra.mxu0 0
      %470 = vmatprep.subr.bf16.mxu0 0
      %471 = vmatpush1.bf16.msra.mxu0 0
      %472 = vmatprep.subr.bf16.mxu0 0
      %473 = vmatpush1.bf16.msra.mxu0 0
      %474 = vmatprep.subr.bf16.mxu0 0
      %475 = vmatpush1.bf16.msra.mxu0 0
      %476 = vmatprep.mubr.bf16.mxu0 0
      %477 = vmatmul.mubr.bf16.gmra.mrb[0].mxu0 %v442
      %v478 = vpop.f32.mrb[0].mxu0
      %v479 = vadd.f32 %v426, %v478
      %v480 = vpop.f32.mrb[0].mxu0
      %v481 = vpop.f32.mrb[0].mxu0
      %v482 = vpop.f32.mrb[0].mxu0
      %483 = vdwg.mxu0
      %v484 = vpack.c.bf16 %v415, %v415
      %v485 = vld [vmem:[%s5] sm:$0xf]
      %v486 = vld [vmem:[%s5 + $0x4] sm:$0xf]
      %v487 = vld [vmem:[%s5 + $0x8] sm:$0xf]
      %v488 = vld [vmem:[%s5 + $0xc] sm:$0xf]
      %v489 = vld [vmem:[%s6] sm:$0x1]
      %v491 = vlaneseq
      %v492 = vshrl.u32 %v491, 7
      %v493 = vsub.s32 0, %v492
      %v494 = vrot.slane %v489, %v493
      %v500 = vunpack.c.l.b16 %v485
      %v501 = vunpack.c.l.b16 %v486
      %v502 = vunpack.c.l.b16 %v487
      %v503 = vunpack.c.l.b16 %v488
      %v504 = vpack.c.b16 %v501, %v500
      %v505 = vpack.c.b16 %v503, %v502
      %v509 = vsel %vm440, %v484, 0
      %511 = vmatprep.subr.bf16.mxu0 0
      %512 = vmatpush1.bf16.msra.mxu0 %v504
      %513 = vmatprep.subr.bf16.mxu0 0
      %514 = vmatpush1.bf16.msra.mxu0 %v505
      %515 = vmatprep.subr.bf16.mxu0 0
      %516 = vmatpush1.bf16.msra.mxu0 0
      %517 = vmatprep.subr.bf16.mxu0 0
      %518 = vmatpush1.bf16.msra.mxu0 0
      %519 = vmatprep.subr.bf16.mxu0 0
      %520 = vmatpush1.bf16.msra.mxu0 0
      %521 = vmatprep.subr.bf16.mxu0 0
      %522 = vmatpush1.bf16.msra.mxu0 0
      %523 = vmatprep.subr.bf16.mxu0 0
      %524 = vmatpush1.bf16.msra.mxu0 0
      %525 = vmatprep.subr.bf16.mxu0 0
      %526 = vmatpush1.bf16.msra.mxu0 0
      %527 = vmatprep.subr.bf16.mxu0 0
      %528 = vmatpush1.bf16.msra.mxu0 0
      %529 = vmatprep.subr.bf16.mxu0 0
      %530 = vmatpush1.bf16.msra.mxu0 0
      %531 = vmatprep.subr.bf16.mxu0 0
      %532 = vmatpush1.bf16.msra.mxu0 0
      %533 = vmatprep.subr.bf16.mxu0 0
      %534 = vmatpush1.bf16.msra.mxu0 0
      %535 = vmatprep.subr.bf16.mxu0 0
      %536 = vmatpush1.bf16.msra.mxu0 0
      %537 = vmatprep.subr.bf16.mxu0 0
      %538 = vmatpush1.bf16.msra.mxu0 0
      %539 = vmatprep.subr.bf16.mxu0 0
      %540 = vmatpush1.bf16.msra.mxu0 0
      %541 = vmatprep.subr.bf16.mxu0 0
      %542 = vmatpush1.bf16.msra.mxu0 0
      %543 = vmatprep.mubr.bf16.mxu0 0
      %544 = vmatmul.mubr.bf16.gmra.mrb[0].mxu0 %v509
      %v545 = vpop.f32.mrb[0].mxu0
      %v546 = vadd.f32 %v494, %v545
      %v547 = vpop.f32.mrb[0].mxu0
      %v548 = vpop.f32.mrb[0].mxu0
      %v549 = vpop.f32.mrb[0].mxu0
      %550 = vdwg.mxu0
      %v551 = vld [vmem:[%s408] sm:$0x1]
      %vm552 = vcmp.gt.f32.partialorder %v551, 0.0
      %v553 = vsel %vm552, 0.0, -1e+09
      %v555 = vlaneseq
      %v556 = vshrl.u32 %v555, 7
      %v557 = vsub.s32 0, %v556
      %v558 = vrot.slane %v553, %v557
      %v560 = vpack.c.bf16 %v479, %v479
      %v561 = vpack.c.bf16 %v546, %v546
      %vm562 = vcmask 64512
      %v564 = vsel %vm562, %v560, 0
      %v567 = vsel %vm562, %v561, 0
      %569 = vmatprep.subr.bf16.mxu0 0
      %570 = vmatpush1.bf16.xpose.msra.mxu0 %v567
      %571 = vmatprep.subr.bf16.mxu0 0
      %572 = vmatpush1.bf16.xpose.msra.mxu0 0
      %573 = vmatprep.subr.bf16.mxu0 0
      %574 = vmatpush1.bf16.xpose.msra.mxu0 0
      %575 = vmatprep.subr.bf16.mxu0 0
      %576 = vmatpush1.bf16.xpose.msra.mxu0 0
      %577 = vmatprep.subr.bf16.mxu0 0
      %578 = vmatpush1.bf16.xpose.msra.mxu0 0
      %579 = vmatprep.subr.bf16.mxu0 0
      %580 = vmatpush1.bf16.xpose.msra.mxu0 0
      %581 = vmatprep.subr.bf16.mxu0 0
      %582 = vmatpush1.bf16.xpose.msra.mxu0 0
      %583 = vmatprep.subr.bf16.mxu0 0
      %584 = vmatpush1.bf16.xpose.msra.mxu0 0
      %585 = vmatprep.subr.bf16.mxu0 0
      %586 = vmatpush1.bf16.xpose.msra.mxu0 0
      %587 = vmatprep.subr.bf16.mxu0 0
      %588 = vmatpush1.bf16.xpose.msra.mxu0 0
      %589 = vmatprep.subr.bf16.mxu0 0
      %590 = vmatpush1.bf16.xpose.msra.mxu0 0
      %591 = vmatprep.subr.bf16.mxu0 0
      %592 = vmatpush1.bf16.xpose.msra.mxu0 0
      %593 = vmatprep.subr.bf16.mxu0 0
      %594 = vmatpush1.bf16.xpose.msra.mxu0 0
      %595 = vmatprep.subr.bf16.mxu0 0
      %596 = vmatpush1.bf16.xpose.msra.mxu0 0
      %597 = vmatprep.subr.bf16.mxu0 0
      %598 = vmatpush1.bf16.xpose.msra.mxu0 0
      %599 = vmatprep.subr.bf16.mxu0 0
      %600 = vmatpush1.bf16.xpose.msra.mxu0 0
      %601 = vmatprep.mubr.bf16.mxu0 0
      %602 = vmatmul.mubr.bf16.gmra.mrb[0].mxu0 %v564
      %v603 = vpop.f32.mrb[0].mxu0
      %v604 = vadd.f32 0.0, %v603
      %v605 = vpop.f32.mrb[0].mxu0
      %v606 = vpop.f32.mrb[0].mxu0
      %v607 = vpop.f32.mrb[0].mxu0
      %608 = vdwg.mxu0
      %v609 = vmul.f32 %v604, 0.35355338
      %v610 = vadd.f32 %v609, %v558
      %v611 = vsel %vm562, %v610, -inf
      %612 = vmax.xlane.f32.xlu0 %v611
      %v613 = vpop.xlane.xlu0 %612
      %v614 = vsub.f32 %v610, %v613
      %v615 = vmul.f32 %v614, 1.442695
      %v616 = vpow.pop %v615
      %v617 = vsel %vm562, %v616, 0.0
      %618 = vadd.xlane.f32.xlu0 %v617
      %v619 = vpop.xlane.xlu0 %618
      %v620 = vpack.c.bf16 %v616, %v616
      %622 = vrot.lane.b32.xlu0 %v561, 96
      %v623 = vpop.permute.xlu0 %622
      %v625 = vsel %vm562, %v620, 0
      %vm627 = vcmask 1043456
      %v629 = vsel %vm627, %v623, 0
      %631 = vmatprep.subr.bf16.mxu0 0
      %632 = vmatpush1.bf16.msra.mxu0 %v629
      %633 = vmatprep.subr.bf16.mxu0 0
      %634 = vmatpush1.bf16.msra.mxu0 0
      %635 = vmatprep.subr.bf16.mxu0 0
      %636 = vmatpush1.bf16.msra.mxu0 0
      %637 = vmatprep.subr.bf16.mxu0 0
      %638 = vmatpush1.bf16.msra.mxu0 0
      %639 = vmatprep.subr.bf16.mxu0 0
      %640 = vmatpush1.bf16.msra.mxu0 0
      %641 = vmatprep.subr.bf16.mxu0 0
      %642 = vmatpush1.bf16.msra.mxu0 0
      %643 = vmatprep.subr.bf16.mxu0 0
      %644 = vmatpush1.bf16.msra.mxu0 0
      %645 = vmatprep.subr.bf16.mxu0 0
      %646 = vmatpush1.bf16.msra.mxu0 0
      %647 = vmatprep.subr.bf16.mxu0 0
      %648 = vmatpush1.bf16.msra.mxu0 0
      %649 = vmatprep.subr.bf16.mxu0 0
      %650 = vmatpush1.bf16.msra.mxu0 0
      %651 = vmatprep.subr.bf16.mxu0 0
      %652 = vmatpush1.bf16.msra.mxu0 0
      %653 = vmatprep.subr.bf16.mxu0 0
      %654 = vmatpush1.bf16.msra.mxu0 0
      %655 = vmatprep.subr.bf16.mxu0 0
      %656 = vmatpush1.bf16.msra.mxu0 0
      %657 = vmatprep.subr.bf16.mxu0 0
      %658 = vmatpush1.bf16.msra.mxu0 0
      %659 = vmatprep.subr.bf16.mxu0 0
      %660 = vmatpush1.bf16.msra.mxu0 0
      %661 = vmatprep.subr.bf16.mxu0 0
      %662 = vmatpush1.bf16.msra.mxu0 0
      %663 = vmatprep.mubr.bf16.mxu0 0
      %664 = vmatmul.mubr.bf16.gmra.mrb[0].mxu0 %v625
      %v665 = vpop.f32.mrb[0].mxu0
      %v666 = vadd.f32 0.0, %v665
      %v667 = vpop.f32.mrb[0].mxu0
      %v668 = vpop.f32.mrb[0].mxu0
      %v669 = vpop.f32.mrb[0].mxu0
      %670 = vdwg.mxu0
      %v671 = vrcp.pop %v619
      %v672 = vmul.f32 %v666, %v671
      %v673 = vpack.c.bf16 %v672, %v672
      %v674 = vld [vmem:[%s7] sm:$0xf]
      %676 = vrot.lane.b32.xlu0 %v560, 120
      %v677 = vpop.permute.xlu0 %676
      %678 = vrot.lane.b32.xlu0 %v561, 120
      %v679 = vpop.permute.xlu0 %678
      %v681 = vsel %vm562, %v677, 0
      %v684 = vsel %vm562, %v679, 0
      %686 = vmatprep.subr.bf16.mxu0 0
      %687 = vmatpush1.bf16.xpose.msra.mxu0 %v684
      %688 = vmatprep.subr.bf16.mxu0 0
      %689 = vmatpush1.bf16.xpose.msra.mxu0 0
      %690 = vmatprep.subr.bf16.mxu0 0
      %691 = vmatpush1.bf16.xpose.msra.mxu0 0
      %692 = vmatprep.subr.bf16.mxu0 0
      %693 = vmatpush1.bf16.xpose.msra.mxu0 0
      %694 = vmatprep.subr.bf16.mxu0 0
      %695 = vmatpush1.bf16.xpose.msra.mxu0 0
      %696 = vmatprep.subr.bf16.mxu0 0
      %697 = vmatpush1.bf16.xpose.msra.mxu0 0
      %698 = vmatprep.subr.bf16.mxu0 0
      %699 = vmatpush1.bf16.xpose.msra.mxu0 0
      %700 = vmatprep.subr.bf16.mxu0 0
      %701 = vmatpush1.bf16.xpose.msra.mxu0 0
      %702 = vmatprep.subr.bf16.mxu0 0
      %703 = vmatpush1.bf16.xpose.msra.mxu0 0
      %704 = vmatprep.subr.bf16.mxu0 0
      %705 = vmatpush1.bf16.xpose.msra.mxu0 0
      %706 = vmatprep.subr.bf16.mxu0 0
      %707 = vmatpush1.bf16.xpose.msra.mxu0 0
      %708 = vmatprep.subr.bf16.mxu0 0
      %709 = vmatpush1.bf16.xpose.msra.mxu0 0
      %710 = vmatprep.subr.bf16.mxu0 0
      %711 = vmatpush1.bf16.xpose.msra.mxu0 0
      %712 = vmatprep.subr.bf16.mxu0 0
      %713 = vmatpush1.bf16.xpose.msra.mxu0 0
      %714 = vmatprep.subr.bf16.mxu0 0
      %715 = vmatpush1.bf16.xpose.msra.mxu0 0
      %716 = vmatprep.subr.bf16.mxu0 0
      %717 = vmatpush1.bf16.xpose.msra.mxu0 0
      %718 = vmatprep.mubr.bf16.mxu0 0
      %719 = vmatmul.mubr.bf16.gmra.mrb[0].mxu0 %v681
      %v720 = vpop.f32.mrb[0].mxu0
      %v721 = vadd.f32 0.0, %v720
      %v722 = vpop.f32.mrb[0].mxu0
      %v723 = vpop.f32.mrb[0].mxu0
      %v724 = vpop.f32.mrb[0].mxu0
      %725 = vdwg.mxu0
      %v726 = vmul.f32 %v721, 0.35355338
      %v727 = vadd.f32 %v726, %v558
      %v728 = vsel %vm562, %v727, -inf
      %729 = vmax.xlane.f32.xlu0 %v728
      %v730 = vpop.xlane.xlu0 %729
      %v731 = vsub.f32 %v727, %v730
      %v732 = vmul.f32 %v731, 1.442695
      %v733 = vpow.pop %v732
      %v734 = vsel %vm562, %v733, 0.0
      %735 = vadd.xlane.f32.xlu0 %v734
      %v736 = vpop.xlane.xlu0 %735
      %v737 = vpack.c.bf16 %v733, %v733
      %738 = vrot.lane.b32.xlu0 %v561, 88
      %v739 = vpop.permute.xlu0 %738
      %v741 = vsel %vm562, %v737, 0
      %v744 = vsel %vm627, %v739, 0
      %746 = vmatprep.subr.bf16.mxu0 0
      %747 = vmatpush1.bf16.msra.mxu0 %v744
      %748 = vmatprep.subr.bf16.mxu0 0
      %749 = vmatpush1.bf16.msra.mxu0 0
      %750 = vmatprep.subr.bf16.mxu0 0
      %751 = vmatpush1.bf16.msra.mxu0 0
      %752 = vmatprep.subr.bf16.mxu0 0
      %753 = vmatpush1.bf16.msra.mxu0 0
      %754 = vmatprep.subr.bf16.mxu0 0
      %755 = vmatpush1.bf16.msra.mxu0 0
      %756 = vmatprep.subr.bf16.mxu0 0
      %757 = vmatpush1.bf16.msra.mxu0 0
      %758 = vmatprep.subr.bf16.mxu0 0
      %759 = vmatpush1.bf16.msra.mxu0 0
      %760 = vmatprep.subr.bf16.mxu0 0
      %761 = vmatpush1.bf16.msra.mxu0 0
      %762 = vmatprep.subr.bf16.mxu0 0
      %763 = vmatpush1.bf16.msra.mxu0 0
      %764 = vmatprep.subr.bf16.mxu0 0
      %765 = vmatpush1.bf16.msra.mxu0 0
      %766 = vmatprep.subr.bf16.mxu0 0
      %767 = vmatpush1.bf16.msra.mxu0 0
      %768 = vmatprep.subr.bf16.mxu0 0
      %769 = vmatpush1.bf16.msra.mxu0 0
      %770 = vmatprep.subr.bf16.mxu0 0
      %771 = vmatpush1.bf16.msra.mxu0 0
      %772 = vmatprep.subr.bf16.mxu0 0
      %773 = vmatpush1.bf16.msra.mxu0 0
      %774 = vmatprep.subr.bf16.mxu0 0
      %775 = vmatpush1.bf16.msra.mxu0 0
      %776 = vmatprep.subr.bf16.mxu0 0
      %777 = vmatpush1.bf16.msra.mxu0 0
      %778 = vmatprep.mubr.bf16.mxu0 0
      %779 = vmatmul.mubr.bf16.gmra.mrb[0].mxu0 %v741
      %v780 = vpop.f32.mrb[0].mxu0
      %v781 = vadd.f32 0.0, %v780
      %v782 = vpop.f32.mrb[0].mxu0
      %v783 = vpop.f32.mrb[0].mxu0
      %v784 = vpop.f32.mrb[0].mxu0
      %785 = vdwg.mxu0
      %v786 = vrcp.pop %v736
      %v787 = vmul.f32 %v781, %v786
      %v788 = vpack.c.bf16 %v787, %v787
      %v789 = vld [vmem:[%s7 + $0x4] sm:$0xf]
      %v791 = vsel %vm562, %v788, 0
      %v794 = vsel %vm627, %v789, 0
      %796 = vmatprep.subr.bf16.mxu0 0
      %797 = vmatpush1.bf16.msra.mxu0 %v794
      %798 = vmatprep.subr.bf16.mxu0 0
      %799 = vmatpush1.bf16.msra.mxu0 0
      %800 = vmatprep.subr.bf16.mxu0 0
      %801 = vmatpush1.bf16.msra.mxu0 0
      %802 = vmatprep.subr.bf16.mxu0 0
      %803 = vmatpush1.bf16.msra.mxu0 0
      %804 = vmatprep.subr.bf16.mxu0 0
      %805 = vmatpush1.bf16.msra.mxu0 0
      %806 = vmatprep.subr.bf16.mxu0 0
      %807 = vmatpush1.bf16.msra.mxu0 0
      %808 = vmatprep.subr.bf16.mxu0 0
      %809 = vmatpush1.bf16.msra.mxu0 0
      %810 = vmatprep.subr.bf16.mxu0 0
      %811 = vmatpush1.bf16.msra.mxu0 0
      %812 = vmatprep.subr.bf16.mxu0 0
      %813 = vmatpush1.bf16.msra.mxu0 0
      %814 = vmatprep.subr.bf16.mxu0 0
      %815 = vmatpush1.bf16.msra.mxu0 0
      %816 = vmatprep.subr.bf16.mxu0 0
      %817 = vmatpush1.bf16.msra.mxu0 0
      %818 = vmatprep.subr.bf16.mxu0 0
      %819 = vmatpush1.bf16.msra.mxu0 0
      %820 = vmatprep.subr.bf16.mxu0 0
      %821 = vmatpush1.bf16.msra.mxu0 0
      %822 = vmatprep.subr.bf16.mxu0 0
      %823 = vmatpush1.bf16.msra.mxu0 0
      %824 = vmatprep.subr.bf16.mxu0 0
      %825 = vmatpush1.bf16.msra.mxu0 0
      %826 = vmatprep.subr.bf16.mxu0 0
      %827 = vmatpush1.bf16.msra.mxu0 0
      %828 = vmatprep.mubr.bf16.mxu0 0
      %829 = vmatmul.mubr.bf16.gmra.mrb[0].mxu0 %v791
      %v830 = vpop.f32.mrb[0].mxu0
      %v831 = vadd.f32 0.0, %v830
      %v832 = vpop.f32.mrb[0].mxu0
      %v833 = vpop.f32.mrb[0].mxu0
      %v834 = vpop.f32.mrb[0].mxu0
      %835 = vdwg.mxu0
      %v837 = vsel %vm562, %v673, 0
      %v840 = vsel %vm627, %v674, 0
      %842 = vmatprep.subr.bf16.mxu0 0
      %843 = vmatpush1.bf16.msra.mxu0 %v840
      %844 = vmatprep.subr.bf16.mxu0 0
      %845 = vmatpush1.bf16.msra.mxu0 0
      %846 = vmatprep.subr.bf16.mxu0 0
      %847 = vmatpush1.bf16.msra.mxu0 0
      %848 = vmatprep.subr.bf16.mxu0 0
      %849 = vmatpush1.bf16.msra.mxu0 0
      %850 = vmatprep.subr.bf16.mxu0 0
      %851 = vmatpush1.bf16.msra.mxu0 0
      %852 = vmatprep.subr.bf16.mxu0 0
      %853 = vmatpush1.bf16.msra.mxu0 0
      %854 = vmatprep.subr.bf16.mxu0 0
      %855 = vmatpush1.bf16.msra.mxu0 0
      %856 = vmatprep.subr.bf16.mxu0 0
      %857 = vmatpush1.bf16.msra.mxu0 0
      %858 = vmatprep.subr.bf16.mxu0 0
      %859 = vmatpush1.bf16.msra.mxu0 0
      %860 = vmatprep.subr.bf16.mxu0 0
      %861 = vmatpush1.bf16.msra.mxu0 0
      %862 = vmatprep.subr.bf16.mxu0 0
      %863 = vmatpush1.bf16.msra.mxu0 0
      %864 = vmatprep.subr.bf16.mxu0 0
      %865 = vmatpush1.bf16.msra.mxu0 0
      %866 = vmatprep.subr.bf16.mxu0 0
      %867 = vmatpush1.bf16.msra.mxu0 0
      %868 = vmatprep.subr.bf16.mxu0 0
      %869 = vmatpush1.bf16.msra.mxu0 0
      %870 = vmatprep.subr.bf16.mxu0 0
      %871 = vmatpush1.bf16.msra.mxu0 0
      %872 = vmatprep.subr.bf16.mxu0 0
      %873 = vmatpush1.bf16.msra.mxu0 0
      %874 = vmatprep.mubr.bf16.mxu0 0
      %875 = vmatmul.mubr.bf16.gmra.mrb[0].mxu0 %v837
      %v876 = vpop.f32.mrb[0].mxu0
      %v877 = vadd.f32 %v831, %v876
      %v878 = vpop.f32.mrb[0].mxu0
      %v879 = vpop.f32.mrb[0].mxu0
      %v880 = vpop.f32.mrb[0].mxu0
      %881 = vdwg.mxu0
      %882 = vrot.lane.b32.xlu0 %v560, 112
      %v883 = vpop.permute.xlu0 %882
      %884 = vrot.lane.b32.xlu0 %v561, 112
      %v885 = vpop.permute.xlu0 %884
      %v887 = vsel %vm562, %v883, 0
      %v890 = vsel %vm562, %v885, 0
      %892 = vmatprep.subr.bf16.mxu0 0
      %893 = vmatpush1.bf16.xpose.msra.mxu0 %v890
      %894 = vmatprep.subr.bf16.mxu0 0
      %895 = vmatpush1.bf16.xpose.msra.mxu0 0
      %896 = vmatprep.subr.bf16.mxu0 0
      %897 = vmatpush1.bf16.xpose.msra.mxu0 0
      %898 = vmatprep.subr.bf16.mxu0 0
      %899 = vmatpush1.bf16.xpose.msra.mxu0 0
      %900 = vmatprep.subr.bf16.mxu0 0
      %901 = vmatpush1.bf16.xpose.msra.mxu0 0
      %902 = vmatprep.subr.bf16.mxu0 0
      %903 = vmatpush1.bf16.xpose.msra.mxu0 0
      %904 = vmatprep.subr.bf16.mxu0 0
      %905 = vmatpush1.bf16.xpose.msra.mxu0 0
      %906 = vmatprep.subr.bf16.mxu0 0
      %907 = vmatpush1.bf16.xpose.msra.mxu0 0
      %908 = vmatprep.subr.bf16.mxu0 0
      %909 = vmatpush1.bf16.xpose.msra.mxu0 0
      %910 = vmatprep.subr.bf16.mxu0 0
      %911 = vmatpush1.bf16.xpose.msra.mxu0 0
      %912 = vmatprep.subr.bf16.mxu0 0
      %913 = vmatpush1.bf16.xpose.msra.mxu0 0
      %914 = vmatprep.subr.bf16.mxu0 0
      %915 = vmatpush1.bf16.xpose.msra.mxu0 0
      %916 = vmatprep.subr.bf16.mxu0 0
      %917 = vmatpush1.bf16.xpose.msra.mxu0 0
      %918 = vmatprep.subr.bf16.mxu0 0
      %919 = vmatpush1.bf16.xpose.msra.mxu0 0
      %920 = vmatprep.subr.bf16.mxu0 0
      %921 = vmatpush1.bf16.xpose.msra.mxu0 0
      %922 = vmatprep.subr.bf16.mxu0 0
      %923 = vmatpush1.bf16.xpose.msra.mxu0 0
      %924 = vmatprep.mubr.bf16.mxu0 0
      %925 = vmatmul.mubr.bf16.gmra.mrb[0].mxu0 %v887
      %v926 = vpop.f32.mrb[0].mxu0
      %v927 = vadd.f32 0.0, %v926
      %v928 = vpop.f32.mrb[0].mxu0
      %v929 = vpop.f32.mrb[0].mxu0
      %v930 = vpop.f32.mrb[0].mxu0
      %931 = vdwg.mxu0
      %v932 = vmul.f32 %v927, 0.35355338
      %v933 = vadd.f32 %v932, %v558
      %v934 = vsel %vm562, %v933, -inf
      %935 = vmax.xlane.f32.xlu0 %v934
      %v936 = vpop.xlane.xlu0 %935
      %v937 = vsub.f32 %v933, %v936
      %v938 = vmul.f32 %v937, 1.442695
      %v939 = vpow.pop %v938
      %v940 = vsel %vm562, %v939, 0.0
      %941 = vadd.xlane.f32.xlu0 %v940
      %v942 = vpop.xlane.xlu0 %941
      %v943 = vpack.c.bf16 %v939, %v939
      %944 = vrot.lane.b32.xlu0 %v561, 80
      %v945 = vpop.permute.xlu0 %944
      %v947 = vsel %vm562, %v943, 0
      %v950 = vsel %vm627, %v945, 0
      %952 = vmatprep.subr.bf16.mxu0 0
      %953 = vmatpush1.bf16.msra.mxu0 %v950
      %954 = vmatprep.subr.bf16.mxu0 0
      %955 = vmatpush1.bf16.msra.mxu0 0
      %956 = vmatprep.subr.bf16.mxu0 0
      %957 = vmatpush1.bf16.msra.mxu0 0
      %958 = vmatprep.subr.bf16.mxu0 0
      %959 = vmatpush1.bf16.msra.mxu0 0
      %960 = vmatprep.subr.bf16.mxu0 0
      %961 = vmatpush1.bf16.msra.mxu0 0
      %962 = vmatprep.subr.bf16.mxu0 0
      %963 = vmatpush1.bf16.msra.mxu0 0
      %964 = vmatprep.subr.bf16.mxu0 0
      %965 = vmatpush1.bf16.msra.mxu0 0
      %966 = vmatprep.subr.bf16.mxu0 0
      %967 = vmatpush1.bf16.msra.mxu0 0
      %968 = vmatprep.subr.bf16.mxu0 0
      %969 = vmatpush1.bf16.msra.mxu0 0
      %970 = vmatprep.subr.bf16.mxu0 0
      %971 = vmatpush1.bf16.msra.mxu0 0
      %972 = vmatprep.subr.bf16.mxu0 0
      %973 = vmatpush1.bf16.msra.mxu0 0
      %974 = vmatprep.subr.bf16.mxu0 0
      %975 = vmatpush1.bf16.msra.mxu0 0
      %976 = vmatprep.subr.bf16.mxu0 0
      %977 = vmatpush1.bf16.msra.mxu0 0
      %978 = vmatprep.subr.bf16.mxu0 0
      %979 = vmatpush1.bf16.msra.mxu0 0
      %980 = vmatprep.subr.bf16.mxu0 0
      %981 = vmatpush1.bf16.msra.mxu0 0
      %982 = vmatprep.subr.bf16.mxu0 0
      %983 = vmatpush1.bf16.msra.mxu0 0
      %984 = vmatprep.mubr.bf16.mxu0 0
      %985 = vmatmul.mubr.bf16.gmra.mrb[0].mxu0 %v947
      %v986 = vpop.f32.mrb[0].mxu0
      %v987 = vadd.f32 0.0, %v986
      %v988 = vpop.f32.mrb[0].mxu0
      %v989 = vpop.f32.mrb[0].mxu0
      %v990 = vpop.f32.mrb[0].mxu0
      %991 = vdwg.mxu0
      %v992 = vrcp.pop %v942
      %v993 = vmul.f32 %v987, %v992
      %v994 = vpack.c.bf16 %v993, %v993
      %v995 = vld [vmem:[%s7 + $0x8] sm:$0xf]
      %v997 = vsel %vm562, %v994, 0
      %v1000 = vsel %vm627, %v995, 0
      %1002 = vmatprep.subr.bf16.mxu0 0
      %1003 = vmatpush1.bf16.msra.mxu0 %v1000
      %1004 = vmatprep.subr.bf16.mxu0 0
      %1005 = vmatpush1.bf16.msra.mxu0 0
      %1006 = vmatprep.subr.bf16.mxu0 0
      %1007 = vmatpush1.bf16.msra.mxu0 0
      %1008 = vmatprep.subr.bf16.mxu0 0
      %1009 = vmatpush1.bf16.msra.mxu0 0
      %1010 = vmatprep.subr.bf16.mxu0 0
      %1011 = vmatpush1.bf16.msra.mxu0 0
      %1012 = vmatprep.subr.bf16.mxu0 0
      %1013 = vmatpush1.bf16.msra.mxu0 0
      %1014 = vmatprep.subr.bf16.mxu0 0
      %1015 = vmatpush1.bf16.msra.mxu0 0
      %1016 = vmatprep.subr.bf16.mxu0 0
      %1017 = vmatpush1.bf16.msra.mxu0 0
      %1018 = vmatprep.subr.bf16.mxu0 0
      %1019 = vmatpush1.bf16.msra.mxu0 0
      %1020 = vmatprep.subr.bf16.mxu0 0
      %1021 = vmatpush1.bf16.msra.mxu0 0
      %1022 = vmatprep.subr.bf16.mxu0 0
      %1023 = vmatpush1.bf16.msra.mxu0 0
      %1024 = vmatprep.subr.bf16.mxu0 0
      %1025 = vmatpush1.bf16.msra.mxu0 0
      %1026 = vmatprep.subr.bf16.mxu0 0
      %1027 = vmatpush1.bf16.msra.mxu0 0
      %1028 = vmatprep.subr.bf16.mxu0 0
      %1029 = vmatpush1.bf16.msra.mxu0 0
      %1030 = vmatprep.subr.bf16.mxu0 0
      %1031 = vmatpush1.bf16.msra.mxu0 0
      %1032 = vmatprep.subr.bf16.mxu0 0
      %1033 = vmatpush1.bf16.msra.mxu0 0
      %1034 = vmatprep.mubr.bf16.mxu0 0
      %1035 = vmatmul.mubr.bf16.gmra.mrb[0].mxu0 %v997
      %v1036 = vpop.f32.mrb[0].mxu0
      %v1037 = vadd.f32 0.0, %v1036
      %v1038 = vpop.f32.mrb[0].mxu0
      %v1039 = vpop.f32.mrb[0].mxu0
      %v1040 = vpop.f32.mrb[0].mxu0
      %1041 = vdwg.mxu0
      %v1042 = vadd.f32 %v877, %v1037
      %1043 = vrot.lane.b32.xlu0 %v560, 104
      %v1044 = vpop.permute.xlu0 %1043
      %1045 = vrot.lane.b32.xlu0 %v561, 104
      %v1046 = vpop.permute.xlu0 %1045
      %v1048 = vsel %vm562, %v1044, 0
      %v1051 = vsel %vm562, %v1046, 0
      %1053 = vmatprep.subr.bf16.mxu0 0
      %1054 = vmatpush1.bf16.xpose.msra.mxu0 %v1051
      %1055 = vmatprep.subr.bf16.mxu0 0
      %1056 = vmatpush1.bf16.xpose.msra.mxu0 0
      %1057 = vmatprep.subr.bf16.mxu0 0
      %1058 = vmatpush1.bf16.xpose.msra.mxu0 0
      %1059 = vmatprep.subr.bf16.mxu0 0
      %1060 = vmatpush1.bf16.xpose.msra.mxu0 0
      %1061 = vmatprep.subr.bf16.mxu0 0
      %1062 = vmatpush1.bf16.xpose.msra.mxu0 0
      %1063 = vmatprep.subr.bf16.mxu0 0
      %1064 = vmatpush1.bf16.xpose.msra.mxu0 0
      %1065 = vmatprep.subr.bf16.mxu0 0
      %1066 = vmatpush1.bf16.xpose.msra.mxu0 0
      %1067 = vmatprep.subr.bf16.mxu0 0
      %1068 = vmatpush1.bf16.xpose.msra.mxu0 0
      %1069 = vmatprep.subr.bf16.mxu0 0
      %1070 = vmatpush1.bf16.xpose.msra.mxu0 0
      %1071 = vmatprep.subr.bf16.mxu0 0
      %1072 = vmatpush1.bf16.xpose.msra.mxu0 0
      %1073 = vmatprep.subr.bf16.mxu0 0
      %1074 = vmatpush1.bf16.xpose.msra.mxu0 0
      %1075 = vmatprep.subr.bf16.mxu0 0
      %1076 = vmatpush1.bf16.xpose.msra.mxu0 0
      %1077 = vmatprep.subr.bf16.mxu0 0
      %1078 = vmatpush1.bf16.xpose.msra.mxu0 0
      %1079 = vmatprep.subr.bf16.mxu0 0
      %1080 = vmatpush1.bf16.xpose.msra.mxu0 0
      %1081 = vmatprep.subr.bf16.mxu0 0
      %1082 = vmatpush1.bf16.xpose.msra.mxu0 0
      %1083 = vmatprep.subr.bf16.mxu0 0
      %1084 = vmatpush1.bf16.xpose.msra.mxu0 0
      %1085 = vmatprep.mubr.bf16.mxu0 0
      %1086 = vmatmul.mubr.bf16.gmra.mrb[0].mxu0 %v1048
      %v1087 = vpop.f32.mrb[0].mxu0
      %v1088 = vadd.f32 0.0, %v1087
      %v1089 = vpop.f32.mrb[0].mxu0
      %v1090 = vpop.f32.mrb[0].mxu0
      %v1091 = vpop.f32.mrb[0].mxu0
      %1092 = vdwg.mxu0
      %v1093 = vmul.f32 %v1088, 0.35355338
      %v1094 = vadd.f32 %v1093, %v558
      %v1095 = vsel %vm562, %v1094, -inf
      %1096 = vmax.xlane.f32.xlu0 %v1095
      %v1097 = vpop.xlane.xlu0 %1096
      %v1098 = vsub.f32 %v1094, %v1097
      %v1099 = vmul.f32 %v1098, 1.442695
      %v1100 = vpow.pop %v1099
      %v1101 = vsel %vm562, %v1100, 0.0
      %1102 = vadd.xlane.f32.xlu0 %v1101
      %v1103 = vpop.xlane.xlu0 %1102
      %v1104 = vpack.c.bf16 %v1100, %v1100
      %1105 = vrot.lane.b32.xlu0 %v561, 72
      %v1106 = vpop.permute.xlu0 %1105
      %v1108 = vsel %vm562, %v1104, 0
      %v1111 = vsel %vm627, %v1106, 0
      %1113 = vmatprep.subr.bf16.mxu0 0
      %1114 = vmatpush1.bf16.msra.mxu0 %v1111
      %1115 = vmatprep.subr.bf16.mxu0 0
      %1116 = vmatpush1.bf16.msra.mxu0 0
      %1117 = vmatprep.subr.bf16.mxu0 0
      %1118 = vmatpush1.bf16.msra.mxu0 0
      %1119 = vmatprep.subr.bf16.mxu0 0
      %1120 = vmatpush1.bf16.msra.mxu0 0
      %1121 = vmatprep.subr.bf16.mxu0 0
      %1122 = vmatpush1.bf16.msra.mxu0 0
      %1123 = vmatprep.subr.bf16.mxu0 0
      %1124 = vmatpush1.bf16.msra.mxu0 0
      %1125 = vmatprep.subr.bf16.mxu0 0
      %1126 = vmatpush1.bf16.msra.mxu0 0
      %1127 = vmatprep.subr.bf16.mxu0 0
      %1128 = vmatpush1.bf16.msra.mxu0 0
      %1129 = vmatprep.subr.bf16.mxu0 0
      %1130 = vmatpush1.bf16.msra.mxu0 0
      %1131 = vmatprep.subr.bf16.mxu0 0
      %1132 = vmatpush1.bf16.msra.mxu0 0
      %1133 = vmatprep.subr.bf16.mxu0 0
      %1134 = vmatpush1.bf16.msra.mxu0 0
      %1135 = vmatprep.subr.bf16.mxu0 0
      %1136 = vmatpush1.bf16.msra.mxu0 0
      %1137 = vmatprep.subr.bf16.mxu0 0
      %1138 = vmatpush1.bf16.msra.mxu0 0
      %1139 = vmatprep.subr.bf16.mxu0 0
      %1140 = vmatpush1.bf16.msra.mxu0 0
      %1141 = vmatprep.subr.bf16.mxu0 0
      %1142 = vmatpush1.bf16.msra.mxu0 0
      %1143 = vmatprep.subr.bf16.mxu0 0
      %1144 = vmatpush1.bf16.msra.mxu0 0
      %1145 = vmatprep.mubr.bf16.mxu0 0
      %1146 = vmatmul.mubr.bf16.gmra.mrb[0].mxu0 %v1108
      %v1147 = vpop.f32.mrb[0].mxu0
      %v1148 = vadd.f32 0.0, %v1147
      %v1149 = vpop.f32.mrb[0].mxu0
      %v1150 = vpop.f32.mrb[0].mxu0
      %v1151 = vpop.f32.mrb[0].mxu0
      %1152 = vdwg.mxu0
      %v1153 = vrcp.pop %v1103
      %v1154 = vmul.f32 %v1148, %v1153
      %v1155 = vpack.c.bf16 %v1154, %v1154
      %v1156 = vld [vmem:[%s7 + $0xc] sm:$0xf]
      %v1158 = vsel %vm562, %v1155, 0
      %v1161 = vsel %vm627, %v1156, 0
      %1163 = vmatprep.subr.bf16.mxu0 0
      %1164 = vmatpush1.bf16.msra.mxu0 %v1161
      %1165 = vmatprep.subr.bf16.mxu0 0
      %1166 = vmatpush1.bf16.msra.mxu0 0
      %1167 = vmatprep.subr.bf16.mxu0 0
      %1168 = vmatpush1.bf16.msra.mxu0 0
      %1169 = vmatprep.subr.bf16.mxu0 0
      %1170 = vmatpush1.bf16.msra.mxu0 0
      %1171 = vmatprep.subr.bf16.mxu0 0
      %1172 = vmatpush1.bf16.msra.mxu0 0
      %1173 = vmatprep.subr.bf16.mxu0 0
      %1174 = vmatpush1.bf16.msra.mxu0 0
      %1175 = vmatprep.subr.bf16.mxu0 0
      %1176 = vmatpush1.bf16.msra.mxu0 0
      %1177 = vmatprep.subr.bf16.mxu0 0
      %1178 = vmatpush1.bf16.msra.mxu0 0
      %1179 = vmatprep.subr.bf16.mxu0 0
      %1180 = vmatpush1.bf16.msra.mxu0 0
      %1181 = vmatprep.subr.bf16.mxu0 0
      %1182 = vmatpush1.bf16.msra.mxu0 0
      %1183 = vmatprep.subr.bf16.mxu0 0
      %1184 = vmatpush1.bf16.msra.mxu0 0
      %1185 = vmatprep.subr.bf16.mxu0 0
      %1186 = vmatpush1.bf16.msra.mxu0 0
      %1187 = vmatprep.subr.bf16.mxu0 0
      %1188 = vmatpush1.bf16.msra.mxu0 0
      %1189 = vmatprep.subr.bf16.mxu0 0
      %1190 = vmatpush1.bf16.msra.mxu0 0
      %1191 = vmatprep.subr.bf16.mxu0 0
      %1192 = vmatpush1.bf16.msra.mxu0 0
      %1193 = vmatprep.subr.bf16.mxu0 0
      %1194 = vmatpush1.bf16.msra.mxu0 0
      %1195 = vmatprep.mubr.bf16.mxu0 0
      %1196 = vmatmul.mubr.bf16.gmra.mrb[0].mxu0 %v1158
      %v1197 = vpop.f32.mrb[0].mxu0
      %v1198 = vadd.f32 0.0, %v1197
      %v1199 = vpop.f32.mrb[0].mxu0
      %v1200 = vpop.f32.mrb[0].mxu0
      %v1201 = vpop.f32.mrb[0].mxu0
      %1202 = vdwg.mxu0
      %v1203 = vadd.f32 %v1042, %v1198
      %v1204 = vadd.f32 %v414, %v1203
      %v1205 = vld [vmem:[%s8] sm:$0x1]
      %v1207 = vlaneseq
      %v1208 = vshrl.u32 %v1207, 7
      %v1209 = vsub.s32 0, %v1208
      %v1210 = vrot.slane %v1205, %v1209
      %v1212 = vadd.f32 %v1204, %v1210
      %v1213 = vsel %vm440, %v1212, 0.0
      %1214 = vadd.xlane.f32.xlu0 %v1213
      %v1215 = vpop.xlane.xlu0 %1214
      %v1216 = vrcp.pop 32.0
      %v1217 = vmul.f32 %v1215, %v1216
      %v1218 = vsub.f32 %v1212, %v1217
      %v1219 = vmul.f32 %v1218, %v1218
      %v1220 = vsel %vm440, %v1219, 0.0
      %1221 = vadd.xlane.f32.xlu0 %v1220
      %v1222 = vpop.xlane.xlu0 %1221
      %v1223 = vmul.f32 %v1222, %v1216
      %v1224 = vadd.f32 %v1223, 1e-05
      %v1225 = vrsqrt.pop %v1224
      %v1226 = vmul.f32 %v1218, %v1225
      %v1227 = vld [vmem:[%s9] sm:$0x1]
      %v1229 = vlaneseq
      %v1230 = vshrl.u32 %v1229, 7
      %v1231 = vsub.s32 0, %v1230
      %v1232 = vrot.slane %v1227, %v1231
      %v1234 = vmul.f32 %v1226, %v1232
      %v1235 = vld [vmem:[%s10] sm:$0x1]
      %v1237 = vlaneseq
      %v1238 = vshrl.u32 %v1237, 7
      %v1239 = vsub.s32 0, %v1238
      %v1240 = vrot.slane %v1235, %v1239
      %v1242 = vadd.f32 %v1234, %v1240
      %1243 = vst.msk [vmem:[%s412] sm:$0xff] %vm440, %v1242
      %p1244 = scmp.lt.s32.totalorder %s22, 1
      %s1245 = scalar_select %p1244, %s22, 1
      %s1246 = smul.addr %s1245, 8
      %s1247 = scalar_lea.vmem %s11, %s1246
      // Predicated region
      $region65: #{transformer_forward.11} parent=63 // pred_check
        %p1248 = pneg %p286
      $region66: #{transformer_forward.11} parent=63 // pred_check_branch
        %1250 = sbr.rel (%p1248) target = $region68
      $region67: #{transformer_forward.11} parent=63 // pred_region
        _
      $region68: #{transformer_forward.11} parent=63 // pred_fallthru
        _
    $region64: #{transformer_forward.11} parent=5 // pred_fallthru
      _
    %p1251 = scmp.le.s32.totalorder 2, %s17
    // Predicated region
    $region69: #{transformer_forward.11} parent=5 // pred_check
      %p1252 = pneg %p1251
    $region70: #{transformer_forward.11} parent=5 // pred_check_branch
      %1254 = sbr.rel (%p1252) target = $region72
    $region71: #{transformer_forward.11} parent=5 // pred_region
      %s1255 = ssub.s32 %s17, 2
      // Predicated region
      $region73: #{transformer_forward.11} parent=71 // pred_check
        %p1256 = pneg %p292
      $region74: #{transformer_forward.11} parent=71 // pred_check_branch
        %1258 = sbr.rel (%p1256) target = $region76
      $region75: #{transformer_forward.11} parent=71 // pred_region
        %p1259 = scmp.lt.s32.totalorder %s23, 1
        %s1260 = scalar_select %p1259, %s23, 1
        %s1261 = smul.addr %s1260, 8
        %s1262 = scalar_lea.vmem %s11, %s1261
      $region76: #{transformer_forward.11} parent=71 // pred_fallthru
        _
    $region72: #{transformer_forward.11} parent=5 // pred_fallthru
      _
  $region6: #{transformer_forward.11} parent=0 // loop_footer
    %s21 = sadd.s32 1, %s17
  $region7: #{transformer_forward.11} parent=0 // loop_footer_branch
    %16 = sbr.rel target = $region3
  $region8: #{transformer_forward.11} parent=0 // loop_exit
    _

// kernel: transformer_forward.15
$region0: #{transformer_forward.15}
  #allocation0 [shape = 'u32[]', space=smem, size = 0x4, offset = 0x4, fixed_abs, tag = 'smem constant byte address 0x4 - core index']
  #allocation1 [shape = 'u32[144,128]{1,0:T(1,128)}', space=vmem, size = 0x12000, scoped, tag = 'internal scratch']
  %s0 = inlined_call_operand.vmem [shape: f32[2,8,32], index: 0, kind: input, shape index: {}, may-alias: {0,1}]
  %s1 = inlined_call_operand.vmem [shape: f32[2,8,32], index: 1, kind: input, shape index: {}, may-alias: {0,1}]
  %s2 = inlined_call_operand.vmem [shape: f32[2,1,8], index: 2, kind: input, shape index: {}]
  %s3 = inlined_call_operand.vmem [shape: bf16[32,32], index: 3, kind: input, shape index: {}]
  %s4 = inlined_call_operand.vmem [shape: f32[1,32], index: 4, kind: input, shape index: {}]
  %s5 = inlined_call_operand.vmem [shape: bf16[32,64], index: 5, kind: input, shape index: {}]
  %s6 = inlined_call_operand.vmem [shape: f32[1,64], index: 6, kind: input, shape index: {}]
  %s7 = inlined_call_operand.vmem [shape: bf16[32,32], index: 7, kind: input, shape index: {}]
  %s8 = inlined_call_operand.vmem [shape: f32[1,32], index: 8, kind: input, shape index: {}]
  %s9 = inlined_call_operand.vmem [shape: f32[1,32], index: 9, kind: input, shape index: {}]
  %s10 = inlined_call_operand.vmem [shape: f32[1,32], index: 10, kind: input, shape index: {}]
  %s11 = inlined_call_operand.vmem [shape: f32[2,8,32], index: 11, kind: output, shape index: {}]
  %s12 = sld [smem:[#allocation0]]
  $region77: #{transformer_forward.15} parent=0
    _
  %s14 = ssub.s32 1, %s12
  %s15 = scalar_select 0, %s14, %s12
  loop: start=0, step=1, limit=4
  $region2: #{transformer_forward.15} parent=0 // loop_pre_header
    _
  $region3: #{transformer_forward.15} parent=0 // loop_header
    %s17 = sphi 0, %s21
    %p18 = scmp.ge.s32.totalorder %s17, 4
    %s27 = sphi 0, %s29
    %s30 = sphi 0, %s27
    %s31 = sphi 0, %s30
    %s47 = sphi 0, %s31
    %s53 = sphi 0, %s55
    %s56 = sphi 0, %s53
    %s57 = sphi 0, %s56
    %s73 = sphi 0, %s57
    %s79 = sphi 0, %s81
    %s82 = sphi 0, %s79
    %s83 = sphi 0, %s82
    %s99 = sphi 0, %s83
    %s103 = sphi 0, %s103
    %s105 = sphi 0, %s103
    %s106 = sphi 0, %s105
    %s120 = sphi 0, %s106
    %s124 = sphi 0, %s124
    %s126 = sphi 0, %s124
    %s127 = sphi 0, %s126
    %s141 = sphi 0, %s127
    %s145 = sphi 0, %s145
    %s147 = sphi 0, %s145
    %s148 = sphi 0, %s147
    %s162 = sphi 0, %s148
    %s166 = sphi 0, %s166
    %s168 = sphi 0, %s166
    %s169 = sphi 0, %s168
    %s183 = sphi 0, %s169
    %s187 = sphi 0, %s187
    %s189 = sphi 0, %s187
    %s190 = sphi 0, %s189
    %s204 = sphi 0, %s190
    %s208 = sphi 0, %s208
    %s210 = sphi 0, %s208
    %s211 = sphi 0, %s210
    %s225 = sphi 0, %s211
    %s229 = sphi 0, %s229
    %s231 = sphi 0, %s229
    %s232 = sphi 0, %s231
    %s246 = sphi 0, %s232
    %s250 = sphi 0, %s250
    %s252 = sphi 0, %s250
    %s253 = sphi 0, %s252
    %s267 = sphi 0, %s253
    %s273 = sphi 0, %s275
    %s276 = sphi 0, %s273
    %s277 = sphi 0, %s276
    %s293 = sphi 0, %s277
  $region4: #{transformer_forward.15} parent=0 // loop_header_branch
    %20 = sbr.rel (%p18) target = $region8
  $region5: #{transformer_forward.15} parent=0 // loop_body
    %s22 = ssub.s32 %s17, 1
    %s23 = ssub.s32 %s17, 2
    %s24 = sadd.s32 %s17, 1
    %s25 = ssub.s32 %s17, %s24
    %p26 = scmp.eq.s32.totalorder %s25, 0
    %s28 = sadd.s32 %s27, 1
    %s29 = scalar_select %p26, %s27, %s28
    %p32 = pneg %p26
    %p33 = scmp.eq.s32.totalorder %s17, 1
    %p34 = por %p32, %p33
    %p35 = scmp.ne.s32.totalorder %s27, %s30
    %p36 = scmp.eq.s32.totalorder %s17, 0
    %p37 = por %p35, %p36
    %p38 = scmp.ne.s32.totalorder %s27, %s30
    %p39 = scmp.eq.s32.totalorder %s22, 1
    %p40 = por %p38, %p39
    %p41 = scmp.ne.s32.totalorder %s30, %s31
    %p42 = scmp.eq.s32.totalorder %s22, 0
    %p43 = por %p41, %p42
    %p44 = scmp.ne.s32.totalorder %s30, %s31
    %p45 = scmp.eq.s32.totalorder %s23, 1
    %p46 = por %p44, %p45
    %p48 = scmp.ne.s32.totalorder %s31, %s47
    %p49 = scmp.eq.s32.totalorder %s23, 0
    %p50 = por %p48, %p49
    %s51 = ssub.s32 %s17, %s24
    %p52 = scmp.eq.s32.totalorder %s51, 0
    %s54 = sadd.s32 %s53, 1
    %s55 = scalar_select %p52, %s53, %s54
    %p58 = pneg %p52
    %p59 = scmp.eq.s32.totalorder %s17, 1
    %p60 = por %p58, %p59
    %p61 = scmp.ne.s32.totalorder %s53, %s56
    %p62 = scmp.eq.s32.totalorder %s17, 0
    %p63 = por %p61, %p62
    %p64 = scmp.ne.s32.totalorder %s53, %s56
    %p65 = scmp.eq.s32.totalorder %s22, 1
    %p66 = por %p64, %p65
    %p67 = scmp.ne.s32.totalorder %s56, %s57
    %p68 = scmp.eq.s32.totalorder %s22, 0
    %p69 = por %p67, %p68
    %p70 = scmp.ne.s32.totalorder %s56, %s57
    %p71 = scmp.eq.s32.totalorder %s23, 1
    %p72 = por %p70, %p71
    %p74 = scmp.ne.s32.totalorder %s57, %s73
    %p75 = scmp.eq.s32.totalorder %s23, 0
    %p76 = por %p74, %p75
    %s77 = ssub.s32 %s17, %s24
    %p78 = scmp.eq.s32.totalorder %s77, 0
    %s80 = sadd.s32 %s79, 1
    %s81 = scalar_select %p78, %s79, %s80
    %p84 = pneg %p78
    %p85 = scmp.eq.s32.totalorder %s17, 1
    %p86 = por %p84, %p85
    %p87 = scmp.ne.s32.totalorder %s79, %s82
    %p88 = scmp.eq.s32.totalorder %s17, 0
    %p89 = por %p87, %p88
    %p90 = scmp.ne.s32.totalorder %s79, %s82
    %p91 = scmp.eq.s32.totalorder %s22, 1
    %p92 = por %p90, %p91
    %p93 = scmp.ne.s32.totalorder %s82, %s83
    %p94 = scmp.eq.s32.totalorder %s22, 0
    %p95 = por %p93, %p94
    %p96 = scmp.ne.s32.totalorder %s82, %s83
    %p97 = scmp.eq.s32.totalorder %s23, 1
    %p98 = por %p96, %p97
    %p100 = scmp.ne.s32.totalorder %s83, %s99
    %p101 = scmp.eq.s32.totalorder %s23, 0
    %p102 = por %p100, %p101
    %s104 = sadd.s32 %s103, 1
    %p107 = scmp.eq.s32.totalorder %s17, 1
    %p108 = scmp.ne.s32.totalorder %s103, %s105
    %p109 = scmp.eq.s32.totalorder %s17, 0
    %p110 = por %p108, %p109
    %p111 = scmp.ne.s32.totalorder %s103, %s105
    %p112 = scmp.eq.s32.totalorder %s22, 1
    %p113 = por %p111, %p112
    %p114 = scmp.ne.s32.totalorder %s105, %s106
    %p115 = scmp.eq.s32.totalorder %s22, 0
    %p116 = por %p114, %p115
    %p117 = scmp.ne.s32.totalorder %s105, %s106
    %p118 = scmp.eq.s32.totalorder %s23, 1
    %p119 = por %p117, %p118
    %p121 = scmp.ne.s32.totalorder %s106, %s120
    %p122 = scmp.eq.s32.totalorder %s23, 0
    %p123 = por %p121, %p122
    %s125 = sadd.s32 %s124, 1
    %p128 = scmp.eq.s32.totalorder %s17, 1
    %p129 = scmp.ne.s32.totalorder %s124, %s126
    %p130 = scmp.eq.s32.totalorder %s17, 0
    %p131 = por %p129, %p130
    %p132 = scmp.ne.s32.totalorder %s124, %s126
    %p133 = scmp.eq.s32.totalorder %s22, 1
    %p134 = por %p132, %p133
    %p135 = scmp.ne.s32.totalorder %s126, %s127
    %p136 = scmp.eq.s32.totalorder %s22, 0
    %p137 = por %p135, %p136
    %p138 = scmp.ne.s32.totalorder %s126, %s127
    %p139 = scmp.eq.s32.totalorder %s23, 1
    %p140 = por %p138, %p139
    %p142 = scmp.ne.s32.totalorder %s127, %s141
    %p143 = scmp.eq.s32.totalorder %s23, 0
    %p144 = por %p142, %p143
    %s146 = sadd.s32 %s145, 1
    %p149 = scmp.eq.s32.totalorder %s17, 1
    %p150 = scmp.ne.s32.totalorder %s145, %s147
    %p151 = scmp.eq.s32.totalorder %s17, 0
    %p152 = por %p150, %p151
    %p153 = scmp.ne.s32.totalorder %s145, %s147
    %p154 = scmp.eq.s32.totalorder %s22, 1
    %p155 = por %p153, %p154
    %p156 = scmp.ne.s32.totalorder %s147, %s148
    %p157 = scmp.eq.s32.totalorder %s22, 0
    %p158 = por %p156, %p157
    %p159 = scmp.ne.s32.totalorder %s147, %s148
    %p160 = scmp.eq.s32.totalorder %s23, 1
    %p161 = por %p159, %p160
    %p163 = scmp.ne.s32.totalorder %s148, %s162
    %p164 = scmp.eq.s32.totalorder %s23, 0
    %p165 = por %p163, %p164
    %s167 = sadd.s32 %s166, 1
    %p170 = scmp.eq.s32.totalorder %s17, 1
    %p171 = scmp.ne.s32.totalorder %s166, %s168
    %p172 = scmp.eq.s32.totalorder %s17, 0
    %p173 = por %p171, %p172
    %p174 = scmp.ne.s32.totalorder %s166, %s168
    %p175 = scmp.eq.s32.totalorder %s22, 1
    %p176 = por %p174, %p175
    %p177 = scmp.ne.s32.totalorder %s168, %s169
    %p178 = scmp.eq.s32.totalorder %s22, 0
    %p179 = por %p177, %p178
    %p180 = scmp.ne.s32.totalorder %s168, %s169
    %p181 = scmp.eq.s32.totalorder %s23, 1
    %p182 = por %p180, %p181
    %p184 = scmp.ne.s32.totalorder %s169, %s183
    %p185 = scmp.eq.s32.totalorder %s23, 0
    %p186 = por %p184, %p185
    %s188 = sadd.s32 %s187, 1
    %p191 = scmp.eq.s32.totalorder %s17, 1
    %p192 = scmp.ne.s32.totalorder %s187, %s189
    %p193 = scmp.eq.s32.totalorder %s17, 0
    %p194 = por %p192, %p193
    %p195 = scmp.ne.s32.totalorder %s187, %s189
    %p196 = scmp.eq.s32.totalorder %s22, 1
    %p197 = por %p195, %p196
    %p198 = scmp.ne.s32.totalorder %s189, %s190
    %p199 = scmp.eq.s32.totalorder %s22, 0
    %p200 = por %p198, %p199
    %p201 = scmp.ne.s32.totalorder %s189, %s190
    %p202 = scmp.eq.s32.totalorder %s23, 1
    %p203 = por %p201, %p202
    %p205 = scmp.ne.s32.totalorder %s190, %s204
    %p206 = scmp.eq.s32.totalorder %s23, 0
    %p207 = por %p205, %p206
    %s209 = sadd.s32 %s208, 1
    %p212 = scmp.eq.s32.totalorder %s17, 1
    %p213 = scmp.ne.s32.totalorder %s208, %s210
    %p214 = scmp.eq.s32.totalorder %s17, 0
    %p215 = por %p213, %p214
    %p216 = scmp.ne.s32.totalorder %s208, %s210
    %p217 = scmp.eq.s32.totalorder %s22, 1
    %p218 = por %p216, %p217
    %p219 = scmp.ne.s32.totalorder %s210, %s211
    %p220 = scmp.eq.s32.totalorder %s22, 0
    %p221 = por %p219, %p220
    %p222 = scmp.ne.s32.totalorder %s210, %s211
    %p223 = scmp.eq.s32.totalorder %s23, 1
    %p224 = por %p222, %p223
    %p226 = scmp.ne.s32.totalorder %s211, %s225
    %p227 = scmp.eq.s32.totalorder %s23, 0
    %p228 = por %p226, %p227
    %s230 = sadd.s32 %s229, 1
    %p233 = scmp.eq.s32.totalorder %s17, 1
    %p234 = scmp.ne.s32.totalorder %s229, %s231
    %p235 = scmp.eq.s32.totalorder %s17, 0
    %p236 = por %p234, %p235
    %p237 = scmp.ne.s32.totalorder %s229, %s231
    %p238 = scmp.eq.s32.totalorder %s22, 1
    %p239 = por %p237, %p238
    %p240 = scmp.ne.s32.totalorder %s231, %s232
    %p241 = scmp.eq.s32.totalorder %s22, 0
    %p242 = por %p240, %p241
    %p243 = scmp.ne.s32.totalorder %s231, %s232
    %p244 = scmp.eq.s32.totalorder %s23, 1
    %p245 = por %p243, %p244
    %p247 = scmp.ne.s32.totalorder %s232, %s246
    %p248 = scmp.eq.s32.totalorder %s23, 0
    %p249 = por %p247, %p248
    %s251 = sadd.s32 %s250, 1
    %p254 = scmp.eq.s32.totalorder %s17, 1
    %p255 = scmp.ne.s32.totalorder %s250, %s252
    %p256 = scmp.eq.s32.totalorder %s17, 0
    %p257 = por %p255, %p256
    %p258 = scmp.ne.s32.totalorder %s250, %s252
    %p259 = scmp.eq.s32.totalorder %s22, 1
    %p260 = por %p258, %p259
    %p261 = scmp.ne.s32.totalorder %s252, %s253
    %p262 = scmp.eq.s32.totalorder %s22, 0
    %p263 = por %p261, %p262
    %p264 = scmp.ne.s32.totalorder %s252, %s253
    %p265 = scmp.eq.s32.totalorder %s23, 1
    %p266 = por %p264, %p265
    %p268 = scmp.ne.s32.totalorder %s253, %s267
    %p269 = scmp.eq.s32.totalorder %s23, 0
    %p270 = por %p268, %p269
    %s271 = ssub.s32 %s17, %s24
    %p272 = scmp.eq.s32.totalorder %s271, 0
    %s274 = sadd.s32 %s273, 1
    %s275 = scalar_select %p272, %s273, %s274
    %p278 = pneg %p272
    %p279 = scmp.eq.s32.totalorder %s17, 1
    %p280 = por %p278, %p279
    %p281 = scmp.ne.s32.totalorder %s273, %s276
    %p282 = scmp.eq.s32.totalorder %s17, 0
    %p283 = por %p281, %p282
    %p284 = scmp.ne.s32.totalorder %s273, %s276
    %p285 = scmp.eq.s32.totalorder %s22, 1
    %p286 = por %p284, %p285
    %p287 = scmp.ne.s32.totalorder %s276, %s277
    %p288 = scmp.eq.s32.totalorder %s22, 0
    %p289 = por %p287, %p288
    %p290 = scmp.ne.s32.totalorder %s276, %s277
    %p291 = scmp.eq.s32.totalorder %s23, 1
    %p292 = por %p290, %p291
    %p294 = scmp.ne.s32.totalorder %s277, %s293
    %p295 = scmp.eq.s32.totalorder %s23, 0
    %p296 = por %p294, %p295
    %p297 = scmp.le.s32.totalorder 1, %s17
    %p298 = scmp.lt.s32.totalorder %s17, 3
    %p299 = pnand %p297, %p298
    %p300 = pneg %p299
    // Predicated region
    $region9: #{transformer_forward.15} parent=5 // pred_check
      _
    $region10: #{transformer_forward.15} parent=5 // pred_check_branch
      %302 = sbr.rel (%p299) target = $region12
    $region11: #{transformer_forward.15} parent=5 // pred_region
      %s303 = ssub.s32 %s17, 1
      // Predicated region
      $region13: #{transformer_forward.15} parent=11 // pred_check
        %p304 = pneg %p116
      $region14: #{transformer_forward.15} parent=11 // pred_check_branch
        %306 = sbr.rel (%p304) target = $region16
      $region15: #{transformer_forward.15} parent=11 // pred_region
        _
      $region16: #{transformer_forward.15} parent=11 // pred_fallthru
        _
      // Predicated region
      $region17: #{transformer_forward.15} parent=11 // pred_check
        %p307 = pneg %p137
      $region18: #{transformer_forward.15} parent=11 // pred_check_branch
        %309 = sbr.rel (%p307) target = $region20
      $region19: #{transformer_forward.15} parent=11 // pred_region
        _
      $region20: #{transformer_forward.15} parent=11 // pred_fallthru
        _
      // Predicated region
      $region21: #{transformer_forward.15} parent=11 // pred_check
        %p310 = pneg %p158
      $region22: #{transformer_forward.15} parent=11 // pred_check_branch
        %312 = sbr.rel (%p310) target = $region24
      $region23: #{transformer_forward.15} parent=11 // pred_region
        _
      $region24: #{transformer_forward.15} parent=11 // pred_fallthru
        _
      // Predicated region
      $region25: #{transformer_forward.15} parent=11 // pred_check
        %p313 = pneg %p179
      $region26: #{transformer_forward.15} parent=11 // pred_check_branch
        %315 = sbr.rel (%p313) target = $region28
      $region27: #{transformer_forward.15} parent=11 // pred_region
        _
      $region28: #{transformer_forward.15} parent=11 // pred_fallthru
        _
      // Predicated region
      $region29: #{transformer_forward.15} parent=11 // pred_check
        %p316 = pneg %p200
      $region30: #{transformer_forward.15} parent=11 // pred_check_branch
        %318 = sbr.rel (%p316) target = $region32
      $region31: #{transformer_forward.15} parent=11 // pred_region
        _
      $region32: #{transformer_forward.15} parent=11 // pred_fallthru
        _
      // Predicated region
      $region33: #{transformer_forward.15} parent=11 // pred_check
        %p319 = pneg %p221
      $region34: #{transformer_forward.15} parent=11 // pred_check_branch
        %321 = sbr.rel (%p319) target = $region36
      $region35: #{transformer_forward.15} parent=11 // pred_region
        _
      $region36: #{transformer_forward.15} parent=11 // pred_fallthru
        _
      // Predicated region
      $region37: #{transformer_forward.15} parent=11 // pred_check
        %p322 = pneg %p242
      $region38: #{transformer_forward.15} parent=11 // pred_check_branch
        %324 = sbr.rel (%p322) target = $region40
      $region39: #{transformer_forward.15} parent=11 // pred_region
        _
      $region40: #{transformer_forward.15} parent=11 // pred_fallthru
        _
      // Predicated region
      $region41: #{transformer_forward.15} parent=11 // pred_check
        %p325 = pneg %p263
      $region42: #{transformer_forward.15} parent=11 // pred_check_branch
        %327 = sbr.rel (%p325) target = $region44
      $region43: #{transformer_forward.15} parent=11 // pred_region
        _
      $region44: #{transformer_forward.15} parent=11 // pred_fallthru
        _
    $region12: #{transformer_forward.15} parent=5 // pred_fallthru
      _
    %p328 = scmp.lt.s32.totalorder %s17, 2
    // Predicated region
    $region45: #{transformer_forward.15} parent=5 // pred_check
      %p329 = pneg %p328
    $region46: #{transformer_forward.15} parent=5 // pred_check_branch
      %331 = sbr.rel (%p329) target = $region48
    $region47: #{transformer_forward.15} parent=5 // pred_region
      // Predicated region
      $region49: #{transformer_forward.15} parent=47 // pred_check
        %p332 = pneg %p37
      $region50: #{transformer_forward.15} parent=47 // pred_check_branch
        %334 = sbr.rel (%p332) target = $region52
      $region51: #{transformer_forward.15} parent=47 // pred_region
        %p335 = scmp.lt.s32.totalorder %s17, 1
        %s336 = scalar_select %p335, %s17, 1
        %s337 = smul.addr %s336, 8
        %s338 = scalar_lea.vmem %s0, %s337
      $region52: #{transformer_forward.15} parent=47 // pred_fallthru
        _
      // Predicated region
      $region53: #{transformer_forward.15} parent=47 // pred_check
        %p339 = pneg %p63
      $region54: #{transformer_forward.15} parent=47 // pred_check_branch
        %341 = sbr.rel (%p339) target = $region56
      $region55: #{transformer_forward.15} parent=47 // pred_region
        %p342 = scmp.lt.s32.totalorder %s17, 1
        %s343 = scalar_select %p342, %s17, 1
        %s344 = smul.addr %s343, 8
        %s345 = scalar_lea.vmem %s1, %s344
      $region56: #{transformer_forward.15} parent=47 // pred_fallthru
        _
      // Predicated region
      $region57: #{transformer_forward.15} parent=47 // pred_check
        %p346 = pneg %p89
      $region58: #{transformer_forward.15} parent=47 // pred_check_branch
        %348 = sbr.rel (%p346) target = $region60
      $region59: #{transformer_forward.15} parent=47 // pred_region
        %p349 = scmp.lt.s32.totalorder %s17, 1
        %s350 = scalar_select %p349, %s17, 1
        %s351 = scalar_lea.vmem %s2, %s350
      $region60: #{transformer_forward.15} parent=47 // pred_fallthru
        _
    $region48: #{transformer_forward.15} parent=5 // pred_fallthru
      _
    %p352 = scmp.le.s32.totalorder 1, %s17
    %p353 = scmp.lt.s32.totalorder %s17, 3
    %p354 = pnand %p352, %p353
    %p355 = pneg %p354
    // Predicated region
    $region61: #{transformer_forward.15} parent=5 // pred_check
      _
    $region62: #{transformer_forward.15} parent=5 // pred_check_branch
      %357 = sbr.rel (%p354) target = $region64
    $region63: #{transformer_forward.15} parent=5 // pred_region
      %s358 = ssub.s32 %s17, 1
      %p359 = scmp.lt.s32.totalorder %s22, 1
      %s360 = scalar_select %p359, %s22, 1
      %s361 = smul.addr %s360, 8
      %s362 = scalar_lea.vmem %s0, %s361
      %p363 = pneg %p43
      %p364 = pneg %p40
      %p365 = scmp.lt.s32.totalorder %s22, 1
      %s366 = scalar_select %p365, %s22, 1
      %s367 = smul.addr %s366, 8
      %s368 = scalar_lea.vmem %s1, %s367
      %p369 = pneg %p69
      %p370 = pneg %p66
      %p371 = scmp.lt.s32.totalorder %s22, 1
      %s372 = scalar_select %p371, %s22, 1
      %s373 = scalar_lea.vmem %s2, %s372
      %p374 = pneg %p95
      %p375 = pneg %p92
      %p376 = pneg %p116
      %p377 = pneg %p113
      %p378 = pneg %p137
      %p379 = pneg %p134
      %p380 = pneg %p158
      %p381 = pneg %p155
      %p382 = pneg %p179
      %p383 = pneg %p176
      %p384 = pneg %p200
      %p385 = pneg %p197
      %p386 = pneg %p221
      %p387 = pneg %p218
      %p388 = pneg %p242
      %p389 = pneg %p239
      %p390 = pneg %p263
      %p391 = pneg %p260
      %p392 = pneg %p289
      %p393 = pneg %p286
      %p394 = scmp.lt.s32.totalorder %s22, 1
      %s395 = scalar_select %p394, %s22, 1
      %s396 = smul.addr %s395, 8
      %s397 = scalar_lea.vmem %s11, %s396
      %p398 = scmp.lt.s32.totalorder %s22, 1
      %s399 = scalar_select %p398, %s22, 1
      %s400 = smul.addr %s399, 8
      %s401 = scalar_lea.vmem %s0, %s400
      %p402 = scmp.lt.s32.totalorder %s22, 1
      %s403 = scalar_select %p402, %s22, 1
      %s404 = smul.addr %s403, 8
      %s405 = scalar_lea.vmem %s1, %s404
      %p406 = scmp.lt.s32.totalorder %s22, 1
      %s407 = scalar_select %p406, %s22, 1
      %s408 = scalar_lea.vmem %s2, %s407
      %p409 = scmp.lt.s32.totalorder %s22, 1
      %s410 = scalar_select %p409, %s22, 1
      %s411 = smul.addr %s410, 8
      %s412 = scalar_lea.vmem %s11, %s411
      %v414 = vld [vmem:[%s401] sm:$0xff]
      %v415 = vld [vmem:[%s405] sm:$0xff]
      %v416 = vpack.c.bf16 %v414, %v414
      %v417 = vld [vmem:[%s3] sm:$0xf]
      %v418 = vld [vmem:[%s3 + $0x4] sm:$0xf]
      %v419 = vld [vmem:[%s3 + $0x8] sm:$0xf]
      %v420 = vld [vmem:[%s3 + $0xc] sm:$0xf]
      %v421 = vld [vmem:[%s4] sm:$0x1]
      %v423 = vlaneseq
      %v424 = vshrl.u32 %v423, 7
      %v425 = vsub.s32 0, %v424
      %v426 = vrot.slane %v421, %v425
      %v432 = vunpack.c.l.b16 %v417
      %v433 = vunpack.c.l.b16 %v418
      %v434 = vunpack.c.l.b16 %v419
      %v435 = vunpack.c.l.b16 %v420
      %v436 = vpack.c.b16 %v433, %v432
      %v437 = vpack.c.b16 %v435, %v434
      %vm440 = vcmask 261120
      %v442 = vsel %vm440, %v416, 0
      %444 = vmatprep.subr.bf16.mxu0 0
      %445 = vmatpush1.bf16.msra.mxu0 %v436
      %446 = vmatprep.subr.bf16.mxu0 0
      %447 = vmatpush1.bf16.msra.mxu0 %v437
      %448 = vmatprep.subr.bf16.mxu0 0
      %449 = vmatpush1.bf16.msra.mxu0 0
      %450 = vmatprep.subr.bf16.mxu0 0
      %451 = vmatpush1.bf16.msra.mxu0 0
      %452 = vmatprep.subr.bf16.mxu0 0
      %453 = vmatpush1.bf16.msra.mxu0 0
      %454 = vmatprep.subr.bf16.mxu0 0
      %455 = vmatpush1.bf16.msra.mxu0 0
      %456 = vmatprep.subr.bf16.mxu0 0
      %457 = vmatpush1.bf16.msra.mxu0 0
      %458 = vmatprep.subr.bf16.mxu0 0
      %459 = vmatpush1.bf16.msra.mxu0 0
      %460 = vmatprep.subr.bf16.mxu0 0
      %461 = vmatpush1.bf16.msra.mxu0 0
      %462 = vmatprep.subr.bf16.mxu0 0
      %463 = vmatpush1.bf16.msra.mxu0 0
      %464 = vmatprep.subr.bf16.mxu0 0
      %465 = vmatpush1.bf16.msra.mxu0 0
      %466 = vmatprep.subr.bf16.mxu0 0
      %467 = vmatpush1.bf16.msra.mxu0 0
      %468 = vmatprep.subr.bf16.mxu0 0
      %469 = vmatpush1.bf16.msra.mxu0 0
      %470 = vmatprep.subr.bf16.mxu0 0
      %471 = vmatpush1.bf16.msra.mxu0 0
      %472 = vmatprep.subr.bf16.mxu0 0
      %473 = vmatpush1.bf16.msra.mxu0 0
      %474 = vmatprep.subr.bf16.mxu0 0
      %475 = vmatpush1.bf16.msra.mxu0 0
      %476 = vmatprep.mubr.bf16.mxu0 0
      %477 = vmatmul.mubr.bf16.gmra.mrb[0].mxu0 %v442
      %v478 = vpop.f32.mrb[0].mxu0
      %v479 = vadd.f32 %v426, %v478
      %v480 = vpop.f32.mrb[0].mxu0
      %v481 = vpop.f32.mrb[0].mxu0
      %v482 = vpop.f32.mrb[0].mxu0
      %483 = vdwg.mxu0
      %v484 = vpack.c.bf16 %v415, %v415
      %v485 = vld [vmem:[%s5] sm:$0xf]
      %v486 = vld [vmem:[%s5 + $0x4] sm:$0xf]
      %v487 = vld [vmem:[%s5 + $0x8] sm:$0xf]
      %v488 = vld [vmem:[%s5 + $0xc] sm:$0xf]
      %v489 = vld [vmem:[%s6] sm:$0x1]
      %v491 = vlaneseq
      %v492 = vshrl.u32 %v491, 7
      %v493 = vsub.s32 0, %v492
      %v494 = vrot.slane %v489, %v493
      %v500 = vunpack.c.l.b16 %v485
      %v501 = vunpack.c.l.b16 %v486
      %v502 = vunpack.c.l.b16 %v487
      %v503 = vunpack.c.l.b16 %v488
      %v504 = vpack.c.b16 %v501, %v500
      %v505 = vpack.c.b16 %v503, %v502
      %v509 = vsel %vm440, %v484, 0
      %511 = vmatprep.subr.bf16.mxu0 0
      %512 = vmatpush1.bf16.msra.mxu0 %v504
      %513 = vmatprep.subr.bf16.mxu0 0
      %514 = vmatpush1.bf16.msra.mxu0 %v505
      %515 = vmatprep.subr.bf16.mxu0 0
      %516 = vmatpush1.bf16.msra.mxu0 0
      %517 = vmatprep.subr.bf16.mxu0 0
      %518 = vmatpush1.bf16.msra.mxu0 0
      %519 = vmatprep.subr.bf16.mxu0 0
      %520 = vmatpush1.bf16.msra.mxu0 0
      %521 = vmatprep.subr.bf16.mxu0 0
      %522 = vmatpush1.bf16.msra.mxu0 0
      %523 = vmatprep.subr.bf16.mxu0 0
      %524 = vmatpush1.bf16.msra.mxu0 0
      %525 = vmatprep.subr.bf16.mxu0 0
      %526 = vmatpush1.bf16.msra.mxu0 0
      %527 = vmatprep.subr.bf16.mxu0 0
      %528 = vmatpush1.bf16.msra.mxu0 0
      %529 = vmatprep.subr.bf16.mxu0 0
      %530 = vmatpush1.bf16.msra.mxu0 0
      %531 = vmatprep.subr.bf16.mxu0 0
      %532 = vmatpush1.bf16.msra.mxu0 0
      %533 = vmatprep.subr.bf16.mxu0 0
      %534 = vmatpush1.bf16.msra.mxu0 0
      %535 = vmatprep.subr.bf16.mxu0 0
      %536 = vmatpush1.bf16.msra.mxu0 0
      %537 = vmatprep.subr.bf16.mxu0 0
      %538 = vmatpush1.bf16.msra.mxu0 0
      %539 = vmatprep.subr.bf16.mxu0 0
      %540 = vmatpush1.bf16.msra.mxu0 0
      %541 = vmatprep.subr.bf16.mxu0 0
      %542 = vmatpush1.bf16.msra.mxu0 0
      %543 = vmatprep.mubr.bf16.mxu0 0
      %544 = vmatmul.mubr.bf16.gmra.mrb[0].mxu0 %v509
      %v545 = vpop.f32.mrb[0].mxu0
      %v546 = vadd.f32 %v494, %v545
      %v547 = vpop.f32.mrb[0].mxu0
      %v548 = vpop.f32.mrb[0].mxu0
      %v549 = vpop.f32.mrb[0].mxu0
      %550 = vdwg.mxu0
      %v551 = vld [vmem:[%s408] sm:$0x1]
      %vm552 = vcmp.gt.f32.partialorder %v551, 0.0
      %v553 = vsel %vm552, 0.0, -1e+09
      %v555 = vlaneseq
      %v556 = vshrl.u32 %v555, 7
      %v557 = vsub.s32 0, %v556
      %v558 = vrot.slane %v553, %v557
      %v560 = vlaneseq
      %v561 = vshrl.u32 %v560, 7
      %v562 = vlaneseq
      %v563 = vand.u32 %v562, 127
      %vm564 = vcmp.ge.s32.totalorder %v561, %v563
      %v565 = vsel %vm564, %v558, -1e+09
      %v566 = vpack.c.bf16 %v479, %v479
      %v567 = vpack.c.bf16 %v546, %v546
      %vm568 = vcmask 64512
      %v570 = vsel %vm568, %v566, 0
      %v573 = vsel %vm568, %v567, 0
      %575 = vmatprep.subr.bf16.mxu0 0
      %576 = vmatpush1.bf16.xpose.msra.mxu0 %v573
      %577 = vmatprep.subr.bf16.mxu0 0
      %578 = vmatpush1.bf16.xpose.msra.mxu0 0
      %579 = vmatprep.subr.bf16.mxu0 0
      %580 = vmatpush1.bf16.xpose.msra.mxu0 0
      %581 = vmatprep.subr.bf16.mxu0 0
      %582 = vmatpush1.bf16.xpose.msra.mxu0 0
      %583 = vmatprep.subr.bf16.mxu0 0
      %584 = vmatpush1.bf16.xpose.msra.mxu0 0
      %585 = vmatprep.subr.bf16.mxu0 0
      %586 = vmatpush1.bf16.xpose.msra.mxu0 0
      %587 = vmatprep.subr.bf16.mxu0 0
      %588 = vmatpush1.bf16.xpose.msra.mxu0 0
      %589 = vmatprep.subr.bf16.mxu0 0
      %590 = vmatpush1.bf16.xpose.msra.mxu0 0
      %591 = vmatprep.subr.bf16.mxu0 0
      %592 = vmatpush1.bf16.xpose.msra.mxu0 0
      %593 = vmatprep.subr.bf16.mxu0 0
      %594 = vmatpush1.bf16.xpose.msra.mxu0 0
      %595 = vmatprep.subr.bf16.mxu0 0
      %596 = vmatpush1.bf16.xpose.msra.mxu0 0
      %597 = vmatprep.subr.bf16.mxu0 0
      %598 = vmatpush1.bf16.xpose.msra.mxu0 0
      %599 = vmatprep.subr.bf16.mxu0 0
      %600 = vmatpush1.bf16.xpose.msra.mxu0 0
      %601 = vmatprep.subr.bf16.mxu0 0
      %602 = vmatpush1.bf16.xpose.msra.mxu0 0
      %603 = vmatprep.subr.bf16.mxu0 0
      %604 = vmatpush1.bf16.xpose.msra.mxu0 0
      %605 = vmatprep.subr.bf16.mxu0 0
      %606 = vmatpush1.bf16.xpose.msra.mxu0 0
      %607 = vmatprep.mubr.bf16.mxu0 0
      %608 = vmatmul.mubr.bf16.gmra.mrb[0].mxu0 %v570
      %v609 = vpop.f32.mrb[0].mxu0
      %v610 = vadd.f32 0.0, %v609
      %v611 = vpop.f32.mrb[0].mxu0
      %v612 = vpop.f32.mrb[0].mxu0
      %v613 = vpop.f32.mrb[0].mxu0
      %614 = vdwg.mxu0
      %v615 = vmul.f32 %v610, 0.35355338
      %v616 = vadd.f32 %v615, %v565
      %v617 = vsel %vm568, %v616, -inf
      %618 = vmax.xlane.f32.xlu0 %v617
      %v619 = vpop.xlane.xlu0 %618
      %v620 = vsub.f32 %v616, %v619
      %v621 = vmul.f32 %v620, 1.442695
      %v622 = vpow.pop %v621
      %v623 = vsel %vm568, %v622, 0.0
      %624 = vadd.xlane.f32.xlu0 %v623
      %v625 = vpop.xlane.xlu0 %624
      %v626 = vpack.c.bf16 %v622, %v622
      %628 = vrot.lane.b32.xlu0 %v567, 96
      %v629 = vpop.permute.xlu0 %628
      %v631 = vsel %vm568, %v626, 0
      %vm633 = vcmask 1043456
      %v635 = vsel %vm633, %v629, 0
      %637 = vmatprep.subr.bf16.mxu0 0
      %638 = vmatpush1.bf16.msra.mxu0 %v635
      %639 = vmatprep.subr.bf16.mxu0 0
      %640 = vmatpush1.bf16.msra.mxu0 0
      %641 = vmatprep.subr.bf16.mxu0 0
      %642 = vmatpush1.bf16.msra.mxu0 0
      %643 = vmatprep.subr.bf16.mxu0 0
      %644 = vmatpush1.bf16.msra.mxu0 0
      %645 = vmatprep.subr.bf16.mxu0 0
      %646 = vmatpush1.bf16.msra.mxu0 0
      %647 = vmatprep.subr.bf16.mxu0 0
      %648 = vmatpush1.bf16.msra.mxu0 0
      %649 = vmatprep.subr.bf16.mxu0 0
      %650 = vmatpush1.bf16.msra.mxu0 0
      %651 = vmatprep.subr.bf16.mxu0 0
      %652 = vmatpush1.bf16.msra.mxu0 0
      %653 = vmatprep.subr.bf16.mxu0 0
      %654 = vmatpush1.bf16.msra.mxu0 0
      %655 = vmatprep.subr.bf16.mxu0 0
      %656 = vmatpush1.bf16.msra.mxu0 0
      %657 = vmatprep.subr.bf16.mxu0 0
      %658 = vmatpush1.bf16.msra.mxu0 0
      %659 = vmatprep.subr.bf16.mxu0 0
      %660 = vmatpush1.bf16.msra.mxu0 0
      %661 = vmatprep.subr.bf16.mxu0 0
      %662 = vmatpush1.bf16.msra.mxu0 0
      %663 = vmatprep.subr.bf16.mxu0 0
      %664 = vmatpush1.bf16.msra.mxu0 0
      %665 = vmatprep.subr.bf16.mxu0 0
      %666 = vmatpush1.bf16.msra.mxu0 0
      %667 = vmatprep.subr.bf16.mxu0 0
      %668 = vmatpush1.bf16.msra.mxu0 0
      %669 = vmatprep.mubr.bf16.mxu0 0
      %670 = vmatmul.mubr.bf16.gmra.mrb[0].mxu0 %v631
      %v671 = vpop.f32.mrb[0].mxu0
      %v672 = vadd.f32 0.0, %v671
      %v673 = vpop.f32.mrb[0].mxu0
      %v674 = vpop.f32.mrb[0].mxu0
      %v675 = vpop.f32.mrb[0].mxu0
      %676 = vdwg.mxu0
      %v677 = vrcp.pop %v625
      %v678 = vmul.f32 %v672, %v677
      %v679 = vpack.c.bf16 %v678, %v678
      %v680 = vld [vmem:[%s7] sm:$0xf]
      %682 = vrot.lane.b32.xlu0 %v566, 120
      %v683 = vpop.permute.xlu0 %682
      %684 = vrot.lane.b32.xlu0 %v567, 120
      %v685 = vpop.permute.xlu0 %684
      %v687 = vsel %vm568, %v683, 0
      %v690 = vsel %vm568, %v685, 0
      %692 = vmatprep.subr.bf16.mxu0 0
      %693 = vmatpush1.bf16.xpose.msra.mxu0 %v690
      %694 = vmatprep.subr.bf16.mxu0 0
      %695 = vmatpush1.bf16.xpose.msra.mxu0 0
      %696 = vmatprep.subr.bf16.mxu0 0
      %697 = vmatpush1.bf16.xpose.msra.mxu0 0
      %698 = vmatprep.subr.bf16.mxu0 0
      %699 = vmatpush1.bf16.xpose.msra.mxu0 0
      %700 = vmatprep.subr.bf16.mxu0 0
      %701 = vmatpush1.bf16.xpose.msra.mxu0 0
      %702 = vmatprep.subr.bf16.mxu0 0
      %703 = vmatpush1.bf16.xpose.msra.mxu0 0
      %704 = vmatprep.subr.bf16.mxu0 0
      %705 = vmatpush1.bf16.xpose.msra.mxu0 0
      %706 = vmatprep.subr.bf16.mxu0 0
      %707 = vmatpush1.bf16.xpose.msra.mxu0 0
      %708 = vmatprep.subr.bf16.mxu0 0
      %709 = vmatpush1.bf16.xpose.msra.mxu0 0
      %710 = vmatprep.subr.bf16.mxu0 0
      %711 = vmatpush1.bf16.xpose.msra.mxu0 0
      %712 = vmatprep.subr.bf16.mxu0 0
      %713 = vmatpush1.bf16.xpose.msra.mxu0 0
      %714 = vmatprep.subr.bf16.mxu0 0
      %715 = vmatpush1.bf16.xpose.msra.mxu0 0
      %716 = vmatprep.subr.bf16.mxu0 0
      %717 = vmatpush1.bf16.xpose.msra.mxu0 0
      %718 = vmatprep.subr.bf16.mxu0 0
      %719 = vmatpush1.bf16.xpose.msra.mxu0 0
      %720 = vmatprep.subr.bf16.mxu0 0
      %721 = vmatpush1.bf16.xpose.msra.mxu0 0
      %722 = vmatprep.subr.bf16.mxu0 0
      %723 = vmatpush1.bf16.xpose.msra.mxu0 0
      %724 = vmatprep.mubr.bf16.mxu0 0
      %725 = vmatmul.mubr.bf16.gmra.mrb[0].mxu0 %v687
      %v726 = vpop.f32.mrb[0].mxu0
      %v727 = vadd.f32 0.0, %v726
      %v728 = vpop.f32.mrb[0].mxu0
      %v729 = vpop.f32.mrb[0].mxu0
      %v730 = vpop.f32.mrb[0].mxu0
      %731 = vdwg.mxu0
      %v732 = vmul.f32 %v727, 0.35355338
      %v733 = vadd.f32 %v732, %v565
      %v734 = vsel %vm568, %v733, -inf
      %735 = vmax.xlane.f32.xlu0 %v734
      %v736 = vpop.xlane.xlu0 %735
      %v737 = vsub.f32 %v733, %v736
      %v738 = vmul.f32 %v737, 1.442695
      %v739 = vpow.pop %v738
      %v740 = vsel %vm568, %v739, 0.0
      %741 = vadd.xlane.f32.xlu0 %v740
      %v742 = vpop.xlane.xlu0 %741
      %v743 = vpack.c.bf16 %v739, %v739
      %744 = vrot.lane.b32.xlu0 %v567, 88
      %v745 = vpop.permute.xlu0 %744
      %v747 = vsel %vm568, %v743, 0
      %v750 = vsel %vm633, %v745, 0
      %752 = vmatprep.subr.bf16.mxu0 0
      %753 = vmatpush1.bf16.msra.mxu0 %v750
      %754 = vmatprep.subr.bf16.mxu0 0
      %755 = vmatpush1.bf16.msra.mxu0 0
      %756 = vmatprep.subr.bf16.mxu0 0
      %757 = vmatpush1.bf16.msra.mxu0 0
      %758 = vmatprep.subr.bf16.mxu0 0
      %759 = vmatpush1.bf16.msra.mxu0 0
      %760 = vmatprep.subr.bf16.mxu0 0
      %761 = vmatpush1.bf16.msra.mxu0 0
      %762 = vmatprep.subr.bf16.mxu0 0
      %763 = vmatpush1.bf16.msra.mxu0 0
      %764 = vmatprep.subr.bf16.mxu0 0
      %765 = vmatpush1.bf16.msra.mxu0 0
      %766 = vmatprep.subr.bf16.mxu0 0
      %767 = vmatpush1.bf16.msra.mxu0 0
      %768 = vmatprep.subr.bf16.mxu0 0
      %769 = vmatpush1.bf16.msra.mxu0 0
      %770 = vmatprep.subr.bf16.mxu0 0
      %771 = vmatpush1.bf16.msra.mxu0 0
      %772 = vmatprep.subr.bf16.mxu0 0
      %773 = vmatpush1.bf16.msra.mxu0 0
      %774 = vmatprep.subr.bf16.mxu0 0
      %775 = vmatpush1.bf16.msra.mxu0 0
      %776 = vmatprep.subr.bf16.mxu0 0
      %777 = vmatpush1.bf16.msra.mxu0 0
      %778 = vmatprep.subr.bf16.mxu0 0
      %779 = vmatpush1.bf16.msra.mxu0 0
      %780 = vmatprep.subr.bf16.mxu0 0
      %781 = vmatpush1.bf16.msra.mxu0 0
      %782 = vmatprep.subr.bf16.mxu0 0
      %783 = vmatpush1.bf16.msra.mxu0 0
      %784 = vmatprep.mubr.bf16.mxu0 0
      %785 = vmatmul.mubr.bf16.gmra.mrb[0].mxu0 %v747
      %v786 = vpop.f32.mrb[0].mxu0
      %v787 = vadd.f32 0.0, %v786
      %v788 = vpop.f32.mrb[0].mxu0
      %v789 = vpop.f32.mrb[0].mxu0
      %v790 = vpop.f32.mrb[0].mxu0
      %791 = vdwg.mxu0
      %v792 = vrcp.pop %v742
      %v793 = vmul.f32 %v787, %v792
      %v794 = vpack.c.bf16 %v793, %v793
      %v795 = vld [vmem:[%s7 + $0x4] sm:$0xf]
      %v797 = vsel %vm568, %v794, 0
      %v800 = vsel %vm633, %v795, 0
      %802 = vmatprep.subr.bf16.mxu0 0
      %803 = vmatpush1.bf16.msra.mxu0 %v800
      %804 = vmatprep.subr.bf16.mxu0 0
      %805 = vmatpush1.bf16.msra.mxu0 0
      %806 = vmatprep.subr.bf16.mxu0 0
      %807 = vmatpush1.bf16.msra.mxu0 0
      %808 = vmatprep.subr.bf16.mxu0 0
      %809 = vmatpush1.bf16.msra.mxu0 0
      %810 = vmatprep.subr.bf16.mxu0 0
      %811 = vmatpush1.bf16.msra.mxu0 0
      %812 = vmatprep.subr.bf16.mxu0 0
      %813 = vmatpush1.bf16.msra.mxu0 0
      %814 = vmatprep.subr.bf16.mxu0 0
      %815 = vmatpush1.bf16.msra.mxu0 0
      %816 = vmatprep.subr.bf16.mxu0 0
      %817 = vmatpush1.bf16.msra.mxu0 0
      %818 = vmatprep.subr.bf16.mxu0 0
      %819 = vmatpush1.bf16.msra.mxu0 0
      %820 = vmatprep.subr.bf16.mxu0 0
      %821 = vmatpush1.bf16.msra.mxu0 0
      %822 = vmatprep.subr.bf16.mxu0 0
      %823 = vmatpush1.bf16.msra.mxu0 0
      %824 = vmatprep.subr.bf16.mxu0 0
      %825 = vmatpush1.bf16.msra.mxu0 0
      %826 = vmatprep.subr.bf16.mxu0 0
      %827 = vmatpush1.bf16.msra.mxu0 0
      %828 = vmatprep.subr.bf16.mxu0 0
      %829 = vmatpush1.bf16.msra.mxu0 0
      %830 = vmatprep.subr.bf16.mxu0 0
      %831 = vmatpush1.bf16.msra.mxu0 0
      %832 = vmatprep.subr.bf16.mxu0 0
      %833 = vmatpush1.bf16.msra.mxu0 0
      %834 = vmatprep.mubr.bf16.mxu0 0
      %835 = vmatmul.mubr.bf16.gmra.mrb[0].mxu0 %v797
      %v836 = vpop.f32.mrb[0].mxu0
      %v837 = vadd.f32 0.0, %v836
      %v838 = vpop.f32.mrb[0].mxu0
      %v839 = vpop.f32.mrb[0].mxu0
      %v840 = vpop.f32.mrb[0].mxu0
      %841 = vdwg.mxu0
      %v843 = vsel %vm568, %v679, 0
      %v846 = vsel %vm633, %v680, 0
      %848 = vmatprep.subr.bf16.mxu0 0
      %849 = vmatpush1.bf16.msra.mxu0 %v846
      %850 = vmatprep.subr.bf16.mxu0 0
      %851 = vmatpush1.bf16.msra.mxu0 0
      %852 = vmatprep.subr.bf16.mxu0 0
      %853 = vmatpush1.bf16.msra.mxu0 0
      %854 = vmatprep.subr.bf16.mxu0 0
      %855 = vmatpush1.bf16.msra.mxu0 0
      %856 = vmatprep.subr.bf16.mxu0 0
      %857 = vmatpush1.bf16.msra.mxu0 0
      %858 = vmatprep.subr.bf16.mxu0 0
      %859 = vmatpush1.bf16.msra.mxu0 0
      %860 = vmatprep.subr.bf16.mxu0 0
      %861 = vmatpush1.bf16.msra.mxu0 0
      %862 = vmatprep.subr.bf16.mxu0 0
      %863 = vmatpush1.bf16.msra.mxu0 0
      %864 = vmatprep.subr.bf16.mxu0 0
      %865 = vmatpush1.bf16.msra.mxu0 0
      %866 = vmatprep.subr.bf16.mxu0 0
      %867 = vmatpush1.bf16.msra.mxu0 0
      %868 = vmatprep.subr.bf16.mxu0 0
      %869 = vmatpush1.bf16.msra.mxu0 0
      %870 = vmatprep.subr.bf16.mxu0 0
      %871 = vmatpush1.bf16.msra.mxu0 0
      %872 = vmatprep.subr.bf16.mxu0 0
      %873 = vmatpush1.bf16.msra.mxu0 0
      %874 = vmatprep.subr.bf16.mxu0 0
      %875 = vmatpush1.bf16.msra.mxu0 0
      %876 = vmatprep.subr.bf16.mxu0 0
      %877 = vmatpush1.bf16.msra.mxu0 0
      %878 = vmatprep.subr.bf16.mxu0 0
      %879 = vmatpush1.bf16.msra.mxu0 0
      %880 = vmatprep.mubr.bf16.mxu0 0
      %881 = vmatmul.mubr.bf16.gmra.mrb[0].mxu0 %v843
      %v882 = vpop.f32.mrb[0].mxu0
      %v883 = vadd.f32 %v837, %v882
      %v884 = vpop.f32.mrb[0].mxu0
      %v885 = vpop.f32.mrb[0].mxu0
      %v886 = vpop.f32.mrb[0].mxu0
      %887 = vdwg.mxu0
      %888 = vrot.lane.b32.xlu0 %v566, 112
      %v889 = vpop.permute.xlu0 %888
      %890 = vrot.lane.b32.xlu0 %v567, 112
      %v891 = vpop.permute.xlu0 %890
      %v893 = vsel %vm568, %v889, 0
      %v896 = vsel %vm568, %v891, 0
      %898 = vmatprep.subr.bf16.mxu0 0
      %899 = vmatpush1.bf16.xpose.msra.mxu0 %v896
      %900 = vmatprep.subr.bf16.mxu0 0
      %901 = vmatpush1.bf16.xpose.msra.mxu0 0
      %902 = vmatprep.subr.bf16.mxu0 0
      %903 = vmatpush1.bf16.xpose.msra.mxu0 0
      %904 = vmatprep.subr.bf16.mxu0 0
      %905 = vmatpush1.bf16.xpose.msra.mxu0 0
      %906 = vmatprep.subr.bf16.mxu0 0
      %907 = vmatpush1.bf16.xpose.msra.mxu0 0
      %908 = vmatprep.subr.bf16.mxu0 0
      %909 = vmatpush1.bf16.xpose.msra.mxu0 0
      %910 = vmatprep.subr.bf16.mxu0 0
      %911 = vmatpush1.bf16.xpose.msra.mxu0 0
      %912 = vmatprep.subr.bf16.mxu0 0
      %913 = vmatpush1.bf16.xpose.msra.mxu0 0
      %914 = vmatprep.subr.bf16.mxu0 0
      %915 = vmatpush1.bf16.xpose.msra.mxu0 0
      %916 = vmatprep.subr.bf16.mxu0 0
      %917 = vmatpush1.bf16.xpose.msra.mxu0 0
      %918 = vmatprep.subr.bf16.mxu0 0
      %919 = vmatpush1.bf16.xpose.msra.mxu0 0
      %920 = vmatprep.subr.bf16.mxu0 0
      %921 = vmatpush1.bf16.xpose.msra.mxu0 0
      %922 = vmatprep.subr.bf16.mxu0 0
      %923 = vmatpush1.bf16.xpose.msra.mxu0 0
      %924 = vmatprep.subr.bf16.mxu0 0
      %925 = vmatpush1.bf16.xpose.msra.mxu0 0
      %926 = vmatprep.subr.bf16.mxu0 0
      %927 = vmatpush1.bf16.xpose.msra.mxu0 0
      %928 = vmatprep.subr.bf16.mxu0 0
      %929 = vmatpush1.bf16.xpose.msra.mxu0 0
      %930 = vmatprep.mubr.bf16.mxu0 0
      %931 = vmatmul.mubr.bf16.gmra.mrb[0].mxu0 %v893
      %v932 = vpop.f32.mrb[0].mxu0
      %v933 = vadd.f32 0.0, %v932
      %v934 = vpop.f32.mrb[0].mxu0
      %v935 = vpop.f32.mrb[0].mxu0
      %v936 = vpop.f32.mrb[0].mxu0
      %937 = vdwg.mxu0
      %v938 = vmul.f32 %v933, 0.35355338
      %v939 = vadd.f32 %v938, %v565
      %v940 = vsel %vm568, %v939, -inf
      %941 = vmax.xlane.f32.xlu0 %v940
      %v942 = vpop.xlane.xlu0 %941
      %v943 = vsub.f32 %v939, %v942
      %v944 = vmul.f32 %v943, 1.442695
      %v945 = vpow.pop %v944
      %v946 = vsel %vm568, %v945, 0.0
      %947 = vadd.xlane.f32.xlu0 %v946
      %v948 = vpop.xlane.xlu0 %947
      %v949 = vpack.c.bf16 %v945, %v945
      %950 = vrot.lane.b32.xlu0 %v567, 80
      %v951 = vpop.permute.xlu0 %950
      %v953 = vsel %vm568, %v949, 0
      %v956 = vsel %vm633, %v951, 0
      %958 = vmatprep.subr.bf16.mxu0 0
      %959 = vmatpush1.bf16.msra.mxu0 %v956
      %960 = vmatprep.subr.bf16.mxu0 0
      %961 = vmatpush1.bf16.msra.mxu0 0
      %962 = vmatprep.subr.bf16.mxu0 0
      %963 = vmatpush1.bf16.msra.mxu0 0
      %964 = vmatprep.subr.bf16.mxu0 0
      %965 = vmatpush1.bf16.msra.mxu0 0
      %966 = vmatprep.subr.bf16.mxu0 0
      %967 = vmatpush1.bf16.msra.mxu0 0
      %968 = vmatprep.subr.bf16.mxu0 0
      %969 = vmatpush1.bf16.msra.mxu0 0
      %970 = vmatprep.subr.bf16.mxu0 0
      %971 = vmatpush1.bf16.msra.mxu0 0
      %972 = vmatprep.subr.bf16.mxu0 0
      %973 = vmatpush1.bf16.msra.mxu0 0
      %974 = vmatprep.subr.bf16.mxu0 0
      %975 = vmatpush1.bf16.msra.mxu0 0
      %976 = vmatprep.subr.bf16.mxu0 0
      %977 = vmatpush1.bf16.msra.mxu0 0
      %978 = vmatprep.subr.bf16.mxu0 0
      %979 = vmatpush1.bf16.msra.mxu0 0
      %980 = vmatprep.subr.bf16.mxu0 0
      %981 = vmatpush1.bf16.msra.mxu0 0
      %982 = vmatprep.subr.bf16.mxu0 0
      %983 = vmatpush1.bf16.msra.mxu0 0
      %984 = vmatprep.subr.bf16.mxu0 0
      %985 = vmatpush1.bf16.msra.mxu0 0
      %986 = vmatprep.subr.bf16.mxu0 0
      %987 = vmatpush1.bf16.msra.mxu0 0
      %988 = vmatprep.subr.bf16.mxu0 0
      %989 = vmatpush1.bf16.msra.mxu0 0
      %990 = vmatprep.mubr.bf16.mxu0 0
      %991 = vmatmul.mubr.bf16.gmra.mrb[0].mxu0 %v953
      %v992 = vpop.f32.mrb[0].mxu0
      %v993 = vadd.f32 0.0, %v992
      %v994 = vpop.f32.mrb[0].mxu0
      %v995 = vpop.f32.mrb[0].mxu0
      %v996 = vpop.f32.mrb[0].mxu0
      %997 = vdwg.mxu0
      %v998 = vrcp.pop %v948
      %v999 = vmul.f32 %v993, %v998
      %v1000 = vpack.c.bf16 %v999, %v999
      %v1001 = vld [vmem:[%s7 + $0x8] sm:$0xf]
      %v1003 = vsel %vm568, %v1000, 0
      %v1006 = vsel %vm633, %v1001, 0
      %1008 = vmatprep.subr.bf16.mxu0 0
      %1009 = vmatpush1.bf16.msra.mxu0 %v1006
      %1010 = vmatprep.subr.bf16.mxu0 0
      %1011 = vmatpush1.bf16.msra.mxu0 0
      %1012 = vmatprep.subr.bf16.mxu0 0
      %1013 = vmatpush1.bf16.msra.mxu0 0
      %1014 = vmatprep.subr.bf16.mxu0 0
      %1015 = vmatpush1.bf16.msra.mxu0 0
      %1016 = vmatprep.subr.bf16.mxu0 0
      %1017 = vmatpush1.bf16.msra.mxu0 0
      %1018 = vmatprep.subr.bf16.mxu0 0
      %1019 = vmatpush1.bf16.msra.mxu0 0
      %1020 = vmatprep.subr.bf16.mxu0 0
      %1021 = vmatpush1.bf16.msra.mxu0 0
      %1022 = vmatprep.subr.bf16.mxu0 0
      %1023 = vmatpush1.bf16.msra.mxu0 0
      %1024 = vmatprep.subr.bf16.mxu0 0
      %1025 = vmatpush1.bf16.msra.mxu0 0
      %1026 = vmatprep.subr.bf16.mxu0 0
      %1027 = vmatpush1.bf16.msra.mxu0 0
      %1028 = vmatprep.subr.bf16.mxu0 0
      %1029 = vmatpush1.bf16.msra.mxu0 0
      %1030 = vmatprep.subr.bf16.mxu0 0
      %1031 = vmatpush1.bf16.msra.mxu0 0
      %1032 = vmatprep.subr.bf16.mxu0 0
      %1033 = vmatpush1.bf16.msra.mxu0 0
      %1034 = vmatprep.subr.bf16.mxu0 0
      %1035 = vmatpush1.bf16.msra.mxu0 0
      %1036 = vmatprep.subr.bf16.mxu0 0
      %1037 = vmatpush1.bf16.msra.mxu0 0
      %1038 = vmatprep.subr.bf16.mxu0 0
      %1039 = vmatpush1.bf16.msra.mxu0 0
      %1040 = vmatprep.mubr.bf16.mxu0 0
      %1041 = vmatmul.mubr.bf16.gmra.mrb[0].mxu0 %v1003
      %v1042 = vpop.f32.mrb[0].mxu0
      %v1043 = vadd.f32 0.0, %v1042
      %v1044 = vpop.f32.mrb[0].mxu0
      %v1045 = vpop.f32.mrb[0].mxu0
      %v1046 = vpop.f32.mrb[0].mxu0
      %1047 = vdwg.mxu0
      %v1048 = vadd.f32 %v883, %v1043
      %1049 = vrot.lane.b32.xlu0 %v566, 104
      %v1050 = vpop.permute.xlu0 %1049
      %1051 = vrot.lane.b32.xlu0 %v567, 104
      %v1052 = vpop.permute.xlu0 %1051
      %v1054 = vsel %vm568, %v1050, 0
      %v1057 = vsel %vm568, %v1052, 0
      %1059 = vmatprep.subr.bf16.mxu0 0
      %1060 = vmatpush1.bf16.xpose.msra.mxu0 %v1057
      %1061 = vmatprep.subr.bf16.mxu0 0
      %1062 = vmatpush1.bf16.xpose.msra.mxu0 0
      %1063 = vmatprep.subr.bf16.mxu0 0
      %1064 = vmatpush1.bf16.xpose.msra.mxu0 0
      %1065 = vmatprep.subr.bf16.mxu0 0
      %1066 = vmatpush1.bf16.xpose.msra.mxu0 0
      %1067 = vmatprep.subr.bf16.mxu0 0
      %1068 = vmatpush1.bf16.xpose.msra.mxu0 0
      %1069 = vmatprep.subr.bf16.mxu0 0
      %1070 = vmatpush1.bf16.xpose.msra.mxu0 0
      %1071 = vmatprep.subr.bf16.mxu0 0
      %1072 = vmatpush1.bf16.xpose.msra.mxu0 0
      %1073 = vmatprep.subr.bf16.mxu0 0
      %1074 = vmatpush1.bf16.xpose.msra.mxu0 0
      %1075 = vmatprep.subr.bf16.mxu0 0
      %1076 = vmatpush1.bf16.xpose.msra.mxu0 0
      %1077 = vmatprep.subr.bf16.mxu0 0
      %1078 = vmatpush1.bf16.xpose.msra.mxu0 0
      %1079 = vmatprep.subr.bf16.mxu0 0
      %1080 = vmatpush1.bf16.xpose.msra.mxu0 0
      %1081 = vmatprep.subr.bf16.mxu0 0
      %1082 = vmatpush1.bf16.xpose.msra.mxu0 0
      %1083 = vmatprep.subr.bf16.mxu0 0
      %1084 = vmatpush1.bf16.xpose.msra.mxu0 0
      %1085 = vmatprep.subr.bf16.mxu0 0
      %1086 = vmatpush1.bf16.xpose.msra.mxu0 0
      %1087 = vmatprep.subr.bf16.mxu0 0
      %1088 = vmatpush1.bf16.xpose.msra.mxu0 0
      %1089 = vmatprep.subr.bf16.mxu0 0
      %1090 = vmatpush1.bf16.xpose.msra.mxu0 0
      %1091 = vmatprep.mubr.bf16.mxu0 0
      %1092 = vmatmul.mubr.bf16.gmra.mrb[0].mxu0 %v1054
      %v1093 = vpop.f32.mrb[0].mxu0
      %v1094 = vadd.f32 0.0, %v1093
      %v1095 = vpop.f32.mrb[0].mxu0
      %v1096 = vpop.f32.mrb[0].mxu0
      %v1097 = vpop.f32.mrb[0].mxu0
      %1098 = vdwg.mxu0
      %v1099 = vmul.f32 %v1094, 0.35355338
      %v1100 = vadd.f32 %v1099, %v565
      %v1101 = vsel %vm568, %v1100, -inf
      %1102 = vmax.xlane.f32.xlu0 %v1101
      %v1103 = vpop.xlane.xlu0 %1102
      %v1104 = vsub.f32 %v1100, %v1103
      %v1105 = vmul.f32 %v1104, 1.442695
      %v1106 = vpow.pop %v1105
      %v1107 = vsel %vm568, %v1106, 0.0
      %1108 = vadd.xlane.f32.xlu0 %v1107
      %v1109 = vpop.xlane.xlu0 %1108
      %v1110 = vpack.c.bf16 %v1106, %v1106
      %1111 = vrot.lane.b32.xlu0 %v567, 72
      %v1112 = vpop.permute.xlu0 %1111
      %v1114 = vsel %vm568, %v1110, 0
      %v1117 = vsel %vm633, %v1112, 0
      %1119 = vmatprep.subr.bf16.mxu0 0
      %1120 = vmatpush1.bf16.msra.mxu0 %v1117
      %1121 = vmatprep.subr.bf16.mxu0 0
      %1122 = vmatpush1.bf16.msra.mxu0 0
      %1123 = vmatprep.subr.bf16.mxu0 0
      %1124 = vmatpush1.bf16.msra.mxu0 0
      %1125 = vmatprep.subr.bf16.mxu0 0
      %1126 = vmatpush1.bf16.msra.mxu0 0
      %1127 = vmatprep.subr.bf16.mxu0 0
      %1128 = vmatpush1.bf16.msra.mxu0 0
      %1129 = vmatprep.subr.bf16.mxu0 0
      %1130 = vmatpush1.bf16.msra.mxu0 0
      %1131 = vmatprep.subr.bf16.mxu0 0
      %1132 = vmatpush1.bf16.msra.mxu0 0
      %1133 = vmatprep.subr.bf16.mxu0 0
      %1134 = vmatpush1.bf16.msra.mxu0 0
      %1135 = vmatprep.subr.bf16.mxu0 0
      %1136 = vmatpush1.bf16.msra.mxu0 0
      %1137 = vmatprep.subr.bf16.mxu0 0
      %1138 = vmatpush1.bf16.msra.mxu0 0
      %1139 = vmatprep.subr.bf16.mxu0 0
      %1140 = vmatpush1.bf16.msra.mxu0 0
      %1141 = vmatprep.subr.bf16.mxu0 0
      %1142 = vmatpush1.bf16.msra.mxu0 0
      %1143 = vmatprep.subr.bf16.mxu0 0
      %1144 = vmatpush1.bf16.msra.mxu0 0
      %1145 = vmatprep.subr.bf16.mxu0 0
      %1146 = vmatpush1.bf16.msra.mxu0 0
      %1147 = vmatprep.subr.bf16.mxu0 0
      %1148 = vmatpush1.bf16.msra.mxu0 0
      %1149 = vmatprep.subr.bf16.mxu0 0
      %1150 = vmatpush1.bf16.msra.mxu0 0
      %1151 = vmatprep.mubr.bf16.mxu0 0
      %1152 = vmatmul.mubr.bf16.gmra.mrb[0].mxu0 %v1114
      %v1153 = vpop.f32.mrb[0].mxu0
      %v1154 = vadd.f32 0.0, %v1153
      %v1155 = vpop.f32.mrb[0].mxu0
      %v1156 = vpop.f32.mrb[0].mxu0
      %v1157 = vpop.f32.mrb[0].mxu0
      %1158 = vdwg.mxu0
      %v1159 = vrcp.pop %v1109
      %v1160 = vmul.f32 %v1154, %v1159
      %v1161 = vpack.c.bf16 %v1160, %v1160
      %v1162 = vld [vmem:[%s7 + $0xc] sm:$0xf]
      %v1164 = vsel %vm568, %v1161, 0
      %v1167 = vsel %vm633, %v1162, 0
      %1169 = vmatprep.subr.bf16.mxu0 0
      %1170 = vmatpush1.bf16.msra.mxu0 %v1167
      %1171 = vmatprep.subr.bf16.mxu0 0
      %1172 = vmatpush1.bf16.msra.mxu0 0
      %1173 = vmatprep.subr.bf16.mxu0 0
      %1174 = vmatpush1.bf16.msra.mxu0 0
      %1175 = vmatprep.subr.bf16.mxu0 0
      %1176 = vmatpush1.bf16.msra.mxu0 0
      %1177 = vmatprep.subr.bf16.mxu0 0
      %1178 = vmatpush1.bf16.msra.mxu0 0
      %1179 = vmatprep.subr.bf16.mxu0 0
      %1180 = vmatpush1.bf16.msra.mxu0 0
      %1181 = vmatprep.subr.bf16.mxu0 0
      %1182 = vmatpush1.bf16.msra.mxu0 0
      %1183 = vmatprep.subr.bf16.mxu0 0
      %1184 = vmatpush1.bf16.msra.mxu0 0
      %1185 = vmatprep.subr.bf16.mxu0 0
      %1186 = vmatpush1.bf16.msra.mxu0 0
      %1187 = vmatprep.subr.bf16.mxu0 0
      %1188 = vmatpush1.bf16.msra.mxu0 0
      %1189 = vmatprep.subr.bf16.mxu0 0
      %1190 = vmatpush1.bf16.msra.mxu0 0
      %1191 = vmatprep.subr.bf16.mxu0 0
      %1192 = vmatpush1.bf16.msra.mxu0 0
      %1193 = vmatprep.subr.bf16.mxu0 0
      %1194 = vmatpush1.bf16.msra.mxu0 0
      %1195 = vmatprep.subr.bf16.mxu0 0
      %1196 = vmatpush1.bf16.msra.mxu0 0
      %1197 = vmatprep.subr.bf16.mxu0 0
      %1198 = vmatpush1.bf16.msra.mxu0 0
      %1199 = vmatprep.subr.bf16.mxu0 0
      %1200 = vmatpush1.bf16.msra.mxu0 0
      %1201 = vmatprep.mubr.bf16.mxu0 0
      %1202 = vmatmul.mubr.bf16.gmra.mrb[0].mxu0 %v1164
      %v1203 = vpop.f32.mrb[0].mxu0
      %v1204 = vadd.f32 0.0, %v1203
      %v1205 = vpop.f32.mrb[0].mxu0
      %v1206 = vpop.f32.mrb[0].mxu0
      %v1207 = vpop.f32.mrb[0].mxu0
      %1208 = vdwg.mxu0
      %v1209 = vadd.f32 %v1048, %v1204
      %v1210 = vadd.f32 %v414, %v1209
      %v1211 = vld [vmem:[%s8] sm:$0x1]
      %v1213 = vlaneseq
      %v1214 = vshrl.u32 %v1213, 7
      %v1215 = vsub.s32 0, %v1214
      %v1216 = vrot.slane %v1211, %v1215
      %v1218 = vadd.f32 %v1210, %v1216
      %v1219 = vsel %vm440, %v1218, 0.0
      %1220 = vadd.xlane.f32.xlu0 %v1219
      %v1221 = vpop.xlane.xlu0 %1220
      %v1222 = vrcp.pop 32.0
      %v1223 = vmul.f32 %v1221, %v1222
      %v1224 = vsub.f32 %v1218, %v1223
      %v1225 = vmul.f32 %v1224, %v1224
      %v1226 = vsel %vm440, %v1225, 0.0
      %1227 = vadd.xlane.f32.xlu0 %v1226
      %v1228 = vpop.xlane.xlu0 %1227
      %v1229 = vmul.f32 %v1228, %v1222
      %v1230 = vadd.f32 %v1229, 1e-05
      %v1231 = vrsqrt.pop %v1230
      %v1232 = vmul.f32 %v1224, %v1231
      %v1233 = vld [vmem:[%s9] sm:$0x1]
      %v1235 = vlaneseq
      %v1236 = vshrl.u32 %v1235, 7
      %v1237 = vsub.s32 0, %v1236
      %v1238 = vrot.slane %v1233, %v1237
      %v1240 = vmul.f32 %v1232, %v1238
      %v1241 = vld [vmem:[%s10] sm:$0x1]
      %v1243 = vlaneseq
      %v1244 = vshrl.u32 %v1243, 7
      %v1245 = vsub.s32 0, %v1244
      %v1246 = vrot.slane %v1241, %v1245
      %v1248 = vadd.f32 %v1240, %v1246
      %1249 = vst.msk [vmem:[%s412] sm:$0xff] %vm440, %v1248
      %p1250 = scmp.lt.s32.totalorder %s22, 1
      %s1251 = scalar_select %p1250, %s22, 1
      %s1252 = smul.addr %s1251, 8
      %s1253 = scalar_lea.vmem %s11, %s1252
      // Predicated region
      $region65: #{transformer_forward.15} parent=63 // pred_check
        %p1254 = pneg %p286
      $region66: #{transformer_forward.15} parent=63 // pred_check_branch
        %1256 = sbr.rel (%p1254) target = $region68
      $region67: #{transformer_forward.15} parent=63 // pred_region
        _
      $region68: #{transformer_forward.15} parent=63 // pred_fallthru
        _
    $region64: #{transformer_forward.15} parent=5 // pred_fallthru
      _
    %p1257 = scmp.le.s32.totalorder 2, %s17
    // Predicated region
    $region69: #{transformer_forward.15} parent=5 // pred_check
      %p1258 = pneg %p1257
    $region70: #{transformer_forward.15} parent=5 // pred_check_branch
      %1260 = sbr.rel (%p1258) target = $region72
    $region71: #{transformer_forward.15} parent=5 // pred_region
      %s1261 = ssub.s32 %s17, 2
      // Predicated region
      $region73: #{transformer_forward.15} parent=71 // pred_check
        %p1262 = pneg %p292
      $region74: #{transformer_forward.15} parent=71 // pred_check_branch
        %1264 = sbr.rel (%p1262) target = $region76
      $region75: #{transformer_forward.15} parent=71 // pred_region
        %p1265 = scmp.lt.s32.totalorder %s23, 1
        %s1266 = scalar_select %p1265, %s23, 1
        %s1267 = smul.addr %s1266, 8
        %s1268 = scalar_lea.vmem %s11, %s1267
      $region76: #{transformer_forward.15} parent=71 // pred_fallthru
        _
    $region72: #{transformer_forward.15} parent=5 // pred_fallthru
      _
  $region6: #{transformer_forward.15} parent=0 // loop_footer
    %s21 = sadd.s32 1, %s17
  $region7: #{transformer_forward.15} parent=0 // loop_footer_branch
    %16 = sbr.rel target = $region3
  $region8: #{transformer_forward.15} parent=0 // loop_exit
    _

</llo_original>
